<compile_context>
chip_gen: v7x
topology: tpu7x:2x2x1
jax: 0.10.0
libtpu: 0.0.40
codegen_flags: <defaults>
</compile_context>

<pallas_src>
import jax
import jax.numpy as jnp
from jax.experimental import pallas as pl
from jax.experimental.pallas import tpu as pltpu

NUM_DENSE = 13
NUM_SPARSE = 26
HIDDEN = 1024


def wdl_mlp_kernel(deep_ref, dense_ref, w1d_ref, w1s_ref, b1_ref,
                   w2_ref, b2_ref, w3_ref, b3_ref, wide_ref, o_ref):
    """One batch tile: relu(fc1) -> relu(fc2) -> fc3 (lane-reduce) + wide."""
    # fc1: concat([deep, dense]) @ W1  ==  deep @ W1[:416] + dense @ W1[416:].
    h1 = jnp.dot(deep_ref[...], w1d_ref[...],
                 preferred_element_type=jnp.float32)          # bf16 x bf16 -> f32 MXU
    h1 = h1 + jnp.dot(dense_ref[...], w1s_ref[...],
                      preferred_element_type=jnp.float32)     # f32, K=13 (negligible)
    h1 = jnp.maximum(h1 + b1_ref[...], 0.0)                   # bias + ReLU on VPU (f32)
    # TODO(synk): nn.Dropout(p=0.5) is identity in eval mode; training-mode
    # dropout would use pltpu.prng_seed / pltpu.prng_random_bits here.
    h2 = jnp.dot(h1.astype(jnp.bfloat16), w2_ref[...],
                 preferred_element_type=jnp.float32)
    h2 = jnp.maximum(h2 + b2_ref[...], 0.0)
    # fc3's (1024, 1) weight would be a <1%-utilization MXU matmul; do it as a
    # VPU elementwise-mul + XLU lane reduction instead (rides in idle slots).
    fc3 = jnp.sum(h2 * w3_ref[...], axis=-1) + b3_ref[0, 0]   # (TM,)
    o_ref[0, 0] = wide_ref[0, 0] + fc3                        # lane-dense row store


def init_params(key, feature_dim, embed_dim):
    """f32 'master' parameters matching the PyTorch module's shapes."""
    keys = jax.random.split(key, 5)
    d_in = NUM_DENSE + NUM_SPARSE * embed_dim

    def linear(k, fan_in, fan_out):
        bound = 1.0 / (fan_in ** 0.5)
        kw, kb = jax.random.split(k)
        w = jax.random.uniform(kw, (fan_in, fan_out), jnp.float32, -bound, bound)
        b = jax.random.uniform(kb, (1, fan_out), jnp.float32, -bound, bound)
        return w, b

    w1, b1 = linear(keys[0], d_in, HIDDEN)
    w2, b2 = linear(keys[1], HIDDEN, HIDDEN)
    w3, b3 = linear(keys[2], HIDDEN, 1)
    deep_table = 0.05 * jax.random.normal(keys[3], (feature_dim, embed_dim),
                                          jnp.float32)   # sparse_embedding1
    wide_table = 0.05 * jax.random.normal(keys[4], (feature_dim, 1),
                                          jnp.float32)   # Wide's 1-dim embedding
    return dict(w1=w1, b1=b1, w2=w2, b2=b2, w3=w3, b3=b3,
                deep_table=deep_table, wide_table=wide_table)


def prepare_kernel_params(params):
    """One-time split / cast of weights into kernel-ready form (NOT per call)."""
    embed_dim = params["deep_table"].shape[1]
    d_deep = NUM_SPARSE * embed_dim
    return dict(
        w1_deep=params["w1"][:d_deep].astype(jnp.bfloat16),    # (416, 1024) bf16
        w1_dense=params["w1"][d_deep:],                        # (13, 1024)  f32
        b1=params["b1"],                                       # (1, 1024)   f32
        w2=params["w2"].astype(jnp.bfloat16),                  # (1024,1024) bf16
        b2=params["b2"],                                       # (1, 1024)   f32
        w3_row=params["w3"].reshape(1, HIDDEN),                # (1, 1024)   f32
        b3=params["b3"],                                       # (1, 1)      f32 (SMEM)
        deep_table=params["deep_table"].astype(jnp.bfloat16),  # gather emits bf16
        wide_table=params["wide_table"],                       # (feat, 1)   f32
    )


def _batch_tile(batch):
    """Largest useful batch tile (multiple of 16 for bf16 sublane packing),
    keeping >= 2 tiles whenever the batch allows so v7x's two TensorCores both
    get work through the 'parallel' grid axis."""
    if batch >= 2048:
        return 1024
    if batch >= 1024:
        return 512
    if batch >= 512:
        return 256
    if batch >= 256:
        return 128
    if batch >= 32:
        return max(16, ((batch + 31) // 32) * 16)   # ~ceil(batch/2) -> 2 tiles
    return max(16, ((batch + 15) // 16) * 16)        # tiny batch: single tile


def wdl_forward(kparams, dense_features, sparse_features):
    B = dense_features.shape[0]
    embed_dim = kparams["deep_table"].shape[1]
    d_deep = NUM_SPARSE * embed_dim
    H = HIDDEN

    # --- glue (plain JAX): embedding gathers only ---------------------------
    # TODO(synk): at production batch sizes, fold these gathers into the kernel
    # (tables are <100 KB -> VMEM-resident, ids via PrefetchScalarGridSpec) to
    # drop the remaining HBM round-trip of deep_emb.
    deep_emb = jnp.take(kparams["deep_table"], sparse_features, axis=0)   # (B,26,E) bf16
    deep_flat = deep_emb.reshape(B, d_deep)                               # (B,416)  bf16
    wide_emb = jnp.take(kparams["wide_table"], sparse_features, axis=0)   # (B,26,1) f32
    wide = jnp.sum(wide_emb, axis=(1, 2))                                 # (B,)     f32

    TM = _batch_tile(B)
    B_pad = pl.cdiv(B, TM) * TM
    n_tiles = B_pad // TM
    pad = B_pad - B

    # Batch padding only (no feature-dim pad / no concat / no cast of x).
    deep_p = jnp.pad(deep_flat, ((0, pad), (0, 0)))
    dense_p = jnp.pad(dense_features, ((0, pad), (0, 0)))
    wide_p = jnp.pad(wide, ((0, pad),)).reshape(n_tiles, 1, TM)           # lane-dense

    flops = 2 * B_pad * (d_deep * H + NUM_DENSE * H + H * H + H)
    bytes_accessed = (deep_p.size * 2 + dense_p.size * 4 + wide_p.size * 4
                      + kparams["w1_deep"].size * 2 + kparams["w1_dense"].size * 4
                      + kparams["w2"].size * 2
                      + (kparams["b1"].size + kparams["b2"].size
                         + kparams["w3_row"].size + kparams["b3"].size) * 4
                      + B_pad * 4)

    out = pl.pallas_call(
        wdl_mlp_kernel,
        out_shape=jax.ShapeDtypeStruct((n_tiles, 1, TM), jnp.float32),
        grid=(n_tiles,),
        in_specs=[
            pl.BlockSpec((TM, d_deep), lambda i: (i, 0)),          # deep tile (bf16)
            pl.BlockSpec((TM, NUM_DENSE), lambda i: (i, 0)),       # dense tile (f32)
            pl.BlockSpec((d_deep, H), lambda i: (0, 0)),           # w1 deep rows (VMEM-resident)
            pl.BlockSpec((NUM_DENSE, H), lambda i: (0, 0)),        # w1 dense rows
            pl.BlockSpec((1, H), lambda i: (0, 0)),                # b1
            pl.BlockSpec((H, H), lambda i: (0, 0)),                # w2 (VMEM-resident)
            pl.BlockSpec((1, H), lambda i: (0, 0)),                # b2
            pl.BlockSpec((1, H), lambda i: (0, 0)),                # w3 row
            pl.BlockSpec(memory_space=pltpu.MemorySpace.SMEM),     # b3 scalar
            pl.BlockSpec((1, 1, TM), lambda i: (i, 0, 0)),         # wide tile (lane-dense)
        ],
        out_specs=pl.BlockSpec((1, 1, TM), lambda i: (i, 0, 0)),
        compiler_params=pltpu.CompilerParams(
            dimension_semantics=("parallel",),
            vmem_limit_bytes=48 * 1024 * 1024),
        cost_estimate=pl.CostEstimate(
            flops=flops, transcendentals=0, bytes_accessed=bytes_accessed),
    )(deep_p, dense_p, kparams["w1_deep"], kparams["w1_dense"], kparams["b1"],
      kparams["w2"], kparams["b2"], kparams["w3_row"], kparams["b3"], wide_p)

    return out.reshape(B_pad, 1)[:B]                               # (B, 1), like the module


def wdl_forward_ref(params, dense_features, sparse_features):
    """Pure-JAX f32 reference (module semantics) for correctness checking."""
    B = dense_features.shape[0]
    deep = jnp.take(params["deep_table"], sparse_features, axis=0).reshape(B, -1)
    wide = jnp.sum(jnp.take(params["wide_table"], sparse_features, axis=0), axis=1)
    x = jnp.concatenate([deep, dense_features], axis=1)
    h1 = jnp.maximum(x @ params["w1"] + params["b1"], 0.0)
    h2 = jnp.maximum(h1 @ params["w2"] + params["b2"], 0.0)
    return wide + (h2 @ params["w3"] + params["b3"])


if __name__ == "__main__":
    feature_dim, embed_dim, batch = 1000, 16, 8

    key = jax.random.PRNGKey(0)
    k_params, k_dense, k_sparse = jax.random.split(key, 3)
    params = init_params(k_params, feature_dim, embed_dim)
    kparams = prepare_kernel_params(params)   # one-time weight split/cast (hoisted)

    dense_features = jax.random.normal(k_dense, (batch, NUM_DENSE), jnp.float32)
    sparse_features = jax.random.randint(k_sparse, (batch, NUM_SPARSE), 0,
                                         feature_dim, dtype=jnp.int32)

    fwd = jax.jit(wdl_forward)
    out = jax.block_until_ready(fwd(kparams, dense_features, sparse_features))
    assert out.shape == (batch, 1), out.shape

    ref = wdl_forward_ref(params, dense_features, sparse_features)
    # bf16 operands / f32 accumulation vs pure-f32 reference -> loosened tol.
    assert jnp.allclose(out, ref, atol=2e-2, rtol=2e-2), (out, ref)

    print("KERNEL_OK")
</pallas_src>

<mosaic_0001>
module attributes {stable_mosaic.version = 11 : i64} {
  func.func @wdl_mlp_kernel(%arg0: i32, %arg1: memref<16x416xbf16, #tpu.memory_space<vmem>>, %arg2: memref<16x13xf32, #tpu.memory_space<vmem>>, %arg3: memref<416x1024xbf16, #tpu.memory_space<vmem>>, %arg4: memref<13x1024xf32, #tpu.memory_space<vmem>>, %arg5: memref<1x1024xf32, #tpu.memory_space<vmem>>, %arg6: memref<1024x1024xbf16, #tpu.memory_space<vmem>>, %arg7: memref<1x1024xf32, #tpu.memory_space<vmem>>, %arg8: memref<1x1024xf32, #tpu.memory_space<vmem>>, %arg9: memref<1x1xf32, #tpu.memory_space<smem>>, %arg10: memref<1x1x16xf32, #tpu.memory_space<vmem>>, %arg11: memref<1x1x16xf32, #tpu.memory_space<vmem>>) attributes {dimension_semantics = [#tpu.dimension_semantics<parallel>], iteration_bounds = array<i64: 1>, scalar_prefetch = 0 : i64, scratch_operands = 0 : i64, tpu.core_type = #tpu.core_type<tc>, window_params = [{transform_indices = @transform_0, window_bounds = array<i64: 16, 416>}, {transform_indices = @transform_1, window_bounds = array<i64: 16, 13>}, {pipeline_mode = #tpu.pipeline_mode<synchronous>, transform_indices = @transform_2, window_bounds = array<i64: 416, 1024>}, {pipeline_mode = #tpu.pipeline_mode<synchronous>, transform_indices = @transform_3, window_bounds = array<i64: 13, 1024>}, {pipeline_mode = #tpu.pipeline_mode<synchronous>, transform_indices = @transform_4, window_bounds = array<i64: 1, 1024>}, {pipeline_mode = #tpu.pipeline_mode<synchronous>, transform_indices = @transform_5, window_bounds = array<i64: 1024, 1024>}, {pipeline_mode = #tpu.pipeline_mode<synchronous>, transform_indices = @transform_6, window_bounds = array<i64: 1, 1024>}, {pipeline_mode = #tpu.pipeline_mode<synchronous>, transform_indices = @transform_7, window_bounds = array<i64: 1, 1024>}, {transform_indices = @transform_8, window_bounds = array<i64: 1, 1>}, {transform_indices = @transform_9, window_bounds = array<i64: 1, 1, 16>}, {transform_indices = @transform_10, window_bounds = array<i64: 1, 1, 16>}]} {
    %c0 = arith.constant 0 : index
    %c0_0 = arith.constant 0 : index
    %0 = vector.load %arg1[%c0, %c0_0] : memref<16x416xbf16, #tpu.memory_space<vmem>>, vector<16x416xbf16>
    %c0_1 = arith.constant 0 : index
    %c0_2 = arith.constant 0 : index
    %1 = vector.load %arg3[%c0_1, %c0_2] : memref<416x1024xbf16, #tpu.memory_space<vmem>>, vector<416x1024xbf16>
    %cst = arith.constant dense<0.000000e+00> : vector<16x1024xf32>
    %2 = tpu.matmul %0, %1, %cst {dimension_numbers = #tpu.dot_dimension_numbers<[1], [0], [0], [1], [0, 0, 1, 1], [], []>} : vector<16x416xbf16>, vector<416x1024xbf16>, vector<16x1024xf32> -> vector<16x1024xf32>
    %c0_3 = arith.constant 0 : index
    %c0_4 = arith.constant 0 : index
    %3 = vector.load %arg2[%c0_3, %c0_4] : memref<16x13xf32, #tpu.memory_space<vmem>>, vector<16x13xf32>
    %c0_5 = arith.constant 0 : index
    %c0_6 = arith.constant 0 : index
    %4 = vector.load %arg4[%c0_5, %c0_6] : memref<13x1024xf32, #tpu.memory_space<vmem>>, vector<13x1024xf32>
    %cst_7 = arith.constant dense<0.000000e+00> : vector<16x1024xf32>
    %5 = tpu.matmul %3, %4, %cst_7 {dimension_numbers = #tpu.dot_dimension_numbers<[1], [0], [0], [1], [0, 0, 1, 1], [], []>} : vector<16x13xf32>, vector<13x1024xf32>, vector<16x1024xf32> -> vector<16x1024xf32>
    %6 = arith.addf %2, %5 : vector<16x1024xf32>
    %c0_8 = arith.constant 0 : index
    %c0_9 = arith.constant 0 : index
    %7 = vector.load %arg5[%c0_8, %c0_9] : memref<1x1024xf32, #tpu.memory_space<vmem>>, vector<1x1024xf32>
    %8 = vector.broadcast %7 : vector<1x1024xf32> to vector<16x1024xf32>
    %9 = arith.addf %6, %8 : vector<16x1024xf32>
    %cst_10 = arith.constant 0.000000e+00 : f32
    %10 = vector.broadcast %cst_10 : f32 to vector<16x1024xf32>
    %11 = arith.maximumf %9, %10 : vector<16x1024xf32>
    %12 = arith.truncf %11 : vector<16x1024xf32> to vector<16x1024xbf16>
    %c0_11 = arith.constant 0 : index
    %c0_12 = arith.constant 0 : index
    %13 = vector.load %arg6[%c0_11, %c0_12] : memref<1024x1024xbf16, #tpu.memory_space<vmem>>, vector<1024x1024xbf16>
    %cst_13 = arith.constant dense<0.000000e+00> : vector<16x1024xf32>
    %14 = tpu.matmul %12, %13, %cst_13 {dimension_numbers = #tpu.dot_dimension_numbers<[1], [0], [0], [1], [0, 0, 1, 1], [], []>} : vector<16x1024xbf16>, vector<1024x1024xbf16>, vector<16x1024xf32> -> vector<16x1024xf32>
    %c0_14 = arith.constant 0 : index
    %c0_15 = arith.constant 0 : index
    %15 = vector.load %arg7[%c0_14, %c0_15] : memref<1x1024xf32, #tpu.memory_space<vmem>>, vector<1x1024xf32>
    %16 = vector.broadcast %15 : vector<1x1024xf32> to vector<16x1024xf32>
    %17 = arith.addf %14, %16 : vector<16x1024xf32>
    %cst_16 = arith.constant 0.000000e+00 : f32
    %18 = vector.broadcast %cst_16 : f32 to vector<16x1024xf32>
    %19 = arith.maximumf %17, %18 : vector<16x1024xf32>
    %c0_17 = arith.constant 0 : index
    %c0_18 = arith.constant 0 : index
    %20 = vector.load %arg8[%c0_17, %c0_18] : memref<1x1024xf32, #tpu.memory_space<vmem>>, vector<1x1024xf32>
    %21 = vector.broadcast %20 : vector<1x1024xf32> to vector<16x1024xf32>
    %22 = arith.mulf %19, %21 : vector<16x1024xf32>
    %cst_19 = arith.constant dense<0.000000e+00> : vector<16xf32>
    %23 = vector.multi_reduction <add>, %22, %cst_19 [1] : vector<16x1024xf32> to vector<16xf32>
    %c0_20 = arith.constant 0 : index
    %c0_21 = arith.constant 0 : index
    %24 = memref.load %arg9[%c0_20, %c0_21] : memref<1x1xf32, #tpu.memory_space<smem>>
    %25 = vector.broadcast %24 : f32 to vector<16xf32>
    %26 = arith.addf %23, %25 : vector<16xf32>
    %c0_22 = arith.constant 0 : index
    %c0_23 = arith.constant 0 : index
    %c0_24 = arith.constant 0 : index
    %27 = vector.load %arg10[%c0_22, %c0_23, %c0_24] : memref<1x1x16xf32, #tpu.memory_space<vmem>>, vector<1x1x16xf32>
    %28 = vector.shape_cast %27 : vector<1x1x16xf32> to vector<16xf32>
    %29 = arith.addf %28, %26 : vector<16xf32>
    %c0_25 = arith.constant 0 : index
    %c0_26 = arith.constant 0 : index
    %c0_27 = arith.constant 0 : index
    %30 = vector.load %arg11[%c0_25, %c0_26, %c0_27] : memref<1x1x16xf32, #tpu.memory_space<vmem>>, vector<1x1x16xf32>
    %31 = vector.shape_cast %30 : vector<1x1x16xf32> to vector<16xf32>
    %32 = vector.shape_cast %29 : vector<16xf32> to vector<1x1x16xf32>
    tpu.vector_store %arg11[%c0_25, %c0_26, %c0_27], %32 {strides = array<i32>} : memref<1x1x16xf32, #tpu.memory_space<vmem>>, vector<1x1x16xf32>,
    return
  }
  func.func @transform_0(%arg0: i32) -> (i32, i32) {
    %c0_i32 = arith.constant 0 : i32
    %c0_i32_0 = arith.constant 0 : i32
    return %arg0, %c0_i32 : i32, i32
  }
  func.func @transform_1(%arg0: i32) -> (i32, i32) {
    %c0_i32 = arith.constant 0 : i32
    %c0_i32_0 = arith.constant 0 : i32
    return %arg0, %c0_i32 : i32, i32
  }
  func.func @transform_2(%arg0: i32) -> (i32, i32) {
    %c0_i32 = arith.constant 0 : i32
    %c0_i32_0 = arith.constant 0 : i32
    %c0_i32_1 = arith.constant 0 : i32
    return %c0_i32, %c0_i32_0 : i32, i32
  }
  func.func @transform_3(%arg0: i32) -> (i32, i32) {
    %c0_i32 = arith.constant 0 : i32
    %c0_i32_0 = arith.constant 0 : i32
    %c0_i32_1 = arith.constant 0 : i32
    return %c0_i32, %c0_i32_0 : i32, i32
  }
  func.func @transform_4(%arg0: i32) -> (i32, i32) {
    %c0_i32 = arith.constant 0 : i32
    %c0_i32_0 = arith.constant 0 : i32
    %c0_i32_1 = arith.constant 0 : i32
    return %c0_i32, %c0_i32_0 : i32, i32
  }
  func.func @transform_5(%arg0: i32) -> (i32, i32) {
    %c0_i32 = arith.constant 0 : i32
    %c0_i32_0 = arith.constant 0 : i32
    %c0_i32_1 = arith.constant 0 : i32
    return %c0_i32, %c0_i32_0 : i32, i32
  }
  func.func @transform_6(%arg0: i32) -> (i32, i32) {
    %c0_i32 = arith.constant 0 : i32
    %c0_i32_0 = arith.constant 0 : i32
    %c0_i32_1 = arith.constant 0 : i32
    return %c0_i32, %c0_i32_0 : i32, i32
  }
  func.func @transform_7(%arg0: i32) -> (i32, i32) {
    %c0_i32 = arith.constant 0 : i32
    %c0_i32_0 = arith.constant 0 : i32
    %c0_i32_1 = arith.constant 0 : i32
    return %c0_i32, %c0_i32_0 : i32, i32
  }
  func.func @transform_8(%arg0: i32) -> (i32, i32) {
    %c0_i32 = arith.constant 0 : i32
    %c0_i32_0 = arith.constant 0 : i32
    %c0_i32_1 = arith.constant 0 : i32
    return %c0_i32, %c0_i32_0 : i32, i32
  }
  func.func @transform_9(%arg0: i32) -> (i32, i32, i32) {
    %c0_i32 = arith.constant 0 : i32
    %c0_i32_0 = arith.constant 0 : i32
    %c0_i32_1 = arith.constant 0 : i32
    return %arg0, %c0_i32, %c0_i32_0 : i32, i32, i32
  }
  func.func @transform_10(%arg0: i32) -> (i32, i32, i32) {
    %c0_i32 = arith.constant 0 : i32
    %c0_i32_0 = arith.constant 0 : i32
    %c0_i32_1 = arith.constant 0 : i32
    return %arg0, %c0_i32, %c0_i32_0 : i32, i32, i32
  }
}

</mosaic_0001>

<llo_original>
// kernel: wdl_forward.1
$region0: #{wdl_forward.1}
  #allocation0 [shape = 'u32[]', space=smem, size = 0x4, offset = 0x4, fixed_abs, tag = 'smem constant byte address 0x4 - core index']
  #allocation1 [shape = 'u32[144,128]{1,0:T(1,128)}', space=vmem, size = 0x12000, scoped, tag = 'internal scratch']
  #allocation2 [shape = 'f32[1,1]{1,0:T(1,128)S(6)}', space=smem, size = 0x200, scoped, tag = 'scoped memory for wdl_forward.1']
  %s0 = inlined_call_operand.vmem [shape: bf16[16,416], index: 0, kind: input, shape index: {}]
  %s1 = inlined_call_operand.vmem [shape: f32[16,13], index: 1, kind: input, shape index: {}]
  %s2 = inlined_call_operand.vmem [shape: bf16[416,1024], index: 2, kind: input, shape index: {}]
  %s3 = inlined_call_operand.vmem [shape: f32[13,1024], index: 3, kind: input, shape index: {}]
  %s4 = inlined_call_operand.vmem [shape: f32[1,1024], index: 4, kind: input, shape index: {}]
  %s5 = inlined_call_operand.vmem [shape: bf16[1024,1024], index: 5, kind: input, shape index: {}]
  %s6 = inlined_call_operand.vmem [shape: f32[1,1024], index: 6, kind: input, shape index: {}]
  %s7 = inlined_call_operand.vmem [shape: f32[1,1024], index: 7, kind: input, shape index: {}]
  %s8 = inlined_call_operand.<no memory space> [shape: f32[1,1], index: 8, kind: input, shape index: {}]
  %s9 = inlined_call_operand.vmem [shape: f32[1,1,16], index: 9, kind: input, shape index: {}]
  %s10 = inlined_call_operand.vmem [shape: f32[1,1,16], index: 10, kind: output, shape index: {}]
  %s11 = sld [smem:[#allocation0]]
  $region50: #{wdl_forward.1} parent=0
    _
  %s13 = ssub.s32 1, %s11
  %s14 = scalar_select 0, %s13, %s11
  %15 = sst [smem:[#allocation2]] %s8
  // Predicated region
  $region2: #{wdl_forward.1} parent=0 // pred_check
    _
  $region3: #{wdl_forward.1} parent=0 // pred_check_branch
    %17 = sbr.rel (0) target = $region5
  $region4: #{wdl_forward.1} parent=0 // pred_region
    _
  $region5: #{wdl_forward.1} parent=0 // pred_fallthru
    _
  // Predicated region
  $region6: #{wdl_forward.1} parent=0 // pred_check
    _
  $region7: #{wdl_forward.1} parent=0 // pred_check_branch
    %19 = sbr.rel (0) target = $region9
  $region8: #{wdl_forward.1} parent=0 // pred_region
    _
  $region9: #{wdl_forward.1} parent=0 // pred_fallthru
    _
  // Predicated region
  $region10: #{wdl_forward.1} parent=0 // pred_check
    _
  $region11: #{wdl_forward.1} parent=0 // pred_check_branch
    %21 = sbr.rel (0) target = $region13
  $region12: #{wdl_forward.1} parent=0 // pred_region
    _
  $region13: #{wdl_forward.1} parent=0 // pred_fallthru
    _
  // Predicated region
  $region14: #{wdl_forward.1} parent=0 // pred_check
    _
  $region15: #{wdl_forward.1} parent=0 // pred_check_branch
    %23 = sbr.rel (0) target = $region17
  $region16: #{wdl_forward.1} parent=0 // pred_region
    _
  $region17: #{wdl_forward.1} parent=0 // pred_fallthru
    _
  // Predicated region
  $region18: #{wdl_forward.1} parent=0 // pred_check
    _
  $region19: #{wdl_forward.1} parent=0 // pred_check_branch
    %25 = sbr.rel (0) target = $region21
  $region20: #{wdl_forward.1} parent=0 // pred_region
    _
  $region21: #{wdl_forward.1} parent=0 // pred_fallthru
    _
  // Predicated region
  $region22: #{wdl_forward.1} parent=0 // pred_check
    _
  $region23: #{wdl_forward.1} parent=0 // pred_check_branch
    %27 = sbr.rel (0) target = $region25
  $region24: #{wdl_forward.1} parent=0 // pred_region
    _
  $region25: #{wdl_forward.1} parent=0 // pred_fallthru
    _
  // Predicated region
  $region26: #{wdl_forward.1} parent=0 // pred_check
    _
  $region27: #{wdl_forward.1} parent=0 // pred_check_branch
    %29 = sbr.rel (0) target = $region29
  $region28: #{wdl_forward.1} parent=0 // pred_region
    _
  $region29: #{wdl_forward.1} parent=0 // pred_fallthru
    _
  // Predicated region
  $region30: #{wdl_forward.1} parent=0 // pred_check
    _
  $region31: #{wdl_forward.1} parent=0 // pred_check_branch
    %31 = sbr.rel (0) target = $region33
  $region32: #{wdl_forward.1} parent=0 // pred_region
    _
  $region33: #{wdl_forward.1} parent=0 // pred_fallthru
    _
  // Predicated region
  $region34: #{wdl_forward.1} parent=0 // pred_check
    _
  $region35: #{wdl_forward.1} parent=0 // pred_check_branch
    %33 = sbr.rel (0) target = $region37
  $region36: #{wdl_forward.1} parent=0 // pred_region
    _
  $region37: #{wdl_forward.1} parent=0 // pred_fallthru
    _
  // Predicated region
  $region38: #{wdl_forward.1} parent=0 // pred_check
    _
  $region39: #{wdl_forward.1} parent=0 // pred_check_branch
    %35 = sbr.rel (0) target = $region41
  $region40: #{wdl_forward.1} parent=0 // pred_region
    _
  $region41: #{wdl_forward.1} parent=0 // pred_fallthru
    _
  %v37 = vld [vmem:[%s0] sm:$0xff]
  %v38 = vld [vmem:[%s0 + $0x8] sm:$0xff]
  %v39 = vld [vmem:[%s0 + $0x10] sm:$0xff]
  %v40 = vld [vmem:[%s0 + $0x18] sm:$0xff]
  %v41 = vld [vmem:[%s2] sm:$0xff]
  %v42 = vld [vmem:[%s2 + $0x8] sm:$0xff]
  %v43 = vld [vmem:[%s2 + $0x10] sm:$0xff]
  %v44 = vld [vmem:[%s2 + $0x18] sm:$0xff]
  %v45 = vld [vmem:[%s2 + $0x20] sm:$0xff]
  %v46 = vld [vmem:[%s2 + $0x28] sm:$0xff]
  %v47 = vld [vmem:[%s2 + $0x30] sm:$0xff]
  %v48 = vld [vmem:[%s2 + $0x38] sm:$0xff]
  %v49 = vld [vmem:[%s2 + $0x40] sm:$0xff]
  %v50 = vld [vmem:[%s2 + $0x48] sm:$0xff]
  %v51 = vld [vmem:[%s2 + $0x50] sm:$0xff]
  %v52 = vld [vmem:[%s2 + $0x58] sm:$0xff]
  %v53 = vld [vmem:[%s2 + $0x60] sm:$0xff]
  %v54 = vld [vmem:[%s2 + $0x68] sm:$0xff]
  %v55 = vld [vmem:[%s2 + $0x70] sm:$0xff]
  %v56 = vld [vmem:[%s2 + $0x78] sm:$0xff]
  %v57 = vld [vmem:[%s2 + $0x80] sm:$0xff]
  %v58 = vld [vmem:[%s2 + $0x88] sm:$0xff]
  %v59 = vld [vmem:[%s2 + $0x90] sm:$0xff]
  %v60 = vld [vmem:[%s2 + $0x98] sm:$0xff]
  %v61 = vld [vmem:[%s2 + $0xa0] sm:$0xff]
  %v62 = vld [vmem:[%s2 + $0xa8] sm:$0xff]
  %v63 = vld [vmem:[%s2 + $0xb0] sm:$0xff]
  %v64 = vld [vmem:[%s2 + $0xb8] sm:$0xff]
  %v65 = vld [vmem:[%s2 + $0xc0] sm:$0xff]
  %v66 = vld [vmem:[%s2 + $0xc8] sm:$0xff]
  %v67 = vld [vmem:[%s2 + $0xd0] sm:$0xff]
  %v68 = vld [vmem:[%s2 + $0xd8] sm:$0xff]
  %v69 = vld [vmem:[%s2 + $0xe0] sm:$0xff]
  %v70 = vld [vmem:[%s2 + $0xe8] sm:$0xff]
  %v71 = vld [vmem:[%s2 + $0xf0] sm:$0xff]
  %v72 = vld [vmem:[%s2 + $0xf8] sm:$0xff]
  %v73 = vld [vmem:[%s2 + $0x100] sm:$0xff]
  %v74 = vld [vmem:[%s2 + $0x108] sm:$0xff]
  %v75 = vld [vmem:[%s2 + $0x110] sm:$0xff]
  %v76 = vld [vmem:[%s2 + $0x118] sm:$0xff]
  %v77 = vld [vmem:[%s2 + $0x120] sm:$0xff]
  %v78 = vld [vmem:[%s2 + $0x128] sm:$0xff]
  %v79 = vld [vmem:[%s2 + $0x130] sm:$0xff]
  %v80 = vld [vmem:[%s2 + $0x138] sm:$0xff]
  %v81 = vld [vmem:[%s2 + $0x140] sm:$0xff]
  %v82 = vld [vmem:[%s2 + $0x148] sm:$0xff]
  %v83 = vld [vmem:[%s2 + $0x150] sm:$0xff]
  %v84 = vld [vmem:[%s2 + $0x158] sm:$0xff]
  %v85 = vld [vmem:[%s2 + $0x160] sm:$0xff]
  %v86 = vld [vmem:[%s2 + $0x168] sm:$0xff]
  %v87 = vld [vmem:[%s2 + $0x170] sm:$0xff]
  %v88 = vld [vmem:[%s2 + $0x178] sm:$0xff]
  %v89 = vld [vmem:[%s2 + $0x180] sm:$0xff]
  %v90 = vld [vmem:[%s2 + $0x188] sm:$0xff]
  %v91 = vld [vmem:[%s2 + $0x190] sm:$0xff]
  %v92 = vld [vmem:[%s2 + $0x198] sm:$0xff]
  %v93 = vld [vmem:[%s2 + $0x1a0] sm:$0xff]
  %v94 = vld [vmem:[%s2 + $0x1a8] sm:$0xff]
  %v95 = vld [vmem:[%s2 + $0x1b0] sm:$0xff]
  %v96 = vld [vmem:[%s2 + $0x1b8] sm:$0xff]
  %v97 = vld [vmem:[%s2 + $0x1c0] sm:$0xff]
  %v98 = vld [vmem:[%s2 + $0x1c8] sm:$0xff]
  %v99 = vld [vmem:[%s2 + $0x1d0] sm:$0xff]
  %v100 = vld [vmem:[%s2 + $0x1d8] sm:$0xff]
  %v101 = vld [vmem:[%s2 + $0x1e0] sm:$0xff]
  %v102 = vld [vmem:[%s2 + $0x1e8] sm:$0xff]
  %v103 = vld [vmem:[%s2 + $0x1f0] sm:$0xff]
  %v104 = vld [vmem:[%s2 + $0x1f8] sm:$0xff]
  %v105 = vld [vmem:[%s2 + $0x200] sm:$0xff]
  %v106 = vld [vmem:[%s2 + $0x208] sm:$0xff]
  %v107 = vld [vmem:[%s2 + $0x210] sm:$0xff]
  %v108 = vld [vmem:[%s2 + $0x218] sm:$0xff]
  %v109 = vld [vmem:[%s2 + $0x220] sm:$0xff]
  %v110 = vld [vmem:[%s2 + $0x228] sm:$0xff]
  %v111 = vld [vmem:[%s2 + $0x230] sm:$0xff]
  %v112 = vld [vmem:[%s2 + $0x238] sm:$0xff]
  %v113 = vld [vmem:[%s2 + $0x240] sm:$0xff]
  %v114 = vld [vmem:[%s2 + $0x248] sm:$0xff]
  %v115 = vld [vmem:[%s2 + $0x250] sm:$0xff]
  %v116 = vld [vmem:[%s2 + $0x258] sm:$0xff]
  %v117 = vld [vmem:[%s2 + $0x260] sm:$0xff]
  %v118 = vld [vmem:[%s2 + $0x268] sm:$0xff]
  %v119 = vld [vmem:[%s2 + $0x270] sm:$0xff]
  %v120 = vld [vmem:[%s2 + $0x278] sm:$0xff]
  %v121 = vld [vmem:[%s2 + $0x280] sm:$0xff]
  %v122 = vld [vmem:[%s2 + $0x288] sm:$0xff]
  %v123 = vld [vmem:[%s2 + $0x290] sm:$0xff]
  %v124 = vld [vmem:[%s2 + $0x298] sm:$0xff]
  %v125 = vld [vmem:[%s2 + $0x2a0] sm:$0xff]
  %v126 = vld [vmem:[%s2 + $0x2a8] sm:$0xff]
  %v127 = vld [vmem:[%s2 + $0x2b0] sm:$0xff]
  %v128 = vld [vmem:[%s2 + $0x2b8] sm:$0xff]
  %v129 = vld [vmem:[%s2 + $0x2c0] sm:$0xff]
  %v130 = vld [vmem:[%s2 + $0x2c8] sm:$0xff]
  %v131 = vld [vmem:[%s2 + $0x2d0] sm:$0xff]
  %v132 = vld [vmem:[%s2 + $0x2d8] sm:$0xff]
  %v133 = vld [vmem:[%s2 + $0x2e0] sm:$0xff]
  %v134 = vld [vmem:[%s2 + $0x2e8] sm:$0xff]
  %v135 = vld [vmem:[%s2 + $0x2f0] sm:$0xff]
  %v136 = vld [vmem:[%s2 + $0x2f8] sm:$0xff]
  %v137 = vld [vmem:[%s2 + $0x300] sm:$0xff]
  %v138 = vld [vmem:[%s2 + $0x308] sm:$0xff]
  %v139 = vld [vmem:[%s2 + $0x310] sm:$0xff]
  %v140 = vld [vmem:[%s2 + $0x318] sm:$0xff]
  %v141 = vld [vmem:[%s2 + $0x320] sm:$0xff]
  %v142 = vld [vmem:[%s2 + $0x328] sm:$0xff]
  %v143 = vld [vmem:[%s2 + $0x330] sm:$0xff]
  %v144 = vld [vmem:[%s2 + $0x338] sm:$0xff]
  %v145 = vld [vmem:[%s2 + $0x340] sm:$0xff]
  %v146 = vld [vmem:[%s2 + $0x348] sm:$0xff]
  %v147 = vld [vmem:[%s2 + $0x350] sm:$0xff]
  %v148 = vld [vmem:[%s2 + $0x358] sm:$0xff]
  %v149 = vld [vmem:[%s2 + $0x360] sm:$0xff]
  %v150 = vld [vmem:[%s2 + $0x368] sm:$0xff]
  %v151 = vld [vmem:[%s2 + $0x370] sm:$0xff]
  %v152 = vld [vmem:[%s2 + $0x378] sm:$0xff]
  %v153 = vld [vmem:[%s2 + $0x380] sm:$0xff]
  %v154 = vld [vmem:[%s2 + $0x388] sm:$0xff]
  %v155 = vld [vmem:[%s2 + $0x390] sm:$0xff]
  %v156 = vld [vmem:[%s2 + $0x398] sm:$0xff]
  %v157 = vld [vmem:[%s2 + $0x3a0] sm:$0xff]
  %v158 = vld [vmem:[%s2 + $0x3a8] sm:$0xff]
  %v159 = vld [vmem:[%s2 + $0x3b0] sm:$0xff]
  %v160 = vld [vmem:[%s2 + $0x3b8] sm:$0xff]
  %v161 = vld [vmem:[%s2 + $0x3c0] sm:$0xff]
  %v162 = vld [vmem:[%s2 + $0x3c8] sm:$0xff]
  %v163 = vld [vmem:[%s2 + $0x3d0] sm:$0xff]
  %v164 = vld [vmem:[%s2 + $0x3d8] sm:$0xff]
  %v165 = vld [vmem:[%s2 + $0x3e0] sm:$0xff]
  %v166 = vld [vmem:[%s2 + $0x3e8] sm:$0xff]
  %v167 = vld [vmem:[%s2 + $0x3f0] sm:$0xff]
  %v168 = vld [vmem:[%s2 + $0x3f8] sm:$0xff]
  %v169 = vld [vmem:[%s2 + $0x400] sm:$0xff]
  %v170 = vld [vmem:[%s2 + $0x408] sm:$0xff]
  %v171 = vld [vmem:[%s2 + $0x410] sm:$0xff]
  %v172 = vld [vmem:[%s2 + $0x418] sm:$0xff]
  %v173 = vld [vmem:[%s2 + $0x420] sm:$0xff]
  %v174 = vld [vmem:[%s2 + $0x428] sm:$0xff]
  %v175 = vld [vmem:[%s2 + $0x430] sm:$0xff]
  %v176 = vld [vmem:[%s2 + $0x438] sm:$0xff]
  %v177 = vld [vmem:[%s2 + $0x440] sm:$0xff]
  %v178 = vld [vmem:[%s2 + $0x448] sm:$0xff]
  %v179 = vld [vmem:[%s2 + $0x450] sm:$0xff]
  %v180 = vld [vmem:[%s2 + $0x458] sm:$0xff]
  %v181 = vld [vmem:[%s2 + $0x460] sm:$0xff]
  %v182 = vld [vmem:[%s2 + $0x468] sm:$0xff]
  %v183 = vld [vmem:[%s2 + $0x470] sm:$0xff]
  %v184 = vld [vmem:[%s2 + $0x478] sm:$0xff]
  %v185 = vld [vmem:[%s2 + $0x480] sm:$0xff]
  %v186 = vld [vmem:[%s2 + $0x488] sm:$0xff]
  %v187 = vld [vmem:[%s2 + $0x490] sm:$0xff]
  %v188 = vld [vmem:[%s2 + $0x498] sm:$0xff]
  %v189 = vld [vmem:[%s2 + $0x4a0] sm:$0xff]
  %v190 = vld [vmem:[%s2 + $0x4a8] sm:$0xff]
  %v191 = vld [vmem:[%s2 + $0x4b0] sm:$0xff]
  %v192 = vld [vmem:[%s2 + $0x4b8] sm:$0xff]
  %v193 = vld [vmem:[%s2 + $0x4c0] sm:$0xff]
  %v194 = vld [vmem:[%s2 + $0x4c8] sm:$0xff]
  %v195 = vld [vmem:[%s2 + $0x4d0] sm:$0xff]
  %v196 = vld [vmem:[%s2 + $0x4d8] sm:$0xff]
  %v197 = vld [vmem:[%s2 + $0x4e0] sm:$0xff]
  %v198 = vld [vmem:[%s2 + $0x4e8] sm:$0xff]
  %v199 = vld [vmem:[%s2 + $0x4f0] sm:$0xff]
  %v200 = vld [vmem:[%s2 + $0x4f8] sm:$0xff]
  %v201 = vld [vmem:[%s2 + $0x500] sm:$0xff]
  %v202 = vld [vmem:[%s2 + $0x508] sm:$0xff]
  %v203 = vld [vmem:[%s2 + $0x510] sm:$0xff]
  %v204 = vld [vmem:[%s2 + $0x518] sm:$0xff]
  %v205 = vld [vmem:[%s2 + $0x520] sm:$0xff]
  %v206 = vld [vmem:[%s2 + $0x528] sm:$0xff]
  %v207 = vld [vmem:[%s2 + $0x530] sm:$0xff]
  %v208 = vld [vmem:[%s2 + $0x538] sm:$0xff]
  %v209 = vld [vmem:[%s2 + $0x540] sm:$0xff]
  %v210 = vld [vmem:[%s2 + $0x548] sm:$0xff]
  %v211 = vld [vmem:[%s2 + $0x550] sm:$0xff]
  %v212 = vld [vmem:[%s2 + $0x558] sm:$0xff]
  %v213 = vld [vmem:[%s2 + $0x560] sm:$0xff]
  %v214 = vld [vmem:[%s2 + $0x568] sm:$0xff]
  %v215 = vld [vmem:[%s2 + $0x570] sm:$0xff]
  %v216 = vld [vmem:[%s2 + $0x578] sm:$0xff]
  %v217 = vld [vmem:[%s2 + $0x580] sm:$0xff]
  %v218 = vld [vmem:[%s2 + $0x588] sm:$0xff]
  %v219 = vld [vmem:[%s2 + $0x590] sm:$0xff]
  %v220 = vld [vmem:[%s2 + $0x598] sm:$0xff]
  %v221 = vld [vmem:[%s2 + $0x5a0] sm:$0xff]
  %v222 = vld [vmem:[%s2 + $0x5a8] sm:$0xff]
  %v223 = vld [vmem:[%s2 + $0x5b0] sm:$0xff]
  %v224 = vld [vmem:[%s2 + $0x5b8] sm:$0xff]
  %v225 = vld [vmem:[%s2 + $0x5c0] sm:$0xff]
  %v226 = vld [vmem:[%s2 + $0x5c8] sm:$0xff]
  %v227 = vld [vmem:[%s2 + $0x5d0] sm:$0xff]
  %v228 = vld [vmem:[%s2 + $0x5d8] sm:$0xff]
  %v229 = vld [vmem:[%s2 + $0x5e0] sm:$0xff]
  %v230 = vld [vmem:[%s2 + $0x5e8] sm:$0xff]
  %v231 = vld [vmem:[%s2 + $0x5f0] sm:$0xff]
  %v232 = vld [vmem:[%s2 + $0x5f8] sm:$0xff]
  %v233 = vld [vmem:[%s2 + $0x600] sm:$0xff]
  %v234 = vld [vmem:[%s2 + $0x608] sm:$0xff]
  %v235 = vld [vmem:[%s2 + $0x610] sm:$0xff]
  %v236 = vld [vmem:[%s2 + $0x618] sm:$0xff]
  %v237 = vld [vmem:[%s2 + $0x620] sm:$0xff]
  %v238 = vld [vmem:[%s2 + $0x628] sm:$0xff]
  %v239 = vld [vmem:[%s2 + $0x630] sm:$0xff]
  %v240 = vld [vmem:[%s2 + $0x638] sm:$0xff]
  %v241 = vld [vmem:[%s2 + $0x640] sm:$0xff]
  %v242 = vld [vmem:[%s2 + $0x648] sm:$0xff]
  %v243 = vld [vmem:[%s2 + $0x650] sm:$0xff]
  %v244 = vld [vmem:[%s2 + $0x658] sm:$0xff]
  %v245 = vld [vmem:[%s2 + $0x660] sm:$0xff]
  %v246 = vld [vmem:[%s2 + $0x668] sm:$0xff]
  %v247 = vld [vmem:[%s2 + $0x670] sm:$0xff]
  %v248 = vld [vmem:[%s2 + $0x678] sm:$0xff]
  %v249 = vld [vmem:[%s1] sm:$0xff]
  %v250 = vld [vmem:[%s1 + $0x8] sm:$0xff]
  %v251 = vld [vmem:[%s3] sm:$0xff]
  %v252 = vld [vmem:[%s3 + $0x8] sm:$0xff]
  %v253 = vld [vmem:[%s3 + $0x10] sm:$0xff]
  %v254 = vld [vmem:[%s3 + $0x18] sm:$0xff]
  %v255 = vld [vmem:[%s3 + $0x20] sm:$0xff]
  %v256 = vld [vmem:[%s3 + $0x28] sm:$0xff]
  %v257 = vld [vmem:[%s3 + $0x30] sm:$0xff]
  %v258 = vld [vmem:[%s3 + $0x38] sm:$0xff]
  %v259 = vld [vmem:[%s3 + $0x40] sm:$0x1f]
  %v260 = vld [vmem:[%s3 + $0x48] sm:$0x1f]
  %v261 = vld [vmem:[%s3 + $0x50] sm:$0x1f]
  %v262 = vld [vmem:[%s3 + $0x58] sm:$0x1f]
  %v263 = vld [vmem:[%s3 + $0x60] sm:$0x1f]
  %v264 = vld [vmem:[%s3 + $0x68] sm:$0x1f]
  %v265 = vld [vmem:[%s3 + $0x70] sm:$0x1f]
  %v266 = vld [vmem:[%s3 + $0x78] sm:$0x1f]
  %vm267 = vcmask 105472
  %v269 = vsel %vm267, %v249, 0
  %v272 = vsel %vm267, %v250, 0
  %vm274 = vcmask 1044480
  %v276 = vsel %vm274, %v259, 0
  %v279 = vsel %vm274, %v260, 0
  %v282 = vsel %vm274, %v261, 0
  %v285 = vsel %vm274, %v262, 0
  %v288 = vsel %vm274, %v263, 0
  %v291 = vsel %vm274, %v264, 0
  %v294 = vsel %vm274, %v265, 0
  %v297 = vsel %vm274, %v266, 0
  %299 = vmatprep.subr.mxu0 %v252
  %300 = vmatpush1.msra.mxu0 %v251
  %301 = vmatprep.subr.mxu0 %v279
  %302 = vmatpush1.msra.mxu0 %v276
  %303 = vmatprep.subr.mxu0 0.0
  %304 = vmatpush1.msra.mxu0 0.0
  %305 = vmatprep.subr.mxu0 0.0
  %306 = vmatpush1.msra.mxu0 0.0
  %307 = vmatprep.subr.mxu0 0.0
  %308 = vmatpush1.msra.mxu0 0.0
  %309 = vmatprep.subr.mxu0 0.0
  %310 = vmatpush1.msra.mxu0 0.0
  %311 = vmatprep.subr.mxu0 0.0
  %312 = vmatpush1.msra.mxu0 0.0
  %313 = vmatprep.subr.mxu0 0.0
  %314 = vmatpush1.msra.mxu0 0.0
  %315 = vmatprep.subr.mxu0 0.0
  %316 = vmatpush1.msra.mxu0 0.0
  %317 = vmatprep.subr.mxu0 0.0
  %318 = vmatpush1.msra.mxu0 0.0
  %319 = vmatprep.subr.mxu0 0.0
  %320 = vmatpush1.msra.mxu0 0.0
  %321 = vmatprep.subr.mxu0 0.0
  %322 = vmatpush1.msra.mxu0 0.0
  %323 = vmatprep.subr.mxu0 0.0
  %324 = vmatpush1.msra.mxu0 0.0
  %325 = vmatprep.subr.mxu0 0.0
  %326 = vmatpush1.msra.mxu0 0.0
  %327 = vmatprep.subr.mxu0 0.0
  %328 = vmatpush1.msra.mxu0 0.0
  %329 = vmatprep.subr.mxu0 0.0
  %330 = vmatpush1.msra.mxu0 0.0
  %331 = vmatprep.subr.mxu0 0.0
  %332 = vmatpush1.msra.mxu0 0.0
  %333 = vmatprep.subr.mxu0 0.0
  %334 = vmatpush1.msra.mxu0 0.0
  %335 = vmatprep.subr.mxu0 0.0
  %336 = vmatpush1.msra.mxu0 0.0
  %337 = vmatprep.subr.mxu0 0.0
  %338 = vmatpush1.msra.mxu0 0.0
  %339 = vmatprep.subr.mxu0 0.0
  %340 = vmatpush1.msra.mxu0 0.0
  %341 = vmatprep.subr.mxu0 0.0
  %342 = vmatpush1.msra.mxu0 0.0
  %343 = vmatprep.subr.mxu0 0.0
  %344 = vmatpush1.msra.mxu0 0.0
  %345 = vmatprep.subr.mxu0 0.0
  %346 = vmatpush1.msra.mxu0 0.0
  %347 = vmatprep.subr.mxu0 0.0
  %348 = vmatpush1.msra.mxu0 0.0
  %349 = vmatprep.subr.mxu0 0.0
  %350 = vmatpush1.msra.mxu0 0.0
  %351 = vmatprep.subr.mxu0 0.0
  %352 = vmatpush1.msra.mxu0 0.0
  %353 = vmatprep.subr.mxu0 0.0
  %354 = vmatpush1.msra.mxu0 0.0
  %355 = vmatprep.subr.mxu0 0.0
  %356 = vmatpush1.msra.mxu0 0.0
  %357 = vmatprep.subr.mxu0 0.0
  %358 = vmatpush1.msra.mxu0 0.0
  %359 = vmatprep.subr.mxu0 0.0
  %360 = vmatpush1.msra.mxu0 0.0
  %361 = vmatprep.subr.mxu0 0.0
  %362 = vmatpush1.msra.mxu0 0.0
  %363 = vmatprep.mubr.f32.mxu0 0.0
  %364 = vmatmul.mubr.f32.gmra.mrb[0].mxu0 %v269
  %v365 = vpop.f32.mrb[0].mxu0
  %v366 = vadd.f32 0.0, %v365
  %v367 = vpop.f32.mrb[0].mxu0
  %v368 = vadd.f32 0.0, %v367
  %369 = vmatprep.mubr.f32.mxu0 0.0
  %370 = vmatmul.mubr.f32.gmra.mrb[0].mxu0 %v272
  %v371 = vpop.f32.mrb[0].mxu0
  %v372 = vadd.f32 0.0, %v371
  %v373 = vpop.f32.mrb[0].mxu0
  %v374 = vadd.f32 0.0, %v373
  %375 = vdwg.mxu0
  %376 = vmatprep.subr.mxu0 %v254
  %377 = vmatpush1.msra.mxu0 %v253
  %378 = vmatprep.subr.mxu0 %v285
  %379 = vmatpush1.msra.mxu0 %v282
  %380 = vmatprep.subr.mxu0 0.0
  %381 = vmatpush1.msra.mxu0 0.0
  %382 = vmatprep.subr.mxu0 0.0
  %383 = vmatpush1.msra.mxu0 0.0
  %384 = vmatprep.subr.mxu0 0.0
  %385 = vmatpush1.msra.mxu0 0.0
  %386 = vmatprep.subr.mxu0 0.0
  %387 = vmatpush1.msra.mxu0 0.0
  %388 = vmatprep.subr.mxu0 0.0
  %389 = vmatpush1.msra.mxu0 0.0
  %390 = vmatprep.subr.mxu0 0.0
  %391 = vmatpush1.msra.mxu0 0.0
  %392 = vmatprep.subr.mxu0 0.0
  %393 = vmatpush1.msra.mxu0 0.0
  %394 = vmatprep.subr.mxu0 0.0
  %395 = vmatpush1.msra.mxu0 0.0
  %396 = vmatprep.subr.mxu0 0.0
  %397 = vmatpush1.msra.mxu0 0.0
  %398 = vmatprep.subr.mxu0 0.0
  %399 = vmatpush1.msra.mxu0 0.0
  %400 = vmatprep.subr.mxu0 0.0
  %401 = vmatpush1.msra.mxu0 0.0
  %402 = vmatprep.subr.mxu0 0.0
  %403 = vmatpush1.msra.mxu0 0.0
  %404 = vmatprep.subr.mxu0 0.0
  %405 = vmatpush1.msra.mxu0 0.0
  %406 = vmatprep.subr.mxu0 0.0
  %407 = vmatpush1.msra.mxu0 0.0
  %408 = vmatprep.subr.mxu0 0.0
  %409 = vmatpush1.msra.mxu0 0.0
  %410 = vmatprep.subr.mxu0 0.0
  %411 = vmatpush1.msra.mxu0 0.0
  %412 = vmatprep.subr.mxu0 0.0
  %413 = vmatpush1.msra.mxu0 0.0
  %414 = vmatprep.subr.mxu0 0.0
  %415 = vmatpush1.msra.mxu0 0.0
  %416 = vmatprep.subr.mxu0 0.0
  %417 = vmatpush1.msra.mxu0 0.0
  %418 = vmatprep.subr.mxu0 0.0
  %419 = vmatpush1.msra.mxu0 0.0
  %420 = vmatprep.subr.mxu0 0.0
  %421 = vmatpush1.msra.mxu0 0.0
  %422 = vmatprep.subr.mxu0 0.0
  %423 = vmatpush1.msra.mxu0 0.0
  %424 = vmatprep.subr.mxu0 0.0
  %425 = vmatpush1.msra.mxu0 0.0
  %426 = vmatprep.subr.mxu0 0.0
  %427 = vmatpush1.msra.mxu0 0.0
  %428 = vmatprep.subr.mxu0 0.0
  %429 = vmatpush1.msra.mxu0 0.0
  %430 = vmatprep.subr.mxu0 0.0
  %431 = vmatpush1.msra.mxu0 0.0
  %432 = vmatprep.subr.mxu0 0.0
  %433 = vmatpush1.msra.mxu0 0.0
  %434 = vmatprep.subr.mxu0 0.0
  %435 = vmatpush1.msra.mxu0 0.0
  %436 = vmatprep.subr.mxu0 0.0
  %437 = vmatpush1.msra.mxu0 0.0
  %438 = vmatprep.subr.mxu0 0.0
  %439 = vmatpush1.msra.mxu0 0.0
  %440 = vmatprep.mubr.f32.mxu0 0.0
  %441 = vmatmul.mubr.f32.gmra.mrb[0].mxu0 %v269
  %v442 = vpop.f32.mrb[0].mxu0
  %v443 = vadd.f32 0.0, %v442
  %v444 = vpop.f32.mrb[0].mxu0
  %v445 = vadd.f32 0.0, %v444
  %446 = vmatprep.mubr.f32.mxu0 0.0
  %447 = vmatmul.mubr.f32.gmra.mrb[0].mxu0 %v272
  %v448 = vpop.f32.mrb[0].mxu0
  %v449 = vadd.f32 0.0, %v448
  %v450 = vpop.f32.mrb[0].mxu0
  %v451 = vadd.f32 0.0, %v450
  %452 = vdwg.mxu0
  %453 = vmatprep.subr.mxu0 %v256
  %454 = vmatpush1.msra.mxu0 %v255
  %455 = vmatprep.subr.mxu0 %v291
  %456 = vmatpush1.msra.mxu0 %v288
  %457 = vmatprep.subr.mxu0 0.0
  %458 = vmatpush1.msra.mxu0 0.0
  %459 = vmatprep.subr.mxu0 0.0
  %460 = vmatpush1.msra.mxu0 0.0
  %461 = vmatprep.subr.mxu0 0.0
  %462 = vmatpush1.msra.mxu0 0.0
  %463 = vmatprep.subr.mxu0 0.0
  %464 = vmatpush1.msra.mxu0 0.0
  %465 = vmatprep.subr.mxu0 0.0
  %466 = vmatpush1.msra.mxu0 0.0
  %467 = vmatprep.subr.mxu0 0.0
  %468 = vmatpush1.msra.mxu0 0.0
  %469 = vmatprep.subr.mxu0 0.0
  %470 = vmatpush1.msra.mxu0 0.0
  %471 = vmatprep.subr.mxu0 0.0
  %472 = vmatpush1.msra.mxu0 0.0
  %473 = vmatprep.subr.mxu0 0.0
  %474 = vmatpush1.msra.mxu0 0.0
  %475 = vmatprep.subr.mxu0 0.0
  %476 = vmatpush1.msra.mxu0 0.0
  %477 = vmatprep.subr.mxu0 0.0
  %478 = vmatpush1.msra.mxu0 0.0
  %479 = vmatprep.subr.mxu0 0.0
  %480 = vmatpush1.msra.mxu0 0.0
  %481 = vmatprep.subr.mxu0 0.0
  %482 = vmatpush1.msra.mxu0 0.0
  %483 = vmatprep.subr.mxu0 0.0
  %484 = vmatpush1.msra.mxu0 0.0
  %485 = vmatprep.subr.mxu0 0.0
  %486 = vmatpush1.msra.mxu0 0.0
  %487 = vmatprep.subr.mxu0 0.0
  %488 = vmatpush1.msra.mxu0 0.0
  %489 = vmatprep.subr.mxu0 0.0
  %490 = vmatpush1.msra.mxu0 0.0
  %491 = vmatprep.subr.mxu0 0.0
  %492 = vmatpush1.msra.mxu0 0.0
  %493 = vmatprep.subr.mxu0 0.0
  %494 = vmatpush1.msra.mxu0 0.0
  %495 = vmatprep.subr.mxu0 0.0
  %496 = vmatpush1.msra.mxu0 0.0
  %497 = vmatprep.subr.mxu0 0.0
  %498 = vmatpush1.msra.mxu0 0.0
  %499 = vmatprep.subr.mxu0 0.0
  %500 = vmatpush1.msra.mxu0 0.0
  %501 = vmatprep.subr.mxu0 0.0
  %502 = vmatpush1.msra.mxu0 0.0
  %503 = vmatprep.subr.mxu0 0.0
  %504 = vmatpush1.msra.mxu0 0.0
  %505 = vmatprep.subr.mxu0 0.0
  %506 = vmatpush1.msra.mxu0 0.0
  %507 = vmatprep.subr.mxu0 0.0
  %508 = vmatpush1.msra.mxu0 0.0
  %509 = vmatprep.subr.mxu0 0.0
  %510 = vmatpush1.msra.mxu0 0.0
  %511 = vmatprep.subr.mxu0 0.0
  %512 = vmatpush1.msra.mxu0 0.0
  %513 = vmatprep.subr.mxu0 0.0
  %514 = vmatpush1.msra.mxu0 0.0
  %515 = vmatprep.subr.mxu0 0.0
  %516 = vmatpush1.msra.mxu0 0.0
  %517 = vmatprep.mubr.f32.mxu0 0.0
  %518 = vmatmul.mubr.f32.gmra.mrb[0].mxu0 %v269
  %v519 = vpop.f32.mrb[0].mxu0
  %v520 = vadd.f32 0.0, %v519
  %v521 = vpop.f32.mrb[0].mxu0
  %v522 = vadd.f32 0.0, %v521
  %523 = vmatprep.mubr.f32.mxu0 0.0
  %524 = vmatmul.mubr.f32.gmra.mrb[0].mxu0 %v272
  %v525 = vpop.f32.mrb[0].mxu0
  %v526 = vadd.f32 0.0, %v525
  %v527 = vpop.f32.mrb[0].mxu0
  %v528 = vadd.f32 0.0, %v527
  %529 = vdwg.mxu0
  %530 = vmatprep.subr.mxu0 %v258
  %531 = vmatpush1.msra.mxu0 %v257
  %532 = vmatprep.subr.mxu0 %v297
  %533 = vmatpush1.msra.mxu0 %v294
  %534 = vmatprep.subr.mxu0 0.0
  %535 = vmatpush1.msra.mxu0 0.0
  %536 = vmatprep.subr.mxu0 0.0
  %537 = vmatpush1.msra.mxu0 0.0
  %538 = vmatprep.subr.mxu0 0.0
  %539 = vmatpush1.msra.mxu0 0.0
  %540 = vmatprep.subr.mxu0 0.0
  %541 = vmatpush1.msra.mxu0 0.0
  %542 = vmatprep.subr.mxu0 0.0
  %543 = vmatpush1.msra.mxu0 0.0
  %544 = vmatprep.subr.mxu0 0.0
  %545 = vmatpush1.msra.mxu0 0.0
  %546 = vmatprep.subr.mxu0 0.0
  %547 = vmatpush1.msra.mxu0 0.0
  %548 = vmatprep.subr.mxu0 0.0
  %549 = vmatpush1.msra.mxu0 0.0
  %550 = vmatprep.subr.mxu0 0.0
  %551 = vmatpush1.msra.mxu0 0.0
  %552 = vmatprep.subr.mxu0 0.0
  %553 = vmatpush1.msra.mxu0 0.0
  %554 = vmatprep.subr.mxu0 0.0
  %555 = vmatpush1.msra.mxu0 0.0
  %556 = vmatprep.subr.mxu0 0.0
  %557 = vmatpush1.msra.mxu0 0.0
  %558 = vmatprep.subr.mxu0 0.0
  %559 = vmatpush1.msra.mxu0 0.0
  %560 = vmatprep.subr.mxu0 0.0
  %561 = vmatpush1.msra.mxu0 0.0
  %562 = vmatprep.subr.mxu0 0.0
  %563 = vmatpush1.msra.mxu0 0.0
  %564 = vmatprep.subr.mxu0 0.0
  %565 = vmatpush1.msra.mxu0 0.0
  %566 = vmatprep.subr.mxu0 0.0
  %567 = vmatpush1.msra.mxu0 0.0
  %568 = vmatprep.subr.mxu0 0.0
  %569 = vmatpush1.msra.mxu0 0.0
  %570 = vmatprep.subr.mxu0 0.0
  %571 = vmatpush1.msra.mxu0 0.0
  %572 = vmatprep.subr.mxu0 0.0
  %573 = vmatpush1.msra.mxu0 0.0
  %574 = vmatprep.subr.mxu0 0.0
  %575 = vmatpush1.msra.mxu0 0.0
  %576 = vmatprep.subr.mxu0 0.0
  %577 = vmatpush1.msra.mxu0 0.0
  %578 = vmatprep.subr.mxu0 0.0
  %579 = vmatpush1.msra.mxu0 0.0
  %580 = vmatprep.subr.mxu0 0.0
  %581 = vmatpush1.msra.mxu0 0.0
  %582 = vmatprep.subr.mxu0 0.0
  %583 = vmatpush1.msra.mxu0 0.0
  %584 = vmatprep.subr.mxu0 0.0
  %585 = vmatpush1.msra.mxu0 0.0
  %586 = vmatprep.subr.mxu0 0.0
  %587 = vmatpush1.msra.mxu0 0.0
  %588 = vmatprep.subr.mxu0 0.0
  %589 = vmatpush1.msra.mxu0 0.0
  %590 = vmatprep.subr.mxu0 0.0
  %591 = vmatpush1.msra.mxu0 0.0
  %592 = vmatprep.subr.mxu0 0.0
  %593 = vmatpush1.msra.mxu0 0.0
  %594 = vmatprep.mubr.f32.mxu0 0.0
  %595 = vmatmul.mubr.f32.gmra.mrb[0].mxu0 %v269
  %v596 = vpop.f32.mrb[0].mxu0
  %v597 = vadd.f32 0.0, %v596
  %v598 = vpop.f32.mrb[0].mxu0
  %v599 = vadd.f32 0.0, %v598
  %600 = vmatprep.mubr.f32.mxu0 0.0
  %601 = vmatmul.mubr.f32.gmra.mrb[0].mxu0 %v272
  %v602 = vpop.f32.mrb[0].mxu0
  %v603 = vadd.f32 0.0, %v602
  %v604 = vpop.f32.mrb[0].mxu0
  %v605 = vadd.f32 0.0, %v604
  %606 = vdwg.mxu0
  %v611 = vunpack.c.l.b16 %v37
  %v612 = vunpack.c.h.b16 %v37
  %v613 = vunpack.c.l.b16 %v38
  %v614 = vunpack.c.h.b16 %v38
  %v615 = vunpack.c.l.b16 %v39
  %v616 = vunpack.c.h.b16 %v39
  %v617 = vunpack.c.l.b16 %v40
  %v618 = vunpack.c.h.b16 %v40
  %v619 = vpack.c.b16 %v615, %v611
  %v620 = vpack.c.b16 %v616, %v612
  %v621 = vpack.c.b16 %v617, %v613
  %v622 = vpack.c.b16 %v618, %v614
  %v834 = vunpack.c.l.b16 %v41
  %v835 = vunpack.c.h.b16 %v41
  %v836 = vunpack.c.l.b16 %v42
  %v837 = vunpack.c.h.b16 %v42
  %v838 = vunpack.c.l.b16 %v43
  %v839 = vunpack.c.h.b16 %v43
  %v840 = vunpack.c.l.b16 %v44
  %v841 = vunpack.c.h.b16 %v44
  %v842 = vunpack.c.l.b16 %v45
  %v843 = vunpack.c.h.b16 %v45
  %v844 = vunpack.c.l.b16 %v46
  %v845 = vunpack.c.h.b16 %v46
  %v846 = vunpack.c.l.b16 %v47
  %v847 = vunpack.c.h.b16 %v47
  %v848 = vunpack.c.l.b16 %v48
  %v849 = vunpack.c.h.b16 %v48
  %v850 = vunpack.c.l.b16 %v49
  %v851 = vunpack.c.h.b16 %v49
  %v852 = vunpack.c.l.b16 %v50
  %v853 = vunpack.c.h.b16 %v50
  %v854 = vunpack.c.l.b16 %v51
  %v855 = vunpack.c.h.b16 %v51
  %v856 = vunpack.c.l.b16 %v52
  %v857 = vunpack.c.h.b16 %v52
  %v858 = vunpack.c.l.b16 %v53
  %v859 = vunpack.c.h.b16 %v53
  %v860 = vunpack.c.l.b16 %v54
  %v861 = vunpack.c.h.b16 %v54
  %v862 = vunpack.c.l.b16 %v55
  %v863 = vunpack.c.h.b16 %v55
  %v864 = vunpack.c.l.b16 %v56
  %v865 = vunpack.c.h.b16 %v56
  %v866 = vunpack.c.l.b16 %v57
  %v867 = vunpack.c.h.b16 %v57
  %v868 = vunpack.c.l.b16 %v58
  %v869 = vunpack.c.h.b16 %v58
  %v870 = vunpack.c.l.b16 %v59
  %v871 = vunpack.c.h.b16 %v59
  %v872 = vunpack.c.l.b16 %v60
  %v873 = vunpack.c.h.b16 %v60
  %v874 = vunpack.c.l.b16 %v61
  %v875 = vunpack.c.h.b16 %v61
  %v876 = vunpack.c.l.b16 %v62
  %v877 = vunpack.c.h.b16 %v62
  %v878 = vunpack.c.l.b16 %v63
  %v879 = vunpack.c.h.b16 %v63
  %v880 = vunpack.c.l.b16 %v64
  %v881 = vunpack.c.h.b16 %v64
  %v882 = vunpack.c.l.b16 %v65
  %v883 = vunpack.c.h.b16 %v65
  %v884 = vunpack.c.l.b16 %v66
  %v885 = vunpack.c.h.b16 %v66
  %v886 = vunpack.c.l.b16 %v67
  %v887 = vunpack.c.h.b16 %v67
  %v888 = vunpack.c.l.b16 %v68
  %v889 = vunpack.c.h.b16 %v68
  %v890 = vunpack.c.l.b16 %v69
  %v891 = vunpack.c.h.b16 %v69
  %v892 = vunpack.c.l.b16 %v70
  %v893 = vunpack.c.h.b16 %v70
  %v894 = vunpack.c.l.b16 %v71
  %v895 = vunpack.c.h.b16 %v71
  %v896 = vunpack.c.l.b16 %v72
  %v897 = vunpack.c.h.b16 %v72
  %v898 = vunpack.c.l.b16 %v73
  %v899 = vunpack.c.h.b16 %v73
  %v900 = vunpack.c.l.b16 %v74
  %v901 = vunpack.c.h.b16 %v74
  %v902 = vunpack.c.l.b16 %v75
  %v903 = vunpack.c.h.b16 %v75
  %v904 = vunpack.c.l.b16 %v76
  %v905 = vunpack.c.h.b16 %v76
  %v906 = vunpack.c.l.b16 %v77
  %v907 = vunpack.c.h.b16 %v77
  %v908 = vunpack.c.l.b16 %v78
  %v909 = vunpack.c.h.b16 %v78
  %v910 = vunpack.c.l.b16 %v79
  %v911 = vunpack.c.h.b16 %v79
  %v912 = vunpack.c.l.b16 %v80
  %v913 = vunpack.c.h.b16 %v80
  %v914 = vunpack.c.l.b16 %v81
  %v915 = vunpack.c.h.b16 %v81
  %v916 = vunpack.c.l.b16 %v82
  %v917 = vunpack.c.h.b16 %v82
  %v918 = vunpack.c.l.b16 %v83
  %v919 = vunpack.c.h.b16 %v83
  %v920 = vunpack.c.l.b16 %v84
  %v921 = vunpack.c.h.b16 %v84
  %v922 = vunpack.c.l.b16 %v85
  %v923 = vunpack.c.h.b16 %v85
  %v924 = vunpack.c.l.b16 %v86
  %v925 = vunpack.c.h.b16 %v86
  %v926 = vunpack.c.l.b16 %v87
  %v927 = vunpack.c.h.b16 %v87
  %v928 = vunpack.c.l.b16 %v88
  %v929 = vunpack.c.h.b16 %v88
  %v930 = vunpack.c.l.b16 %v89
  %v931 = vunpack.c.h.b16 %v89
  %v932 = vunpack.c.l.b16 %v90
  %v933 = vunpack.c.h.b16 %v90
  %v934 = vunpack.c.l.b16 %v91
  %v935 = vunpack.c.h.b16 %v91
  %v936 = vunpack.c.l.b16 %v92
  %v937 = vunpack.c.h.b16 %v92
  %v938 = vunpack.c.l.b16 %v93
  %v939 = vunpack.c.h.b16 %v93
  %v940 = vunpack.c.l.b16 %v94
  %v941 = vunpack.c.h.b16 %v94
  %v942 = vunpack.c.l.b16 %v95
  %v943 = vunpack.c.h.b16 %v95
  %v944 = vunpack.c.l.b16 %v96
  %v945 = vunpack.c.h.b16 %v96
  %v946 = vunpack.c.l.b16 %v97
  %v947 = vunpack.c.h.b16 %v97
  %v948 = vunpack.c.l.b16 %v98
  %v949 = vunpack.c.h.b16 %v98
  %v950 = vunpack.c.l.b16 %v99
  %v951 = vunpack.c.h.b16 %v99
  %v952 = vunpack.c.l.b16 %v100
  %v953 = vunpack.c.h.b16 %v100
  %v954 = vunpack.c.l.b16 %v101
  %v955 = vunpack.c.h.b16 %v101
  %v956 = vunpack.c.l.b16 %v102
  %v957 = vunpack.c.h.b16 %v102
  %v958 = vunpack.c.l.b16 %v103
  %v959 = vunpack.c.h.b16 %v103
  %v960 = vunpack.c.l.b16 %v104
  %v961 = vunpack.c.h.b16 %v104
  %v962 = vunpack.c.l.b16 %v105
  %v963 = vunpack.c.h.b16 %v105
  %v964 = vunpack.c.l.b16 %v106
  %v965 = vunpack.c.h.b16 %v106
  %v966 = vunpack.c.l.b16 %v107
  %v967 = vunpack.c.h.b16 %v107
  %v968 = vunpack.c.l.b16 %v108
  %v969 = vunpack.c.h.b16 %v108
  %v970 = vunpack.c.l.b16 %v109
  %v971 = vunpack.c.h.b16 %v109
  %v972 = vunpack.c.l.b16 %v110
  %v973 = vunpack.c.h.b16 %v110
  %v974 = vunpack.c.l.b16 %v111
  %v975 = vunpack.c.h.b16 %v111
  %v976 = vunpack.c.l.b16 %v112
  %v977 = vunpack.c.h.b16 %v112
  %v978 = vunpack.c.l.b16 %v113
  %v979 = vunpack.c.h.b16 %v113
  %v980 = vunpack.c.l.b16 %v114
  %v981 = vunpack.c.h.b16 %v114
  %v982 = vunpack.c.l.b16 %v115
  %v983 = vunpack.c.h.b16 %v115
  %v984 = vunpack.c.l.b16 %v116
  %v985 = vunpack.c.h.b16 %v116
  %v986 = vunpack.c.l.b16 %v117
  %v987 = vunpack.c.h.b16 %v117
  %v988 = vunpack.c.l.b16 %v118
  %v989 = vunpack.c.h.b16 %v118
  %v990 = vunpack.c.l.b16 %v119
  %v991 = vunpack.c.h.b16 %v119
  %v992 = vunpack.c.l.b16 %v120
  %v993 = vunpack.c.h.b16 %v120
  %v994 = vunpack.c.l.b16 %v121
  %v995 = vunpack.c.h.b16 %v121
  %v996 = vunpack.c.l.b16 %v122
  %v997 = vunpack.c.h.b16 %v122
  %v998 = vunpack.c.l.b16 %v123
  %v999 = vunpack.c.h.b16 %v123
  %v1000 = vunpack.c.l.b16 %v124
  %v1001 = vunpack.c.h.b16 %v124
  %v1002 = vunpack.c.l.b16 %v125
  %v1003 = vunpack.c.h.b16 %v125
  %v1004 = vunpack.c.l.b16 %v126
  %v1005 = vunpack.c.h.b16 %v126
  %v1006 = vunpack.c.l.b16 %v127
  %v1007 = vunpack.c.h.b16 %v127
  %v1008 = vunpack.c.l.b16 %v128
  %v1009 = vunpack.c.h.b16 %v128
  %v1010 = vunpack.c.l.b16 %v129
  %v1011 = vunpack.c.h.b16 %v129
  %v1012 = vunpack.c.l.b16 %v130
  %v1013 = vunpack.c.h.b16 %v130
  %v1014 = vunpack.c.l.b16 %v131
  %v1015 = vunpack.c.h.b16 %v131
  %v1016 = vunpack.c.l.b16 %v132
  %v1017 = vunpack.c.h.b16 %v132
  %v1018 = vunpack.c.l.b16 %v133
  %v1019 = vunpack.c.h.b16 %v133
  %v1020 = vunpack.c.l.b16 %v134
  %v1021 = vunpack.c.h.b16 %v134
  %v1022 = vunpack.c.l.b16 %v135
  %v1023 = vunpack.c.h.b16 %v135
  %v1024 = vunpack.c.l.b16 %v136
  %v1025 = vunpack.c.h.b16 %v136
  %v1026 = vunpack.c.l.b16 %v137
  %v1027 = vunpack.c.h.b16 %v137
  %v1028 = vunpack.c.l.b16 %v138
  %v1029 = vunpack.c.h.b16 %v138
  %v1030 = vunpack.c.l.b16 %v139
  %v1031 = vunpack.c.h.b16 %v139
  %v1032 = vunpack.c.l.b16 %v140
  %v1033 = vunpack.c.h.b16 %v140
  %v1034 = vunpack.c.l.b16 %v141
  %v1035 = vunpack.c.h.b16 %v141
  %v1036 = vunpack.c.l.b16 %v142
  %v1037 = vunpack.c.h.b16 %v142
  %v1038 = vunpack.c.l.b16 %v143
  %v1039 = vunpack.c.h.b16 %v143
  %v1040 = vunpack.c.l.b16 %v144
  %v1041 = vunpack.c.h.b16 %v144
  %v1042 = vunpack.c.l.b16 %v145
  %v1043 = vunpack.c.h.b16 %v145
  %v1044 = vunpack.c.l.b16 %v146
  %v1045 = vunpack.c.h.b16 %v146
  %v1046 = vunpack.c.l.b16 %v147
  %v1047 = vunpack.c.h.b16 %v147
  %v1048 = vunpack.c.l.b16 %v148
  %v1049 = vunpack.c.h.b16 %v148
  %v1050 = vunpack.c.l.b16 %v149
  %v1051 = vunpack.c.h.b16 %v149
  %v1052 = vunpack.c.l.b16 %v150
  %v1053 = vunpack.c.h.b16 %v150
  %v1054 = vunpack.c.l.b16 %v151
  %v1055 = vunpack.c.h.b16 %v151
  %v1056 = vunpack.c.l.b16 %v152
  %v1057 = vunpack.c.h.b16 %v152
  %v1058 = vunpack.c.l.b16 %v153
  %v1059 = vunpack.c.h.b16 %v153
  %v1060 = vunpack.c.l.b16 %v154
  %v1061 = vunpack.c.h.b16 %v154
  %v1062 = vunpack.c.l.b16 %v155
  %v1063 = vunpack.c.h.b16 %v155
  %v1064 = vunpack.c.l.b16 %v156
  %v1065 = vunpack.c.h.b16 %v156
  %v1066 = vunpack.c.l.b16 %v157
  %v1067 = vunpack.c.h.b16 %v157
  %v1068 = vunpack.c.l.b16 %v158
  %v1069 = vunpack.c.h.b16 %v158
  %v1070 = vunpack.c.l.b16 %v159
  %v1071 = vunpack.c.h.b16 %v159
  %v1072 = vunpack.c.l.b16 %v160
  %v1073 = vunpack.c.h.b16 %v160
  %v1074 = vunpack.c.l.b16 %v161
  %v1075 = vunpack.c.h.b16 %v161
  %v1076 = vunpack.c.l.b16 %v162
  %v1077 = vunpack.c.h.b16 %v162
  %v1078 = vunpack.c.l.b16 %v163
  %v1079 = vunpack.c.h.b16 %v163
  %v1080 = vunpack.c.l.b16 %v164
  %v1081 = vunpack.c.h.b16 %v164
  %v1082 = vunpack.c.l.b16 %v165
  %v1083 = vunpack.c.h.b16 %v165
  %v1084 = vunpack.c.l.b16 %v166
  %v1085 = vunpack.c.h.b16 %v166
  %v1086 = vunpack.c.l.b16 %v167
  %v1087 = vunpack.c.h.b16 %v167
  %v1088 = vunpack.c.l.b16 %v168
  %v1089 = vunpack.c.h.b16 %v168
  %v1090 = vunpack.c.l.b16 %v169
  %v1091 = vunpack.c.h.b16 %v169
  %v1092 = vunpack.c.l.b16 %v170
  %v1093 = vunpack.c.h.b16 %v170
  %v1094 = vunpack.c.l.b16 %v171
  %v1095 = vunpack.c.h.b16 %v171
  %v1096 = vunpack.c.l.b16 %v172
  %v1097 = vunpack.c.h.b16 %v172
  %v1098 = vunpack.c.l.b16 %v173
  %v1099 = vunpack.c.h.b16 %v173
  %v1100 = vunpack.c.l.b16 %v174
  %v1101 = vunpack.c.h.b16 %v174
  %v1102 = vunpack.c.l.b16 %v175
  %v1103 = vunpack.c.h.b16 %v175
  %v1104 = vunpack.c.l.b16 %v176
  %v1105 = vunpack.c.h.b16 %v176
  %v1106 = vunpack.c.l.b16 %v177
  %v1107 = vunpack.c.h.b16 %v177
  %v1108 = vunpack.c.l.b16 %v178
  %v1109 = vunpack.c.h.b16 %v178
  %v1110 = vunpack.c.l.b16 %v179
  %v1111 = vunpack.c.h.b16 %v179
  %v1112 = vunpack.c.l.b16 %v180
  %v1113 = vunpack.c.h.b16 %v180
  %v1114 = vunpack.c.l.b16 %v181
  %v1115 = vunpack.c.h.b16 %v181
  %v1116 = vunpack.c.l.b16 %v182
  %v1117 = vunpack.c.h.b16 %v182
  %v1118 = vunpack.c.l.b16 %v183
  %v1119 = vunpack.c.h.b16 %v183
  %v1120 = vunpack.c.l.b16 %v184
  %v1121 = vunpack.c.h.b16 %v184
  %v1122 = vunpack.c.l.b16 %v185
  %v1123 = vunpack.c.h.b16 %v185
  %v1124 = vunpack.c.l.b16 %v186
  %v1125 = vunpack.c.h.b16 %v186
  %v1126 = vunpack.c.l.b16 %v187
  %v1127 = vunpack.c.h.b16 %v187
  %v1128 = vunpack.c.l.b16 %v188
  %v1129 = vunpack.c.h.b16 %v188
  %v1130 = vunpack.c.l.b16 %v189
  %v1131 = vunpack.c.h.b16 %v189
  %v1132 = vunpack.c.l.b16 %v190
  %v1133 = vunpack.c.h.b16 %v190
  %v1134 = vunpack.c.l.b16 %v191
  %v1135 = vunpack.c.h.b16 %v191
  %v1136 = vunpack.c.l.b16 %v192
  %v1137 = vunpack.c.h.b16 %v192
  %v1138 = vunpack.c.l.b16 %v193
  %v1139 = vunpack.c.h.b16 %v193
  %v1140 = vunpack.c.l.b16 %v194
  %v1141 = vunpack.c.h.b16 %v194
  %v1142 = vunpack.c.l.b16 %v195
  %v1143 = vunpack.c.h.b16 %v195
  %v1144 = vunpack.c.l.b16 %v196
  %v1145 = vunpack.c.h.b16 %v196
  %v1146 = vunpack.c.l.b16 %v197
  %v1147 = vunpack.c.h.b16 %v197
  %v1148 = vunpack.c.l.b16 %v198
  %v1149 = vunpack.c.h.b16 %v198
  %v1150 = vunpack.c.l.b16 %v199
  %v1151 = vunpack.c.h.b16 %v199
  %v1152 = vunpack.c.l.b16 %v200
  %v1153 = vunpack.c.h.b16 %v200
  %v1154 = vunpack.c.l.b16 %v201
  %v1155 = vunpack.c.h.b16 %v201
  %v1156 = vunpack.c.l.b16 %v202
  %v1157 = vunpack.c.h.b16 %v202
  %v1158 = vunpack.c.l.b16 %v203
  %v1159 = vunpack.c.h.b16 %v203
  %v1160 = vunpack.c.l.b16 %v204
  %v1161 = vunpack.c.h.b16 %v204
  %v1162 = vunpack.c.l.b16 %v205
  %v1163 = vunpack.c.h.b16 %v205
  %v1164 = vunpack.c.l.b16 %v206
  %v1165 = vunpack.c.h.b16 %v206
  %v1166 = vunpack.c.l.b16 %v207
  %v1167 = vunpack.c.h.b16 %v207
  %v1168 = vunpack.c.l.b16 %v208
  %v1169 = vunpack.c.h.b16 %v208
  %v1170 = vunpack.c.l.b16 %v209
  %v1171 = vunpack.c.h.b16 %v209
  %v1172 = vunpack.c.l.b16 %v210
  %v1173 = vunpack.c.h.b16 %v210
  %v1174 = vunpack.c.l.b16 %v211
  %v1175 = vunpack.c.h.b16 %v211
  %v1176 = vunpack.c.l.b16 %v212
  %v1177 = vunpack.c.h.b16 %v212
  %v1178 = vunpack.c.l.b16 %v213
  %v1179 = vunpack.c.h.b16 %v213
  %v1180 = vunpack.c.l.b16 %v214
  %v1181 = vunpack.c.h.b16 %v214
  %v1182 = vunpack.c.l.b16 %v215
  %v1183 = vunpack.c.h.b16 %v215
  %v1184 = vunpack.c.l.b16 %v216
  %v1185 = vunpack.c.h.b16 %v216
  %v1186 = vunpack.c.l.b16 %v217
  %v1187 = vunpack.c.h.b16 %v217
  %v1188 = vunpack.c.l.b16 %v218
  %v1189 = vunpack.c.h.b16 %v218
  %v1190 = vunpack.c.l.b16 %v219
  %v1191 = vunpack.c.h.b16 %v219
  %v1192 = vunpack.c.l.b16 %v220
  %v1193 = vunpack.c.h.b16 %v220
  %v1194 = vunpack.c.l.b16 %v221
  %v1195 = vunpack.c.h.b16 %v221
  %v1196 = vunpack.c.l.b16 %v222
  %v1197 = vunpack.c.h.b16 %v222
  %v1198 = vunpack.c.l.b16 %v223
  %v1199 = vunpack.c.h.b16 %v223
  %v1200 = vunpack.c.l.b16 %v224
  %v1201 = vunpack.c.h.b16 %v224
  %v1202 = vunpack.c.l.b16 %v225
  %v1203 = vunpack.c.h.b16 %v225
  %v1204 = vunpack.c.l.b16 %v226
  %v1205 = vunpack.c.h.b16 %v226
  %v1206 = vunpack.c.l.b16 %v227
  %v1207 = vunpack.c.h.b16 %v227
  %v1208 = vunpack.c.l.b16 %v228
  %v1209 = vunpack.c.h.b16 %v228
  %v1210 = vunpack.c.l.b16 %v229
  %v1211 = vunpack.c.h.b16 %v229
  %v1212 = vunpack.c.l.b16 %v230
  %v1213 = vunpack.c.h.b16 %v230
  %v1214 = vunpack.c.l.b16 %v231
  %v1215 = vunpack.c.h.b16 %v231
  %v1216 = vunpack.c.l.b16 %v232
  %v1217 = vunpack.c.h.b16 %v232
  %v1218 = vunpack.c.l.b16 %v233
  %v1219 = vunpack.c.h.b16 %v233
  %v1220 = vunpack.c.l.b16 %v234
  %v1221 = vunpack.c.h.b16 %v234
  %v1222 = vunpack.c.l.b16 %v235
  %v1223 = vunpack.c.h.b16 %v235
  %v1224 = vunpack.c.l.b16 %v236
  %v1225 = vunpack.c.h.b16 %v236
  %v1226 = vunpack.c.l.b16 %v237
  %v1227 = vunpack.c.h.b16 %v237
  %v1228 = vunpack.c.l.b16 %v238
  %v1229 = vunpack.c.h.b16 %v238
  %v1230 = vunpack.c.l.b16 %v239
  %v1231 = vunpack.c.h.b16 %v239
  %v1232 = vunpack.c.l.b16 %v240
  %v1233 = vunpack.c.h.b16 %v240
  %v1234 = vunpack.c.l.b16 %v241
  %v1235 = vunpack.c.h.b16 %v241
  %v1236 = vunpack.c.l.b16 %v242
  %v1237 = vunpack.c.h.b16 %v242
  %v1238 = vunpack.c.l.b16 %v243
  %v1239 = vunpack.c.h.b16 %v243
  %v1240 = vunpack.c.l.b16 %v244
  %v1241 = vunpack.c.h.b16 %v244
  %v1242 = vunpack.c.l.b16 %v245
  %v1243 = vunpack.c.h.b16 %v245
  %v1244 = vunpack.c.l.b16 %v246
  %v1245 = vunpack.c.h.b16 %v246
  %v1246 = vunpack.c.l.b16 %v247
  %v1247 = vunpack.c.h.b16 %v247
  %v1248 = vunpack.c.l.b16 %v248
  %v1249 = vunpack.c.h.b16 %v248
  %v1250 = vpack.c.b16 %v842, %v834
  %v1251 = vpack.c.b16 %v843, %v835
  %v1252 = vpack.c.b16 %v844, %v836
  %v1253 = vpack.c.b16 %v845, %v837
  %v1254 = vpack.c.b16 %v846, %v838
  %v1255 = vpack.c.b16 %v847, %v839
  %v1256 = vpack.c.b16 %v848, %v840
  %v1257 = vpack.c.b16 %v849, %v841
  %v1258 = vpack.c.b16 %v858, %v850
  %v1259 = vpack.c.b16 %v859, %v851
  %v1260 = vpack.c.b16 %v860, %v852
  %v1261 = vpack.c.b16 %v861, %v853
  %v1262 = vpack.c.b16 %v862, %v854
  %v1263 = vpack.c.b16 %v863, %v855
  %v1264 = vpack.c.b16 %v864, %v856
  %v1265 = vpack.c.b16 %v865, %v857
  %v1266 = vpack.c.b16 %v874, %v866
  %v1267 = vpack.c.b16 %v875, %v867
  %v1268 = vpack.c.b16 %v876, %v868
  %v1269 = vpack.c.b16 %v877, %v869
  %v1270 = vpack.c.b16 %v878, %v870
  %v1271 = vpack.c.b16 %v879, %v871
  %v1272 = vpack.c.b16 %v880, %v872
  %v1273 = vpack.c.b16 %v881, %v873
  %v1274 = vpack.c.b16 %v890, %v882
  %v1275 = vpack.c.b16 %v891, %v883
  %v1276 = vpack.c.b16 %v892, %v884
  %v1277 = vpack.c.b16 %v893, %v885
  %v1278 = vpack.c.b16 %v894, %v886
  %v1279 = vpack.c.b16 %v895, %v887
  %v1280 = vpack.c.b16 %v896, %v888
  %v1281 = vpack.c.b16 %v897, %v889
  %v1282 = vpack.c.b16 %v906, %v898
  %v1283 = vpack.c.b16 %v907, %v899
  %v1284 = vpack.c.b16 %v908, %v900
  %v1285 = vpack.c.b16 %v909, %v901
  %v1286 = vpack.c.b16 %v910, %v902
  %v1287 = vpack.c.b16 %v911, %v903
  %v1288 = vpack.c.b16 %v912, %v904
  %v1289 = vpack.c.b16 %v913, %v905
  %v1290 = vpack.c.b16 %v922, %v914
  %v1291 = vpack.c.b16 %v923, %v915
  %v1292 = vpack.c.b16 %v924, %v916
  %v1293 = vpack.c.b16 %v925, %v917
  %v1294 = vpack.c.b16 %v926, %v918
  %v1295 = vpack.c.b16 %v927, %v919
  %v1296 = vpack.c.b16 %v928, %v920
  %v1297 = vpack.c.b16 %v929, %v921
  %v1298 = vpack.c.b16 %v938, %v930
  %v1299 = vpack.c.b16 %v939, %v931
  %v1300 = vpack.c.b16 %v940, %v932
  %v1301 = vpack.c.b16 %v941, %v933
  %v1302 = vpack.c.b16 %v942, %v934
  %v1303 = vpack.c.b16 %v943, %v935
  %v1304 = vpack.c.b16 %v944, %v936
  %v1305 = vpack.c.b16 %v945, %v937
  %v1306 = vpack.c.b16 %v954, %v946
  %v1307 = vpack.c.b16 %v955, %v947
  %v1308 = vpack.c.b16 %v956, %v948
  %v1309 = vpack.c.b16 %v957, %v949
  %v1310 = vpack.c.b16 %v958, %v950
  %v1311 = vpack.c.b16 %v959, %v951
  %v1312 = vpack.c.b16 %v960, %v952
  %v1313 = vpack.c.b16 %v961, %v953
  %v1314 = vpack.c.b16 %v970, %v962
  %v1315 = vpack.c.b16 %v971, %v963
  %v1316 = vpack.c.b16 %v972, %v964
  %v1317 = vpack.c.b16 %v973, %v965
  %v1318 = vpack.c.b16 %v974, %v966
  %v1319 = vpack.c.b16 %v975, %v967
  %v1320 = vpack.c.b16 %v976, %v968
  %v1321 = vpack.c.b16 %v977, %v969
  %v1322 = vpack.c.b16 %v986, %v978
  %v1323 = vpack.c.b16 %v987, %v979
  %v1324 = vpack.c.b16 %v988, %v980
  %v1325 = vpack.c.b16 %v989, %v981
  %v1326 = vpack.c.b16 %v990, %v982
  %v1327 = vpack.c.b16 %v991, %v983
  %v1328 = vpack.c.b16 %v992, %v984
  %v1329 = vpack.c.b16 %v993, %v985
  %v1330 = vpack.c.b16 %v1002, %v994
  %v1331 = vpack.c.b16 %v1003, %v995
  %v1332 = vpack.c.b16 %v1004, %v996
  %v1333 = vpack.c.b16 %v1005, %v997
  %v1334 = vpack.c.b16 %v1006, %v998
  %v1335 = vpack.c.b16 %v1007, %v999
  %v1336 = vpack.c.b16 %v1008, %v1000
  %v1337 = vpack.c.b16 %v1009, %v1001
  %v1338 = vpack.c.b16 %v1018, %v1010
  %v1339 = vpack.c.b16 %v1019, %v1011
  %v1340 = vpack.c.b16 %v1020, %v1012
  %v1341 = vpack.c.b16 %v1021, %v1013
  %v1342 = vpack.c.b16 %v1022, %v1014
  %v1343 = vpack.c.b16 %v1023, %v1015
  %v1344 = vpack.c.b16 %v1024, %v1016
  %v1345 = vpack.c.b16 %v1025, %v1017
  %v1346 = vpack.c.b16 %v1034, %v1026
  %v1347 = vpack.c.b16 %v1035, %v1027
  %v1348 = vpack.c.b16 %v1036, %v1028
  %v1349 = vpack.c.b16 %v1037, %v1029
  %v1350 = vpack.c.b16 %v1038, %v1030
  %v1351 = vpack.c.b16 %v1039, %v1031
  %v1352 = vpack.c.b16 %v1040, %v1032
  %v1353 = vpack.c.b16 %v1041, %v1033
  %v1354 = vpack.c.b16 %v1050, %v1042
  %v1355 = vpack.c.b16 %v1051, %v1043
  %v1356 = vpack.c.b16 %v1052, %v1044
  %v1357 = vpack.c.b16 %v1053, %v1045
  %v1358 = vpack.c.b16 %v1054, %v1046
  %v1359 = vpack.c.b16 %v1055, %v1047
  %v1360 = vpack.c.b16 %v1056, %v1048
  %v1361 = vpack.c.b16 %v1057, %v1049
  %v1362 = vpack.c.b16 %v1066, %v1058
  %v1363 = vpack.c.b16 %v1067, %v1059
  %v1364 = vpack.c.b16 %v1068, %v1060
  %v1365 = vpack.c.b16 %v1069, %v1061
  %v1366 = vpack.c.b16 %v1070, %v1062
  %v1367 = vpack.c.b16 %v1071, %v1063
  %v1368 = vpack.c.b16 %v1072, %v1064
  %v1369 = vpack.c.b16 %v1073, %v1065
  %v1370 = vpack.c.b16 %v1082, %v1074
  %v1371 = vpack.c.b16 %v1083, %v1075
  %v1372 = vpack.c.b16 %v1084, %v1076
  %v1373 = vpack.c.b16 %v1085, %v1077
  %v1374 = vpack.c.b16 %v1086, %v1078
  %v1375 = vpack.c.b16 %v1087, %v1079
  %v1376 = vpack.c.b16 %v1088, %v1080
  %v1377 = vpack.c.b16 %v1089, %v1081
  %v1378 = vpack.c.b16 %v1098, %v1090
  %v1379 = vpack.c.b16 %v1099, %v1091
  %v1380 = vpack.c.b16 %v1100, %v1092
  %v1381 = vpack.c.b16 %v1101, %v1093
  %v1382 = vpack.c.b16 %v1102, %v1094
  %v1383 = vpack.c.b16 %v1103, %v1095
  %v1384 = vpack.c.b16 %v1104, %v1096
  %v1385 = vpack.c.b16 %v1105, %v1097
  %v1386 = vpack.c.b16 %v1114, %v1106
  %v1387 = vpack.c.b16 %v1115, %v1107
  %v1388 = vpack.c.b16 %v1116, %v1108
  %v1389 = vpack.c.b16 %v1117, %v1109
  %v1390 = vpack.c.b16 %v1118, %v1110
  %v1391 = vpack.c.b16 %v1119, %v1111
  %v1392 = vpack.c.b16 %v1120, %v1112
  %v1393 = vpack.c.b16 %v1121, %v1113
  %v1394 = vpack.c.b16 %v1130, %v1122
  %v1395 = vpack.c.b16 %v1131, %v1123
  %v1396 = vpack.c.b16 %v1132, %v1124
  %v1397 = vpack.c.b16 %v1133, %v1125
  %v1398 = vpack.c.b16 %v1134, %v1126
  %v1399 = vpack.c.b16 %v1135, %v1127
  %v1400 = vpack.c.b16 %v1136, %v1128
  %v1401 = vpack.c.b16 %v1137, %v1129
  %v1402 = vpack.c.b16 %v1146, %v1138
  %v1403 = vpack.c.b16 %v1147, %v1139
  %v1404 = vpack.c.b16 %v1148, %v1140
  %v1405 = vpack.c.b16 %v1149, %v1141
  %v1406 = vpack.c.b16 %v1150, %v1142
  %v1407 = vpack.c.b16 %v1151, %v1143
  %v1408 = vpack.c.b16 %v1152, %v1144
  %v1409 = vpack.c.b16 %v1153, %v1145
  %v1410 = vpack.c.b16 %v1162, %v1154
  %v1411 = vpack.c.b16 %v1163, %v1155
  %v1412 = vpack.c.b16 %v1164, %v1156
  %v1413 = vpack.c.b16 %v1165, %v1157
  %v1414 = vpack.c.b16 %v1166, %v1158
  %v1415 = vpack.c.b16 %v1167, %v1159
  %v1416 = vpack.c.b16 %v1168, %v1160
  %v1417 = vpack.c.b16 %v1169, %v1161
  %v1418 = vpack.c.b16 %v1178, %v1170
  %v1419 = vpack.c.b16 %v1179, %v1171
  %v1420 = vpack.c.b16 %v1180, %v1172
  %v1421 = vpack.c.b16 %v1181, %v1173
  %v1422 = vpack.c.b16 %v1182, %v1174
  %v1423 = vpack.c.b16 %v1183, %v1175
  %v1424 = vpack.c.b16 %v1184, %v1176
  %v1425 = vpack.c.b16 %v1185, %v1177
  %v1426 = vpack.c.b16 %v1194, %v1186
  %v1427 = vpack.c.b16 %v1195, %v1187
  %v1428 = vpack.c.b16 %v1196, %v1188
  %v1429 = vpack.c.b16 %v1197, %v1189
  %v1430 = vpack.c.b16 %v1198, %v1190
  %v1431 = vpack.c.b16 %v1199, %v1191
  %v1432 = vpack.c.b16 %v1200, %v1192
  %v1433 = vpack.c.b16 %v1201, %v1193
  %v1434 = vpack.c.b16 %v1210, %v1202
  %v1435 = vpack.c.b16 %v1211, %v1203
  %v1436 = vpack.c.b16 %v1212, %v1204
  %v1437 = vpack.c.b16 %v1213, %v1205
  %v1438 = vpack.c.b16 %v1214, %v1206
  %v1439 = vpack.c.b16 %v1215, %v1207
  %v1440 = vpack.c.b16 %v1216, %v1208
  %v1441 = vpack.c.b16 %v1217, %v1209
  %v1442 = vpack.c.b16 %v1226, %v1218
  %v1443 = vpack.c.b16 %v1227, %v1219
  %v1444 = vpack.c.b16 %v1228, %v1220
  %v1445 = vpack.c.b16 %v1229, %v1221
  %v1446 = vpack.c.b16 %v1230, %v1222
  %v1447 = vpack.c.b16 %v1231, %v1223
  %v1448 = vpack.c.b16 %v1232, %v1224
  %v1449 = vpack.c.b16 %v1233, %v1225
  %v1450 = vpack.c.b16 %v1242, %v1234
  %v1451 = vpack.c.b16 %v1243, %v1235
  %v1452 = vpack.c.b16 %v1244, %v1236
  %v1453 = vpack.c.b16 %v1245, %v1237
  %v1454 = vpack.c.b16 %v1246, %v1238
  %v1455 = vpack.c.b16 %v1247, %v1239
  %v1456 = vpack.c.b16 %v1248, %v1240
  %v1457 = vpack.c.b16 %v1249, %v1241
  %vm1666 = vcmask 261120
  %v1668 = vsel %vm1666, %v622, 0
  %1670 = vmatprep.subr.bf16.mxu0 %v1251
  %1671 = vmatpush1.bf16.msra.mxu0 %v1250
  %1672 = vmatprep.subr.bf16.mxu0 %v1259
  %1673 = vmatpush1.bf16.msra.mxu0 %v1258
  %1674 = vmatprep.subr.bf16.mxu0 %v1267
  %1675 = vmatpush1.bf16.msra.mxu0 %v1266
  %1676 = vmatprep.subr.bf16.mxu0 %v1275
  %1677 = vmatpush1.bf16.msra.mxu0 %v1274
  %1678 = vmatprep.subr.bf16.mxu0 %v1283
  %1679 = vmatpush1.bf16.msra.mxu0 %v1282
  %1680 = vmatprep.subr.bf16.mxu0 %v1291
  %1681 = vmatpush1.bf16.msra.mxu0 %v1290
  %1682 = vmatprep.subr.bf16.mxu0 %v1299
  %1683 = vmatpush1.bf16.msra.mxu0 %v1298
  %1684 = vmatprep.subr.bf16.mxu0 %v1307
  %1685 = vmatpush1.bf16.msra.mxu0 %v1306
  %1686 = vmatprep.subr.bf16.mxu0 %v1315
  %1687 = vmatpush1.bf16.msra.mxu0 %v1314
  %1688 = vmatprep.subr.bf16.mxu0 %v1323
  %1689 = vmatpush1.bf16.msra.mxu0 %v1322
  %1690 = vmatprep.subr.bf16.mxu0 %v1331
  %1691 = vmatpush1.bf16.msra.mxu0 %v1330
  %1692 = vmatprep.subr.bf16.mxu0 %v1339
  %1693 = vmatpush1.bf16.msra.mxu0 %v1338
  %1694 = vmatprep.subr.bf16.mxu0 %v1347
  %1695 = vmatpush1.bf16.msra.mxu0 %v1346
  %1696 = vmatprep.subr.bf16.mxu0 %v1355
  %1697 = vmatpush1.bf16.msra.mxu0 %v1354
  %1698 = vmatprep.subr.bf16.mxu0 %v1363
  %1699 = vmatpush1.bf16.msra.mxu0 %v1362
  %1700 = vmatprep.subr.bf16.mxu0 %v1371
  %1701 = vmatpush1.bf16.msra.mxu0 %v1370
  %1702 = vmatprep.mubr.bf16.mxu0 %v620
  %1703 = vmatmul.mubr.bf16.gmra.mrb[0].mxu0 %v619
  %v1704 = vpop.f32.mrb[0].mxu0
  %v1705 = vadd.f32 %v366, %v1704
  %v1706 = vpop.f32.mrb[0].mxu0
  %v1707 = vadd.f32 %v368, %v1706
  %v1708 = vpop.f32.mrb[0].mxu0
  %v1709 = vadd.f32 %v372, %v1708
  %v1710 = vpop.f32.mrb[0].mxu0
  %v1711 = vadd.f32 %v374, %v1710
  %1712 = vdwg.mxu0
  %1713 = vmatprep.subr.bf16.mxu0 %v1379
  %1714 = vmatpush1.bf16.msra.mxu0 %v1378
  %1715 = vmatprep.subr.bf16.mxu0 %v1387
  %1716 = vmatpush1.bf16.msra.mxu0 %v1386
  %1717 = vmatprep.subr.bf16.mxu0 %v1395
  %1718 = vmatpush1.bf16.msra.mxu0 %v1394
  %1719 = vmatprep.subr.bf16.mxu0 %v1403
  %1720 = vmatpush1.bf16.msra.mxu0 %v1402
  %1721 = vmatprep.subr.bf16.mxu0 %v1411
  %1722 = vmatpush1.bf16.msra.mxu0 %v1410
  %1723 = vmatprep.subr.bf16.mxu0 %v1419
  %1724 = vmatpush1.bf16.msra.mxu0 %v1418
  %1725 = vmatprep.subr.bf16.mxu0 %v1427
  %1726 = vmatpush1.bf16.msra.mxu0 %v1426
  %1727 = vmatprep.subr.bf16.mxu0 %v1435
  %1728 = vmatpush1.bf16.msra.mxu0 %v1434
  %1729 = vmatprep.subr.bf16.mxu0 %v1443
  %1730 = vmatpush1.bf16.msra.mxu0 %v1442
  %1731 = vmatprep.subr.bf16.mxu0 %v1451
  %1732 = vmatpush1.bf16.msra.mxu0 %v1450
  %1733 = vmatprep.subr.bf16.mxu0 0
  %1734 = vmatpush1.bf16.msra.mxu0 0
  %1735 = vmatprep.subr.bf16.mxu0 0
  %1736 = vmatpush1.bf16.msra.mxu0 0
  %1737 = vmatprep.subr.bf16.mxu0 0
  %1738 = vmatpush1.bf16.msra.mxu0 0
  %1739 = vmatprep.subr.bf16.mxu0 0
  %1740 = vmatpush1.bf16.msra.mxu0 0
  %1741 = vmatprep.subr.bf16.mxu0 0
  %1742 = vmatpush1.bf16.msra.mxu0 0
  %1743 = vmatprep.subr.bf16.mxu0 0
  %1744 = vmatpush1.bf16.msra.mxu0 0
  %1745 = vmatprep.mubr.bf16.mxu0 %v1668
  %1746 = vmatmul.mubr.bf16.gmra.mrb[0].mxu0 %v621
  %v1747 = vpop.f32.mrb[0].mxu0
  %v1748 = vadd.f32 %v1705, %v1747
  %v1749 = vpop.f32.mrb[0].mxu0
  %v1750 = vadd.f32 %v1707, %v1749
  %v1751 = vpop.f32.mrb[0].mxu0
  %v1752 = vadd.f32 %v1709, %v1751
  %v1753 = vpop.f32.mrb[0].mxu0
  %v1754 = vadd.f32 %v1711, %v1753
  %1755 = vdwg.mxu0
  %1756 = vmatprep.subr.bf16.mxu0 %v1253
  %1757 = vmatpush1.bf16.msra.mxu0 %v1252
  %1758 = vmatprep.subr.bf16.mxu0 %v1261
  %1759 = vmatpush1.bf16.msra.mxu0 %v1260
  %1760 = vmatprep.subr.bf16.mxu0 %v1269
  %1761 = vmatpush1.bf16.msra.mxu0 %v1268
  %1762 = vmatprep.subr.bf16.mxu0 %v1277
  %1763 = vmatpush1.bf16.msra.mxu0 %v1276
  %1764 = vmatprep.subr.bf16.mxu0 %v1285
  %1765 = vmatpush1.bf16.msra.mxu0 %v1284
  %1766 = vmatprep.subr.bf16.mxu0 %v1293
  %1767 = vmatpush1.bf16.msra.mxu0 %v1292
  %1768 = vmatprep.subr.bf16.mxu0 %v1301
  %1769 = vmatpush1.bf16.msra.mxu0 %v1300
  %1770 = vmatprep.subr.bf16.mxu0 %v1309
  %1771 = vmatpush1.bf16.msra.mxu0 %v1308
  %1772 = vmatprep.subr.bf16.mxu0 %v1317
  %1773 = vmatpush1.bf16.msra.mxu0 %v1316
  %1774 = vmatprep.subr.bf16.mxu0 %v1325
  %1775 = vmatpush1.bf16.msra.mxu0 %v1324
  %1776 = vmatprep.subr.bf16.mxu0 %v1333
  %1777 = vmatpush1.bf16.msra.mxu0 %v1332
  %1778 = vmatprep.subr.bf16.mxu0 %v1341
  %1779 = vmatpush1.bf16.msra.mxu0 %v1340
  %1780 = vmatprep.subr.bf16.mxu0 %v1349
  %1781 = vmatpush1.bf16.msra.mxu0 %v1348
  %1782 = vmatprep.subr.bf16.mxu0 %v1357
  %1783 = vmatpush1.bf16.msra.mxu0 %v1356
  %1784 = vmatprep.subr.bf16.mxu0 %v1365
  %1785 = vmatpush1.bf16.msra.mxu0 %v1364
  %1786 = vmatprep.subr.bf16.mxu0 %v1373
  %1787 = vmatpush1.bf16.msra.mxu0 %v1372
  %1788 = vmatprep.mubr.bf16.mxu0 %v620
  %1789 = vmatmul.mubr.bf16.gmra.mrb[0].mxu0 %v619
  %v1790 = vpop.f32.mrb[0].mxu0
  %v1791 = vadd.f32 %v443, %v1790
  %v1792 = vpop.f32.mrb[0].mxu0
  %v1793 = vadd.f32 %v445, %v1792
  %v1794 = vpop.f32.mrb[0].mxu0
  %v1795 = vadd.f32 %v449, %v1794
  %v1796 = vpop.f32.mrb[0].mxu0
  %v1797 = vadd.f32 %v451, %v1796
  %1798 = vdwg.mxu0
  %1799 = vmatprep.subr.bf16.mxu0 %v1381
  %1800 = vmatpush1.bf16.msra.mxu0 %v1380
  %1801 = vmatprep.subr.bf16.mxu0 %v1389
  %1802 = vmatpush1.bf16.msra.mxu0 %v1388
  %1803 = vmatprep.subr.bf16.mxu0 %v1397
  %1804 = vmatpush1.bf16.msra.mxu0 %v1396
  %1805 = vmatprep.subr.bf16.mxu0 %v1405
  %1806 = vmatpush1.bf16.msra.mxu0 %v1404
  %1807 = vmatprep.subr.bf16.mxu0 %v1413
  %1808 = vmatpush1.bf16.msra.mxu0 %v1412
  %1809 = vmatprep.subr.bf16.mxu0 %v1421
  %1810 = vmatpush1.bf16.msra.mxu0 %v1420
  %1811 = vmatprep.subr.bf16.mxu0 %v1429
  %1812 = vmatpush1.bf16.msra.mxu0 %v1428
  %1813 = vmatprep.subr.bf16.mxu0 %v1437
  %1814 = vmatpush1.bf16.msra.mxu0 %v1436
  %1815 = vmatprep.subr.bf16.mxu0 %v1445
  %1816 = vmatpush1.bf16.msra.mxu0 %v1444
  %1817 = vmatprep.subr.bf16.mxu0 %v1453
  %1818 = vmatpush1.bf16.msra.mxu0 %v1452
  %1819 = vmatprep.subr.bf16.mxu0 0
  %1820 = vmatpush1.bf16.msra.mxu0 0
  %1821 = vmatprep.subr.bf16.mxu0 0
  %1822 = vmatpush1.bf16.msra.mxu0 0
  %1823 = vmatprep.subr.bf16.mxu0 0
  %1824 = vmatpush1.bf16.msra.mxu0 0
  %1825 = vmatprep.subr.bf16.mxu0 0
  %1826 = vmatpush1.bf16.msra.mxu0 0
  %1827 = vmatprep.subr.bf16.mxu0 0
  %1828 = vmatpush1.bf16.msra.mxu0 0
  %1829 = vmatprep.subr.bf16.mxu0 0
  %1830 = vmatpush1.bf16.msra.mxu0 0
  %1831 = vmatprep.mubr.bf16.mxu0 %v1668
  %1832 = vmatmul.mubr.bf16.gmra.mrb[0].mxu0 %v621
  %v1833 = vpop.f32.mrb[0].mxu0
  %v1834 = vadd.f32 %v1791, %v1833
  %v1835 = vpop.f32.mrb[0].mxu0
  %v1836 = vadd.f32 %v1793, %v1835
  %v1837 = vpop.f32.mrb[0].mxu0
  %v1838 = vadd.f32 %v1795, %v1837
  %v1839 = vpop.f32.mrb[0].mxu0
  %v1840 = vadd.f32 %v1797, %v1839
  %1841 = vdwg.mxu0
  %1842 = vmatprep.subr.bf16.mxu0 %v1255
  %1843 = vmatpush1.bf16.msra.mxu0 %v1254
  %1844 = vmatprep.subr.bf16.mxu0 %v1263
  %1845 = vmatpush1.bf16.msra.mxu0 %v1262
  %1846 = vmatprep.subr.bf16.mxu0 %v1271
  %1847 = vmatpush1.bf16.msra.mxu0 %v1270
  %1848 = vmatprep.subr.bf16.mxu0 %v1279
  %1849 = vmatpush1.bf16.msra.mxu0 %v1278
  %1850 = vmatprep.subr.bf16.mxu0 %v1287
  %1851 = vmatpush1.bf16.msra.mxu0 %v1286
  %1852 = vmatprep.subr.bf16.mxu0 %v1295
  %1853 = vmatpush1.bf16.msra.mxu0 %v1294
  %1854 = vmatprep.subr.bf16.mxu0 %v1303
  %1855 = vmatpush1.bf16.msra.mxu0 %v1302
  %1856 = vmatprep.subr.bf16.mxu0 %v1311
  %1857 = vmatpush1.bf16.msra.mxu0 %v1310
  %1858 = vmatprep.subr.bf16.mxu0 %v1319
  %1859 = vmatpush1.bf16.msra.mxu0 %v1318
  %1860 = vmatprep.subr.bf16.mxu0 %v1327
  %1861 = vmatpush1.bf16.msra.mxu0 %v1326
  %1862 = vmatprep.subr.bf16.mxu0 %v1335
  %1863 = vmatpush1.bf16.msra.mxu0 %v1334
  %1864 = vmatprep.subr.bf16.mxu0 %v1343
  %1865 = vmatpush1.bf16.msra.mxu0 %v1342
  %1866 = vmatprep.subr.bf16.mxu0 %v1351
  %1867 = vmatpush1.bf16.msra.mxu0 %v1350
  %1868 = vmatprep.subr.bf16.mxu0 %v1359
  %1869 = vmatpush1.bf16.msra.mxu0 %v1358
  %1870 = vmatprep.subr.bf16.mxu0 %v1367
  %1871 = vmatpush1.bf16.msra.mxu0 %v1366
  %1872 = vmatprep.subr.bf16.mxu0 %v1375
  %1873 = vmatpush1.bf16.msra.mxu0 %v1374
  %1874 = vmatprep.mubr.bf16.mxu0 %v620
  %1875 = vmatmul.mubr.bf16.gmra.mrb[0].mxu0 %v619
  %v1876 = vpop.f32.mrb[0].mxu0
  %v1877 = vadd.f32 %v520, %v1876
  %v1878 = vpop.f32.mrb[0].mxu0
  %v1879 = vadd.f32 %v522, %v1878
  %v1880 = vpop.f32.mrb[0].mxu0
  %v1881 = vadd.f32 %v526, %v1880
  %v1882 = vpop.f32.mrb[0].mxu0
  %v1883 = vadd.f32 %v528, %v1882
  %1884 = vdwg.mxu0
  %1885 = vmatprep.subr.bf16.mxu0 %v1383
  %1886 = vmatpush1.bf16.msra.mxu0 %v1382
  %1887 = vmatprep.subr.bf16.mxu0 %v1391
  %1888 = vmatpush1.bf16.msra.mxu0 %v1390
  %1889 = vmatprep.subr.bf16.mxu0 %v1399
  %1890 = vmatpush1.bf16.msra.mxu0 %v1398
  %1891 = vmatprep.subr.bf16.mxu0 %v1407
  %1892 = vmatpush1.bf16.msra.mxu0 %v1406
  %1893 = vmatprep.subr.bf16.mxu0 %v1415
  %1894 = vmatpush1.bf16.msra.mxu0 %v1414
  %1895 = vmatprep.subr.bf16.mxu0 %v1423
  %1896 = vmatpush1.bf16.msra.mxu0 %v1422
  %1897 = vmatprep.subr.bf16.mxu0 %v1431
  %1898 = vmatpush1.bf16.msra.mxu0 %v1430
  %1899 = vmatprep.subr.bf16.mxu0 %v1439
  %1900 = vmatpush1.bf16.msra.mxu0 %v1438
  %1901 = vmatprep.subr.bf16.mxu0 %v1447
  %1902 = vmatpush1.bf16.msra.mxu0 %v1446
  %1903 = vmatprep.subr.bf16.mxu0 %v1455
  %1904 = vmatpush1.bf16.msra.mxu0 %v1454
  %1905 = vmatprep.subr.bf16.mxu0 0
  %1906 = vmatpush1.bf16.msra.mxu0 0
  %1907 = vmatprep.subr.bf16.mxu0 0
  %1908 = vmatpush1.bf16.msra.mxu0 0
  %1909 = vmatprep.subr.bf16.mxu0 0
  %1910 = vmatpush1.bf16.msra.mxu0 0
  %1911 = vmatprep.subr.bf16.mxu0 0
  %1912 = vmatpush1.bf16.msra.mxu0 0
  %1913 = vmatprep.subr.bf16.mxu0 0
  %1914 = vmatpush1.bf16.msra.mxu0 0
  %1915 = vmatprep.subr.bf16.mxu0 0
  %1916 = vmatpush1.bf16.msra.mxu0 0
  %1917 = vmatprep.mubr.bf16.mxu0 %v1668
  %1918 = vmatmul.mubr.bf16.gmra.mrb[0].mxu0 %v621
  %v1919 = vpop.f32.mrb[0].mxu0
  %v1920 = vadd.f32 %v1877, %v1919
  %v1921 = vpop.f32.mrb[0].mxu0
  %v1922 = vadd.f32 %v1879, %v1921
  %v1923 = vpop.f32.mrb[0].mxu0
  %v1924 = vadd.f32 %v1881, %v1923
  %v1925 = vpop.f32.mrb[0].mxu0
  %v1926 = vadd.f32 %v1883, %v1925
  %1927 = vdwg.mxu0
  %1928 = vmatprep.subr.bf16.mxu0 %v1257
  %1929 = vmatpush1.bf16.msra.mxu0 %v1256
  %1930 = vmatprep.subr.bf16.mxu0 %v1265
  %1931 = vmatpush1.bf16.msra.mxu0 %v1264
  %1932 = vmatprep.subr.bf16.mxu0 %v1273
  %1933 = vmatpush1.bf16.msra.mxu0 %v1272
  %1934 = vmatprep.subr.bf16.mxu0 %v1281
  %1935 = vmatpush1.bf16.msra.mxu0 %v1280
  %1936 = vmatprep.subr.bf16.mxu0 %v1289
  %1937 = vmatpush1.bf16.msra.mxu0 %v1288
  %1938 = vmatprep.subr.bf16.mxu0 %v1297
  %1939 = vmatpush1.bf16.msra.mxu0 %v1296
  %1940 = vmatprep.subr.bf16.mxu0 %v1305
  %1941 = vmatpush1.bf16.msra.mxu0 %v1304
  %1942 = vmatprep.subr.bf16.mxu0 %v1313
  %1943 = vmatpush1.bf16.msra.mxu0 %v1312
  %1944 = vmatprep.subr.bf16.mxu0 %v1321
  %1945 = vmatpush1.bf16.msra.mxu0 %v1320
  %1946 = vmatprep.subr.bf16.mxu0 %v1329
  %1947 = vmatpush1.bf16.msra.mxu0 %v1328
  %1948 = vmatprep.subr.bf16.mxu0 %v1337
  %1949 = vmatpush1.bf16.msra.mxu0 %v1336
  %1950 = vmatprep.subr.bf16.mxu0 %v1345
  %1951 = vmatpush1.bf16.msra.mxu0 %v1344
  %1952 = vmatprep.subr.bf16.mxu0 %v1353
  %1953 = vmatpush1.bf16.msra.mxu0 %v1352
  %1954 = vmatprep.subr.bf16.mxu0 %v1361
  %1955 = vmatpush1.bf16.msra.mxu0 %v1360
  %1956 = vmatprep.subr.bf16.mxu0 %v1369
  %1957 = vmatpush1.bf16.msra.mxu0 %v1368
  %1958 = vmatprep.subr.bf16.mxu0 %v1377
  %1959 = vmatpush1.bf16.msra.mxu0 %v1376
  %1960 = vmatprep.mubr.bf16.mxu0 %v620
  %1961 = vmatmul.mubr.bf16.gmra.mrb[0].mxu0 %v619
  %v1962 = vpop.f32.mrb[0].mxu0
  %v1963 = vadd.f32 %v597, %v1962
  %v1964 = vpop.f32.mrb[0].mxu0
  %v1965 = vadd.f32 %v599, %v1964
  %v1966 = vpop.f32.mrb[0].mxu0
  %v1967 = vadd.f32 %v603, %v1966
  %v1968 = vpop.f32.mrb[0].mxu0
  %v1969 = vadd.f32 %v605, %v1968
  %1970 = vdwg.mxu0
  %1971 = vmatprep.subr.bf16.mxu0 %v1385
  %1972 = vmatpush1.bf16.msra.mxu0 %v1384
  %1973 = vmatprep.subr.bf16.mxu0 %v1393
  %1974 = vmatpush1.bf16.msra.mxu0 %v1392
  %1975 = vmatprep.subr.bf16.mxu0 %v1401
  %1976 = vmatpush1.bf16.msra.mxu0 %v1400
  %1977 = vmatprep.subr.bf16.mxu0 %v1409
  %1978 = vmatpush1.bf16.msra.mxu0 %v1408
  %1979 = vmatprep.subr.bf16.mxu0 %v1417
  %1980 = vmatpush1.bf16.msra.mxu0 %v1416
  %1981 = vmatprep.subr.bf16.mxu0 %v1425
  %1982 = vmatpush1.bf16.msra.mxu0 %v1424
  %1983 = vmatprep.subr.bf16.mxu0 %v1433
  %1984 = vmatpush1.bf16.msra.mxu0 %v1432
  %1985 = vmatprep.subr.bf16.mxu0 %v1441
  %1986 = vmatpush1.bf16.msra.mxu0 %v1440
  %1987 = vmatprep.subr.bf16.mxu0 %v1449
  %1988 = vmatpush1.bf16.msra.mxu0 %v1448
  %1989 = vmatprep.subr.bf16.mxu0 %v1457
  %1990 = vmatpush1.bf16.msra.mxu0 %v1456
  %1991 = vmatprep.subr.bf16.mxu0 0
  %1992 = vmatpush1.bf16.msra.mxu0 0
  %1993 = vmatprep.subr.bf16.mxu0 0
  %1994 = vmatpush1.bf16.msra.mxu0 0
  %1995 = vmatprep.subr.bf16.mxu0 0
  %1996 = vmatpush1.bf16.msra.mxu0 0
  %1997 = vmatprep.subr.bf16.mxu0 0
  %1998 = vmatpush1.bf16.msra.mxu0 0
  %1999 = vmatprep.subr.bf16.mxu0 0
  %2000 = vmatpush1.bf16.msra.mxu0 0
  %2001 = vmatprep.subr.bf16.mxu0 0
  %2002 = vmatpush1.bf16.msra.mxu0 0
  %2003 = vmatprep.mubr.bf16.mxu0 %v1668
  %2004 = vmatmul.mubr.bf16.gmra.mrb[0].mxu0 %v621
  %v2005 = vpop.f32.mrb[0].mxu0
  %v2006 = vadd.f32 %v1963, %v2005
  %v2007 = vpop.f32.mrb[0].mxu0
  %v2008 = vadd.f32 %v1965, %v2007
  %v2009 = vpop.f32.mrb[0].mxu0
  %v2010 = vadd.f32 %v1967, %v2009
  %v2011 = vpop.f32.mrb[0].mxu0
  %v2012 = vadd.f32 %v1969, %v2011
  %2013 = vdwg.mxu0
  %v2014 = vld [vmem:[%s4] sm:$0xff]
  %v2016 = vlaneseq
  %v2017 = vshrl.u32 %v2016, 7
  %v2018 = vsub.s32 0, %v2017
  %v2019 = vrot.slane %v2014, %v2018
  %v2020 = vlaneseq
  %v2021 = vshrl.u32 %v2020, 7
  %v2022 = vsub.s32 1, %v2021
  %v2023 = vrot.slane %v2014, %v2022
  %v2024 = vlaneseq
  %v2025 = vshrl.u32 %v2024, 7
  %v2026 = vsub.s32 2, %v2025
  %v2027 = vrot.slane %v2014, %v2026
  %v2028 = vlaneseq
  %v2029 = vshrl.u32 %v2028, 7
  %v2030 = vsub.s32 3, %v2029
  %v2031 = vrot.slane %v2014, %v2030
  %v2032 = vlaneseq
  %v2033 = vshrl.u32 %v2032, 7
  %v2034 = vsub.s32 4, %v2033
  %v2035 = vrot.slane %v2014, %v2034
  %v2036 = vlaneseq
  %v2037 = vshrl.u32 %v2036, 7
  %v2038 = vsub.s32 5, %v2037
  %v2039 = vrot.slane %v2014, %v2038
  %v2040 = vlaneseq
  %v2041 = vshrl.u32 %v2040, 7
  %v2042 = vsub.s32 6, %v2041
  %v2043 = vrot.slane %v2014, %v2042
  %v2044 = vlaneseq
  %v2045 = vshrl.u32 %v2044, 7
  %v2046 = vsub.s32 7, %v2045
  %v2047 = vrot.slane %v2014, %v2046
  %v2056 = vadd.f32 %v1748, %v2019
  %v2057 = vadd.f32 %v1750, %v2023
  %v2058 = vadd.f32 %v1834, %v2027
  %v2059 = vadd.f32 %v1836, %v2031
  %v2060 = vadd.f32 %v1920, %v2035
  %v2061 = vadd.f32 %v1922, %v2039
  %v2062 = vadd.f32 %v2006, %v2043
  %v2063 = vadd.f32 %v2008, %v2047
  %v2064 = vadd.f32 %v1752, %v2019
  %v2065 = vadd.f32 %v1754, %v2023
  %v2066 = vadd.f32 %v1838, %v2027
  %v2067 = vadd.f32 %v1840, %v2031
  %v2068 = vadd.f32 %v1924, %v2035
  %v2069 = vadd.f32 %v1926, %v2039
  %v2070 = vadd.f32 %v2010, %v2043
  %v2071 = vadd.f32 %v2012, %v2047
  %v2072 = vmax.f32 %v2056, 0.0
  %v2073 = vmax.f32 %v2057, 0.0
  %v2074 = vmax.f32 %v2058, 0.0
  %v2075 = vmax.f32 %v2059, 0.0
  %v2076 = vmax.f32 %v2060, 0.0
  %v2077 = vmax.f32 %v2061, 0.0
  %v2078 = vmax.f32 %v2062, 0.0
  %v2079 = vmax.f32 %v2063, 0.0
  %v2080 = vmax.f32 %v2064, 0.0
  %v2081 = vmax.f32 %v2065, 0.0
  %v2082 = vmax.f32 %v2066, 0.0
  %v2083 = vmax.f32 %v2067, 0.0
  %v2084 = vmax.f32 %v2068, 0.0
  %v2085 = vmax.f32 %v2069, 0.0
  %v2086 = vmax.f32 %v2070, 0.0
  %v2087 = vmax.f32 %v2071, 0.0
  %v2088 = vpack.c.bf16 %v2080, %v2072
  %v2089 = vpack.c.bf16 %v2081, %v2073
  %v2090 = vpack.c.bf16 %v2082, %v2074
  %v2091 = vpack.c.bf16 %v2083, %v2075
  %v2092 = vpack.c.bf16 %v2084, %v2076
  %v2093 = vpack.c.bf16 %v2085, %v2077
  %v2094 = vpack.c.bf16 %v2086, %v2078
  %v2095 = vpack.c.bf16 %v2087, %v2079
  %v2096 = vld [vmem:[%s5] sm:$0xff]
  %v2097 = vld [vmem:[%s5 + $0x8] sm:$0xff]
  %v2098 = vld [vmem:[%s5 + $0x10] sm:$0xff]
  %v2099 = vld [vmem:[%s5 + $0x18] sm:$0xff]
  %v2100 = vld [vmem:[%s5 + $0x20] sm:$0xff]
  %v2101 = vld [vmem:[%s5 + $0x28] sm:$0xff]
  %v2102 = vld [vmem:[%s5 + $0x30] sm:$0xff]
  %v2103 = vld [vmem:[%s5 + $0x38] sm:$0xff]
  %v2104 = vld [vmem:[%s5 + $0x40] sm:$0xff]
  %v2105 = vld [vmem:[%s5 + $0x48] sm:$0xff]
  %v2106 = vld [vmem:[%s5 + $0x50] sm:$0xff]
  %v2107 = vld [vmem:[%s5 + $0x58] sm:$0xff]
  %v2108 = vld [vmem:[%s5 + $0x60] sm:$0xff]
  %v2109 = vld [vmem:[%s5 + $0x68] sm:$0xff]
  %v2110 = vld [vmem:[%s5 + $0x70] sm:$0xff]
  %v2111 = vld [vmem:[%s5 + $0x78] sm:$0xff]
  %v2112 = vld [vmem:[%s5 + $0x80] sm:$0xff]
  %v2113 = vld [vmem:[%s5 + $0x88] sm:$0xff]
  %v2114 = vld [vmem:[%s5 + $0x90] sm:$0xff]
  %v2115 = vld [vmem:[%s5 + $0x98] sm:$0xff]
  %v2116 = vld [vmem:[%s5 + $0xa0] sm:$0xff]
  %v2117 = vld [vmem:[%s5 + $0xa8] sm:$0xff]
  %v2118 = vld [vmem:[%s5 + $0xb0] sm:$0xff]
  %v2119 = vld [vmem:[%s5 + $0xb8] sm:$0xff]
  %v2120 = vld [vmem:[%s5 + $0xc0] sm:$0xff]
  %v2121 = vld [vmem:[%s5 + $0xc8] sm:$0xff]
  %v2122 = vld [vmem:[%s5 + $0xd0] sm:$0xff]
  %v2123 = vld [vmem:[%s5 + $0xd8] sm:$0xff]
  %v2124 = vld [vmem:[%s5 + $0xe0] sm:$0xff]
  %v2125 = vld [vmem:[%s5 + $0xe8] sm:$0xff]
  %v2126 = vld [vmem:[%s5 + $0xf0] sm:$0xff]
  %v2127 = vld [vmem:[%s5 + $0xf8] sm:$0xff]
  %v2128 = vld [vmem:[%s5 + $0x100] sm:$0xff]
  %v2129 = vld [vmem:[%s5 + $0x108] sm:$0xff]
  %v2130 = vld [vmem:[%s5 + $0x110] sm:$0xff]
  %v2131 = vld [vmem:[%s5 + $0x118] sm:$0xff]
  %v2132 = vld [vmem:[%s5 + $0x120] sm:$0xff]
  %v2133 = vld [vmem:[%s5 + $0x128] sm:$0xff]
  %v2134 = vld [vmem:[%s5 + $0x130] sm:$0xff]
  %v2135 = vld [vmem:[%s5 + $0x138] sm:$0xff]
  %v2136 = vld [vmem:[%s5 + $0x140] sm:$0xff]
  %v2137 = vld [vmem:[%s5 + $0x148] sm:$0xff]
  %v2138 = vld [vmem:[%s5 + $0x150] sm:$0xff]
  %v2139 = vld [vmem:[%s5 + $0x158] sm:$0xff]
  %v2140 = vld [vmem:[%s5 + $0x160] sm:$0xff]
  %v2141 = vld [vmem:[%s5 + $0x168] sm:$0xff]
  %v2142 = vld [vmem:[%s5 + $0x170] sm:$0xff]
  %v2143 = vld [vmem:[%s5 + $0x178] sm:$0xff]
  %v2144 = vld [vmem:[%s5 + $0x180] sm:$0xff]
  %v2145 = vld [vmem:[%s5 + $0x188] sm:$0xff]
  %v2146 = vld [vmem:[%s5 + $0x190] sm:$0xff]
  %v2147 = vld [vmem:[%s5 + $0x198] sm:$0xff]
  %v2148 = vld [vmem:[%s5 + $0x1a0] sm:$0xff]
  %v2149 = vld [vmem:[%s5 + $0x1a8] sm:$0xff]
  %v2150 = vld [vmem:[%s5 + $0x1b0] sm:$0xff]
  %v2151 = vld [vmem:[%s5 + $0x1b8] sm:$0xff]
  %v2152 = vld [vmem:[%s5 + $0x1c0] sm:$0xff]
  %v2153 = vld [vmem:[%s5 + $0x1c8] sm:$0xff]
  %v2154 = vld [vmem:[%s5 + $0x1d0] sm:$0xff]
  %v2155 = vld [vmem:[%s5 + $0x1d8] sm:$0xff]
  %v2156 = vld [vmem:[%s5 + $0x1e0] sm:$0xff]
  %v2157 = vld [vmem:[%s5 + $0x1e8] sm:$0xff]
  %v2158 = vld [vmem:[%s5 + $0x1f0] sm:$0xff]
  %v2159 = vld [vmem:[%s5 + $0x1f8] sm:$0xff]
  %v2160 = vld [vmem:[%s5 + $0x200] sm:$0xff]
  %v2161 = vld [vmem:[%s5 + $0x208] sm:$0xff]
  %v2162 = vld [vmem:[%s5 + $0x210] sm:$0xff]
  %v2163 = vld [vmem:[%s5 + $0x218] sm:$0xff]
  %v2164 = vld [vmem:[%s5 + $0x220] sm:$0xff]
  %v2165 = vld [vmem:[%s5 + $0x228] sm:$0xff]
  %v2166 = vld [vmem:[%s5 + $0x230] sm:$0xff]
  %v2167 = vld [vmem:[%s5 + $0x238] sm:$0xff]
  %v2168 = vld [vmem:[%s5 + $0x240] sm:$0xff]
  %v2169 = vld [vmem:[%s5 + $0x248] sm:$0xff]
  %v2170 = vld [vmem:[%s5 + $0x250] sm:$0xff]
  %v2171 = vld [vmem:[%s5 + $0x258] sm:$0xff]
  %v2172 = vld [vmem:[%s5 + $0x260] sm:$0xff]
  %v2173 = vld [vmem:[%s5 + $0x268] sm:$0xff]
  %v2174 = vld [vmem:[%s5 + $0x270] sm:$0xff]
  %v2175 = vld [vmem:[%s5 + $0x278] sm:$0xff]
  %v2176 = vld [vmem:[%s5 + $0x280] sm:$0xff]
  %v2177 = vld [vmem:[%s5 + $0x288] sm:$0xff]
  %v2178 = vld [vmem:[%s5 + $0x290] sm:$0xff]
  %v2179 = vld [vmem:[%s5 + $0x298] sm:$0xff]
  %v2180 = vld [vmem:[%s5 + $0x2a0] sm:$0xff]
  %v2181 = vld [vmem:[%s5 + $0x2a8] sm:$0xff]
  %v2182 = vld [vmem:[%s5 + $0x2b0] sm:$0xff]
  %v2183 = vld [vmem:[%s5 + $0x2b8] sm:$0xff]
  %v2184 = vld [vmem:[%s5 + $0x2c0] sm:$0xff]
  %v2185 = vld [vmem:[%s5 + $0x2c8] sm:$0xff]
  %v2186 = vld [vmem:[%s5 + $0x2d0] sm:$0xff]
  %v2187 = vld [vmem:[%s5 + $0x2d8] sm:$0xff]
  %v2188 = vld [vmem:[%s5 + $0x2e0] sm:$0xff]
  %v2189 = vld [vmem:[%s5 + $0x2e8] sm:$0xff]
  %v2190 = vld [vmem:[%s5 + $0x2f0] sm:$0xff]
  %v2191 = vld [vmem:[%s5 + $0x2f8] sm:$0xff]
  %v2192 = vld [vmem:[%s5 + $0x300] sm:$0xff]
  %v2193 = vld [vmem:[%s5 + $0x308] sm:$0xff]
  %v2194 = vld [vmem:[%s5 + $0x310] sm:$0xff]
  %v2195 = vld [vmem:[%s5 + $0x318] sm:$0xff]
  %v2196 = vld [vmem:[%s5 + $0x320] sm:$0xff]
  %v2197 = vld [vmem:[%s5 + $0x328] sm:$0xff]
  %v2198 = vld [vmem:[%s5 + $0x330] sm:$0xff]
  %v2199 = vld [vmem:[%s5 + $0x338] sm:$0xff]
  %v2200 = vld [vmem:[%s5 + $0x340] sm:$0xff]
  %v2201 = vld [vmem:[%s5 + $0x348] sm:$0xff]
  %v2202 = vld [vmem:[%s5 + $0x350] sm:$0xff]
  %v2203 = vld [vmem:[%s5 + $0x358] sm:$0xff]
  %v2204 = vld [vmem:[%s5 + $0x360] sm:$0xff]
  %v2205 = vld [vmem:[%s5 + $0x368] sm:$0xff]
  %v2206 = vld [vmem:[%s5 + $0x370] sm:$0xff]
  %v2207 = vld [vmem:[%s5 + $0x378] sm:$0xff]
  %v2208 = vld [vmem:[%s5 + $0x380] sm:$0xff]
  %v2209 = vld [vmem:[%s5 + $0x388] sm:$0xff]
  %v2210 = vld [vmem:[%s5 + $0x390] sm:$0xff]
  %v2211 = vld [vmem:[%s5 + $0x398] sm:$0xff]
  %v2212 = vld [vmem:[%s5 + $0x3a0] sm:$0xff]
  %v2213 = vld [vmem:[%s5 + $0x3a8] sm:$0xff]
  %v2214 = vld [vmem:[%s5 + $0x3b0] sm:$0xff]
  %v2215 = vld [vmem:[%s5 + $0x3b8] sm:$0xff]
  %v2216 = vld [vmem:[%s5 + $0x3c0] sm:$0xff]
  %v2217 = vld [vmem:[%s5 + $0x3c8] sm:$0xff]
  %v2218 = vld [vmem:[%s5 + $0x3d0] sm:$0xff]
  %v2219 = vld [vmem:[%s5 + $0x3d8] sm:$0xff]
  %v2220 = vld [vmem:[%s5 + $0x3e0] sm:$0xff]
  %v2221 = vld [vmem:[%s5 + $0x3e8] sm:$0xff]
  %v2222 = vld [vmem:[%s5 + $0x3f0] sm:$0xff]
  %v2223 = vld [vmem:[%s5 + $0x3f8] sm:$0xff]
  %v2224 = vld [vmem:[%s5 + $0x400] sm:$0xff]
  %v2225 = vld [vmem:[%s5 + $0x408] sm:$0xff]
  %v2226 = vld [vmem:[%s5 + $0x410] sm:$0xff]
  %v2227 = vld [vmem:[%s5 + $0x418] sm:$0xff]
  %v2228 = vld [vmem:[%s5 + $0x420] sm:$0xff]
  %v2229 = vld [vmem:[%s5 + $0x428] sm:$0xff]
  %v2230 = vld [vmem:[%s5 + $0x430] sm:$0xff]
  %v2231 = vld [vmem:[%s5 + $0x438] sm:$0xff]
  %v2232 = vld [vmem:[%s5 + $0x440] sm:$0xff]
  %v2233 = vld [vmem:[%s5 + $0x448] sm:$0xff]
  %v2234 = vld [vmem:[%s5 + $0x450] sm:$0xff]
  %v2235 = vld [vmem:[%s5 + $0x458] sm:$0xff]
  %v2236 = vld [vmem:[%s5 + $0x460] sm:$0xff]
  %v2237 = vld [vmem:[%s5 + $0x468] sm:$0xff]
  %v2238 = vld [vmem:[%s5 + $0x470] sm:$0xff]
  %v2239 = vld [vmem:[%s5 + $0x478] sm:$0xff]
  %v2240 = vld [vmem:[%s5 + $0x480] sm:$0xff]
  %v2241 = vld [vmem:[%s5 + $0x488] sm:$0xff]
  %v2242 = vld [vmem:[%s5 + $0x490] sm:$0xff]
  %v2243 = vld [vmem:[%s5 + $0x498] sm:$0xff]
  %v2244 = vld [vmem:[%s5 + $0x4a0] sm:$0xff]
  %v2245 = vld [vmem:[%s5 + $0x4a8] sm:$0xff]
  %v2246 = vld [vmem:[%s5 + $0x4b0] sm:$0xff]
  %v2247 = vld [vmem:[%s5 + $0x4b8] sm:$0xff]
  %v2248 = vld [vmem:[%s5 + $0x4c0] sm:$0xff]
  %v2249 = vld [vmem:[%s5 + $0x4c8] sm:$0xff]
  %v2250 = vld [vmem:[%s5 + $0x4d0] sm:$0xff]
  %v2251 = vld [vmem:[%s5 + $0x4d8] sm:$0xff]
  %v2252 = vld [vmem:[%s5 + $0x4e0] sm:$0xff]
  %v2253 = vld [vmem:[%s5 + $0x4e8] sm:$0xff]
  %v2254 = vld [vmem:[%s5 + $0x4f0] sm:$0xff]
  %v2255 = vld [vmem:[%s5 + $0x4f8] sm:$0xff]
  %v2256 = vld [vmem:[%s5 + $0x500] sm:$0xff]
  %v2257 = vld [vmem:[%s5 + $0x508] sm:$0xff]
  %v2258 = vld [vmem:[%s5 + $0x510] sm:$0xff]
  %v2259 = vld [vmem:[%s5 + $0x518] sm:$0xff]
  %v2260 = vld [vmem:[%s5 + $0x520] sm:$0xff]
  %v2261 = vld [vmem:[%s5 + $0x528] sm:$0xff]
  %v2262 = vld [vmem:[%s5 + $0x530] sm:$0xff]
  %v2263 = vld [vmem:[%s5 + $0x538] sm:$0xff]
  %v2264 = vld [vmem:[%s5 + $0x540] sm:$0xff]
  %v2265 = vld [vmem:[%s5 + $0x548] sm:$0xff]
  %v2266 = vld [vmem:[%s5 + $0x550] sm:$0xff]
  %v2267 = vld [vmem:[%s5 + $0x558] sm:$0xff]
  %v2268 = vld [vmem:[%s5 + $0x560] sm:$0xff]
  %v2269 = vld [vmem:[%s5 + $0x568] sm:$0xff]
  %v2270 = vld [vmem:[%s5 + $0x570] sm:$0xff]
  %v2271 = vld [vmem:[%s5 + $0x578] sm:$0xff]
  %v2272 = vld [vmem:[%s5 + $0x580] sm:$0xff]
  %v2273 = vld [vmem:[%s5 + $0x588] sm:$0xff]
  %v2274 = vld [vmem:[%s5 + $0x590] sm:$0xff]
  %v2275 = vld [vmem:[%s5 + $0x598] sm:$0xff]
  %v2276 = vld [vmem:[%s5 + $0x5a0] sm:$0xff]
  %v2277 = vld [vmem:[%s5 + $0x5a8] sm:$0xff]
  %v2278 = vld [vmem:[%s5 + $0x5b0] sm:$0xff]
  %v2279 = vld [vmem:[%s5 + $0x5b8] sm:$0xff]
  %v2280 = vld [vmem:[%s5 + $0x5c0] sm:$0xff]
  %v2281 = vld [vmem:[%s5 + $0x5c8] sm:$0xff]
  %v2282 = vld [vmem:[%s5 + $0x5d0] sm:$0xff]
  %v2283 = vld [vmem:[%s5 + $0x5d8] sm:$0xff]
  %v2284 = vld [vmem:[%s5 + $0x5e0] sm:$0xff]
  %v2285 = vld [vmem:[%s5 + $0x5e8] sm:$0xff]
  %v2286 = vld [vmem:[%s5 + $0x5f0] sm:$0xff]
  %v2287 = vld [vmem:[%s5 + $0x5f8] sm:$0xff]
  %v2288 = vld [vmem:[%s5 + $0x600] sm:$0xff]
  %v2289 = vld [vmem:[%s5 + $0x608] sm:$0xff]
  %v2290 = vld [vmem:[%s5 + $0x610] sm:$0xff]
  %v2291 = vld [vmem:[%s5 + $0x618] sm:$0xff]
  %v2292 = vld [vmem:[%s5 + $0x620] sm:$0xff]
  %v2293 = vld [vmem:[%s5 + $0x628] sm:$0xff]
  %v2294 = vld [vmem:[%s5 + $0x630] sm:$0xff]
  %v2295 = vld [vmem:[%s5 + $0x638] sm:$0xff]
  %v2296 = vld [vmem:[%s5 + $0x640] sm:$0xff]
  %v2297 = vld [vmem:[%s5 + $0x648] sm:$0xff]
  %v2298 = vld [vmem:[%s5 + $0x650] sm:$0xff]
  %v2299 = vld [vmem:[%s5 + $0x658] sm:$0xff]
  %v2300 = vld [vmem:[%s5 + $0x660] sm:$0xff]
  %v2301 = vld [vmem:[%s5 + $0x668] sm:$0xff]
  %v2302 = vld [vmem:[%s5 + $0x670] sm:$0xff]
  %v2303 = vld [vmem:[%s5 + $0x678] sm:$0xff]
  %v2304 = vld [vmem:[%s5 + $0x680] sm:$0xff]
  %v2305 = vld [vmem:[%s5 + $0x688] sm:$0xff]
  %v2306 = vld [vmem:[%s5 + $0x690] sm:$0xff]
  %v2307 = vld [vmem:[%s5 + $0x698] sm:$0xff]
  %v2308 = vld [vmem:[%s5 + $0x6a0] sm:$0xff]
  %v2309 = vld [vmem:[%s5 + $0x6a8] sm:$0xff]
  %v2310 = vld [vmem:[%s5 + $0x6b0] sm:$0xff]
  %v2311 = vld [vmem:[%s5 + $0x6b8] sm:$0xff]
  %v2312 = vld [vmem:[%s5 + $0x6c0] sm:$0xff]
  %v2313 = vld [vmem:[%s5 + $0x6c8] sm:$0xff]
  %v2314 = vld [vmem:[%s5 + $0x6d0] sm:$0xff]
  %v2315 = vld [vmem:[%s5 + $0x6d8] sm:$0xff]
  %v2316 = vld [vmem:[%s5 + $0x6e0] sm:$0xff]
  %v2317 = vld [vmem:[%s5 + $0x6e8] sm:$0xff]
  %v2318 = vld [vmem:[%s5 + $0x6f0] sm:$0xff]
  %v2319 = vld [vmem:[%s5 + $0x6f8] sm:$0xff]
  %v2320 = vld [vmem:[%s5 + $0x700] sm:$0xff]
  %v2321 = vld [vmem:[%s5 + $0x708] sm:$0xff]
  %v2322 = vld [vmem:[%s5 + $0x710] sm:$0xff]
  %v2323 = vld [vmem:[%s5 + $0x718] sm:$0xff]
  %v2324 = vld [vmem:[%s5 + $0x720] sm:$0xff]
  %v2325 = vld [vmem:[%s5 + $0x728] sm:$0xff]
  %v2326 = vld [vmem:[%s5 + $0x730] sm:$0xff]
  %v2327 = vld [vmem:[%s5 + $0x738] sm:$0xff]
  %v2328 = vld [vmem:[%s5 + $0x740] sm:$0xff]
  %v2329 = vld [vmem:[%s5 + $0x748] sm:$0xff]
  %v2330 = vld [vmem:[%s5 + $0x750] sm:$0xff]
  %v2331 = vld [vmem:[%s5 + $0x758] sm:$0xff]
  %v2332 = vld [vmem:[%s5 + $0x760] sm:$0xff]
  %v2333 = vld [vmem:[%s5 + $0x768] sm:$0xff]
  %v2334 = vld [vmem:[%s5 + $0x770] sm:$0xff]
  %v2335 = vld [vmem:[%s5 + $0x778] sm:$0xff]
  %v2336 = vld [vmem:[%s5 + $0x780] sm:$0xff]
  %v2337 = vld [vmem:[%s5 + $0x788] sm:$0xff]
  %v2338 = vld [vmem:[%s5 + $0x790] sm:$0xff]
  %v2339 = vld [vmem:[%s5 + $0x798] sm:$0xff]
  %v2340 = vld [vmem:[%s5 + $0x7a0] sm:$0xff]
  %v2341 = vld [vmem:[%s5 + $0x7a8] sm:$0xff]
  %v2342 = vld [vmem:[%s5 + $0x7b0] sm:$0xff]
  %v2343 = vld [vmem:[%s5 + $0x7b8] sm:$0xff]
  %v2344 = vld [vmem:[%s5 + $0x7c0] sm:$0xff]
  %v2345 = vld [vmem:[%s5 + $0x7c8] sm:$0xff]
  %v2346 = vld [vmem:[%s5 + $0x7d0] sm:$0xff]
  %v2347 = vld [vmem:[%s5 + $0x7d8] sm:$0xff]
  %v2348 = vld [vmem:[%s5 + $0x7e0] sm:$0xff]
  %v2349 = vld [vmem:[%s5 + $0x7e8] sm:$0xff]
  %v2350 = vld [vmem:[%s5 + $0x7f0] sm:$0xff]
  %v2351 = vld [vmem:[%s5 + $0x7f8] sm:$0xff]
  %v2352 = vld [vmem:[%s5 + $0x800] sm:$0xff]
  %v2353 = vld [vmem:[%s5 + $0x808] sm:$0xff]
  %v2354 = vld [vmem:[%s5 + $0x810] sm:$0xff]
  %v2355 = vld [vmem:[%s5 + $0x818] sm:$0xff]
  %v2356 = vld [vmem:[%s5 + $0x820] sm:$0xff]
  %v2357 = vld [vmem:[%s5 + $0x828] sm:$0xff]
  %v2358 = vld [vmem:[%s5 + $0x830] sm:$0xff]
  %v2359 = vld [vmem:[%s5 + $0x838] sm:$0xff]
  %v2360 = vld [vmem:[%s5 + $0x840] sm:$0xff]
  %v2361 = vld [vmem:[%s5 + $0x848] sm:$0xff]
  %v2362 = vld [vmem:[%s5 + $0x850] sm:$0xff]
  %v2363 = vld [vmem:[%s5 + $0x858] sm:$0xff]
  %v2364 = vld [vmem:[%s5 + $0x860] sm:$0xff]
  %v2365 = vld [vmem:[%s5 + $0x868] sm:$0xff]
  %v2366 = vld [vmem:[%s5 + $0x870] sm:$0xff]
  %v2367 = vld [vmem:[%s5 + $0x878] sm:$0xff]
  %v2368 = vld [vmem:[%s5 + $0x880] sm:$0xff]
  %v2369 = vld [vmem:[%s5 + $0x888] sm:$0xff]
  %v2370 = vld [vmem:[%s5 + $0x890] sm:$0xff]
  %v2371 = vld [vmem:[%s5 + $0x898] sm:$0xff]
  %v2372 = vld [vmem:[%s5 + $0x8a0] sm:$0xff]
  %v2373 = vld [vmem:[%s5 + $0x8a8] sm:$0xff]
  %v2374 = vld [vmem:[%s5 + $0x8b0] sm:$0xff]
  %v2375 = vld [vmem:[%s5 + $0x8b8] sm:$0xff]
  %v2376 = vld [vmem:[%s5 + $0x8c0] sm:$0xff]
  %v2377 = vld [vmem:[%s5 + $0x8c8] sm:$0xff]
  %v2378 = vld [vmem:[%s5 + $0x8d0] sm:$0xff]
  %v2379 = vld [vmem:[%s5 + $0x8d8] sm:$0xff]
  %v2380 = vld [vmem:[%s5 + $0x8e0] sm:$0xff]
  %v2381 = vld [vmem:[%s5 + $0x8e8] sm:$0xff]
  %v2382 = vld [vmem:[%s5 + $0x8f0] sm:$0xff]
  %v2383 = vld [vmem:[%s5 + $0x8f8] sm:$0xff]
  %v2384 = vld [vmem:[%s5 + $0x900] sm:$0xff]
  %v2385 = vld [vmem:[%s5 + $0x908] sm:$0xff]
  %v2386 = vld [vmem:[%s5 + $0x910] sm:$0xff]
  %v2387 = vld [vmem:[%s5 + $0x918] sm:$0xff]
  %v2388 = vld [vmem:[%s5 + $0x920] sm:$0xff]
  %v2389 = vld [vmem:[%s5 + $0x928] sm:$0xff]
  %v2390 = vld [vmem:[%s5 + $0x930] sm:$0xff]
  %v2391 = vld [vmem:[%s5 + $0x938] sm:$0xff]
  %v2392 = vld [vmem:[%s5 + $0x940] sm:$0xff]
  %v2393 = vld [vmem:[%s5 + $0x948] sm:$0xff]
  %v2394 = vld [vmem:[%s5 + $0x950] sm:$0xff]
  %v2395 = vld [vmem:[%s5 + $0x958] sm:$0xff]
  %v2396 = vld [vmem:[%s5 + $0x960] sm:$0xff]
  %v2397 = vld [vmem:[%s5 + $0x968] sm:$0xff]
  %v2398 = vld [vmem:[%s5 + $0x970] sm:$0xff]
  %v2399 = vld [vmem:[%s5 + $0x978] sm:$0xff]
  %v2400 = vld [vmem:[%s5 + $0x980] sm:$0xff]
  %v2401 = vld [vmem:[%s5 + $0x988] sm:$0xff]
  %v2402 = vld [vmem:[%s5 + $0x990] sm:$0xff]
  %v2403 = vld [vmem:[%s5 + $0x998] sm:$0xff]
  %v2404 = vld [vmem:[%s5 + $0x9a0] sm:$0xff]
  %v2405 = vld [vmem:[%s5 + $0x9a8] sm:$0xff]
  %v2406 = vld [vmem:[%s5 + $0x9b0] sm:$0xff]
  %v2407 = vld [vmem:[%s5 + $0x9b8] sm:$0xff]
  %v2408 = vld [vmem:[%s5 + $0x9c0] sm:$0xff]
  %v2409 = vld [vmem:[%s5 + $0x9c8] sm:$0xff]
  %v2410 = vld [vmem:[%s5 + $0x9d0] sm:$0xff]
  %v2411 = vld [vmem:[%s5 + $0x9d8] sm:$0xff]
  %v2412 = vld [vmem:[%s5 + $0x9e0] sm:$0xff]
  %v2413 = vld [vmem:[%s5 + $0x9e8] sm:$0xff]
  %v2414 = vld [vmem:[%s5 + $0x9f0] sm:$0xff]
  %v2415 = vld [vmem:[%s5 + $0x9f8] sm:$0xff]
  %v2416 = vld [vmem:[%s5 + $0xa00] sm:$0xff]
  %v2417 = vld [vmem:[%s5 + $0xa08] sm:$0xff]
  %v2418 = vld [vmem:[%s5 + $0xa10] sm:$0xff]
  %v2419 = vld [vmem:[%s5 + $0xa18] sm:$0xff]
  %v2420 = vld [vmem:[%s5 + $0xa20] sm:$0xff]
  %v2421 = vld [vmem:[%s5 + $0xa28] sm:$0xff]
  %v2422 = vld [vmem:[%s5 + $0xa30] sm:$0xff]
  %v2423 = vld [vmem:[%s5 + $0xa38] sm:$0xff]
  %v2424 = vld [vmem:[%s5 + $0xa40] sm:$0xff]
  %v2425 = vld [vmem:[%s5 + $0xa48] sm:$0xff]
  %v2426 = vld [vmem:[%s5 + $0xa50] sm:$0xff]
  %v2427 = vld [vmem:[%s5 + $0xa58] sm:$0xff]
  %v2428 = vld [vmem:[%s5 + $0xa60] sm:$0xff]
  %v2429 = vld [vmem:[%s5 + $0xa68] sm:$0xff]
  %v2430 = vld [vmem:[%s5 + $0xa70] sm:$0xff]
  %v2431 = vld [vmem:[%s5 + $0xa78] sm:$0xff]
  %v2432 = vld [vmem:[%s5 + $0xa80] sm:$0xff]
  %v2433 = vld [vmem:[%s5 + $0xa88] sm:$0xff]
  %v2434 = vld [vmem:[%s5 + $0xa90] sm:$0xff]
  %v2435 = vld [vmem:[%s5 + $0xa98] sm:$0xff]
  %v2436 = vld [vmem:[%s5 + $0xaa0] sm:$0xff]
  %v2437 = vld [vmem:[%s5 + $0xaa8] sm:$0xff]
  %v2438 = vld [vmem:[%s5 + $0xab0] sm:$0xff]
  %v2439 = vld [vmem:[%s5 + $0xab8] sm:$0xff]
  %v2440 = vld [vmem:[%s5 + $0xac0] sm:$0xff]
  %v2441 = vld [vmem:[%s5 + $0xac8] sm:$0xff]
  %v2442 = vld [vmem:[%s5 + $0xad0] sm:$0xff]
  %v2443 = vld [vmem:[%s5 + $0xad8] sm:$0xff]
  %v2444 = vld [vmem:[%s5 + $0xae0] sm:$0xff]
  %v2445 = vld [vmem:[%s5 + $0xae8] sm:$0xff]
  %v2446 = vld [vmem:[%s5 + $0xaf0] sm:$0xff]
  %v2447 = vld [vmem:[%s5 + $0xaf8] sm:$0xff]
  %v2448 = vld [vmem:[%s5 + $0xb00] sm:$0xff]
  %v2449 = vld [vmem:[%s5 + $0xb08] sm:$0xff]
  %v2450 = vld [vmem:[%s5 + $0xb10] sm:$0xff]
  %v2451 = vld [vmem:[%s5 + $0xb18] sm:$0xff]
  %v2452 = vld [vmem:[%s5 + $0xb20] sm:$0xff]
  %v2453 = vld [vmem:[%s5 + $0xb28] sm:$0xff]
  %v2454 = vld [vmem:[%s5 + $0xb30] sm:$0xff]
  %v2455 = vld [vmem:[%s5 + $0xb38] sm:$0xff]
  %v2456 = vld [vmem:[%s5 + $0xb40] sm:$0xff]
  %v2457 = vld [vmem:[%s5 + $0xb48] sm:$0xff]
  %v2458 = vld [vmem:[%s5 + $0xb50] sm:$0xff]
  %v2459 = vld [vmem:[%s5 + $0xb58] sm:$0xff]
  %v2460 = vld [vmem:[%s5 + $0xb60] sm:$0xff]
  %v2461 = vld [vmem:[%s5 + $0xb68] sm:$0xff]
  %v2462 = vld [vmem:[%s5 + $0xb70] sm:$0xff]
  %v2463 = vld [vmem:[%s5 + $0xb78] sm:$0xff]
  %v2464 = vld [vmem:[%s5 + $0xb80] sm:$0xff]
  %v2465 = vld [vmem:[%s5 + $0xb88] sm:$0xff]
  %v2466 = vld [vmem:[%s5 + $0xb90] sm:$0xff]
  %v2467 = vld [vmem:[%s5 + $0xb98] sm:$0xff]
  %v2468 = vld [vmem:[%s5 + $0xba0] sm:$0xff]
  %v2469 = vld [vmem:[%s5 + $0xba8] sm:$0xff]
  %v2470 = vld [vmem:[%s5 + $0xbb0] sm:$0xff]
  %v2471 = vld [vmem:[%s5 + $0xbb8] sm:$0xff]
  %v2472 = vld [vmem:[%s5 + $0xbc0] sm:$0xff]
  %v2473 = vld [vmem:[%s5 + $0xbc8] sm:$0xff]
  %v2474 = vld [vmem:[%s5 + $0xbd0] sm:$0xff]
  %v2475 = vld [vmem:[%s5 + $0xbd8] sm:$0xff]
  %v2476 = vld [vmem:[%s5 + $0xbe0] sm:$0xff]
  %v2477 = vld [vmem:[%s5 + $0xbe8] sm:$0xff]
  %v2478 = vld [vmem:[%s5 + $0xbf0] sm:$0xff]
  %v2479 = vld [vmem:[%s5 + $0xbf8] sm:$0xff]
  %v2480 = vld [vmem:[%s5 + $0xc00] sm:$0xff]
  %v2481 = vld [vmem:[%s5 + $0xc08] sm:$0xff]
  %v2482 = vld [vmem:[%s5 + $0xc10] sm:$0xff]
  %v2483 = vld [vmem:[%s5 + $0xc18] sm:$0xff]
  %v2484 = vld [vmem:[%s5 + $0xc20] sm:$0xff]
  %v2485 = vld [vmem:[%s5 + $0xc28] sm:$0xff]
  %v2486 = vld [vmem:[%s5 + $0xc30] sm:$0xff]
  %v2487 = vld [vmem:[%s5 + $0xc38] sm:$0xff]
  %v2488 = vld [vmem:[%s5 + $0xc40] sm:$0xff]
  %v2489 = vld [vmem:[%s5 + $0xc48] sm:$0xff]
  %v2490 = vld [vmem:[%s5 + $0xc50] sm:$0xff]
  %v2491 = vld [vmem:[%s5 + $0xc58] sm:$0xff]
  %v2492 = vld [vmem:[%s5 + $0xc60] sm:$0xff]
  %v2493 = vld [vmem:[%s5 + $0xc68] sm:$0xff]
  %v2494 = vld [vmem:[%s5 + $0xc70] sm:$0xff]
  %v2495 = vld [vmem:[%s5 + $0xc78] sm:$0xff]
  %v2496 = vld [vmem:[%s5 + $0xc80] sm:$0xff]
  %v2497 = vld [vmem:[%s5 + $0xc88] sm:$0xff]
  %v2498 = vld [vmem:[%s5 + $0xc90] sm:$0xff]
  %v2499 = vld [vmem:[%s5 + $0xc98] sm:$0xff]
  %v2500 = vld [vmem:[%s5 + $0xca0] sm:$0xff]
  %v2501 = vld [vmem:[%s5 + $0xca8] sm:$0xff]
  %v2502 = vld [vmem:[%s5 + $0xcb0] sm:$0xff]
  %v2503 = vld [vmem:[%s5 + $0xcb8] sm:$0xff]
  %v2504 = vld [vmem:[%s5 + $0xcc0] sm:$0xff]
  %v2505 = vld [vmem:[%s5 + $0xcc8] sm:$0xff]
  %v2506 = vld [vmem:[%s5 + $0xcd0] sm:$0xff]
  %v2507 = vld [vmem:[%s5 + $0xcd8] sm:$0xff]
  %v2508 = vld [vmem:[%s5 + $0xce0] sm:$0xff]
  %v2509 = vld [vmem:[%s5 + $0xce8] sm:$0xff]
  %v2510 = vld [vmem:[%s5 + $0xcf0] sm:$0xff]
  %v2511 = vld [vmem:[%s5 + $0xcf8] sm:$0xff]
  %v2512 = vld [vmem:[%s5 + $0xd00] sm:$0xff]
  %v2513 = vld [vmem:[%s5 + $0xd08] sm:$0xff]
  %v2514 = vld [vmem:[%s5 + $0xd10] sm:$0xff]
  %v2515 = vld [vmem:[%s5 + $0xd18] sm:$0xff]
  %v2516 = vld [vmem:[%s5 + $0xd20] sm:$0xff]
  %v2517 = vld [vmem:[%s5 + $0xd28] sm:$0xff]
  %v2518 = vld [vmem:[%s5 + $0xd30] sm:$0xff]
  %v2519 = vld [vmem:[%s5 + $0xd38] sm:$0xff]
  %v2520 = vld [vmem:[%s5 + $0xd40] sm:$0xff]
  %v2521 = vld [vmem:[%s5 + $0xd48] sm:$0xff]
  %v2522 = vld [vmem:[%s5 + $0xd50] sm:$0xff]
  %v2523 = vld [vmem:[%s5 + $0xd58] sm:$0xff]
  %v2524 = vld [vmem:[%s5 + $0xd60] sm:$0xff]
  %v2525 = vld [vmem:[%s5 + $0xd68] sm:$0xff]
  %v2526 = vld [vmem:[%s5 + $0xd70] sm:$0xff]
  %v2527 = vld [vmem:[%s5 + $0xd78] sm:$0xff]
  %v2528 = vld [vmem:[%s5 + $0xd80] sm:$0xff]
  %v2529 = vld [vmem:[%s5 + $0xd88] sm:$0xff]
  %v2530 = vld [vmem:[%s5 + $0xd90] sm:$0xff]
  %v2531 = vld [vmem:[%s5 + $0xd98] sm:$0xff]
  %v2532 = vld [vmem:[%s5 + $0xda0] sm:$0xff]
  %v2533 = vld [vmem:[%s5 + $0xda8] sm:$0xff]
  %v2534 = vld [vmem:[%s5 + $0xdb0] sm:$0xff]
  %v2535 = vld [vmem:[%s5 + $0xdb8] sm:$0xff]
  %v2536 = vld [vmem:[%s5 + $0xdc0] sm:$0xff]
  %v2537 = vld [vmem:[%s5 + $0xdc8] sm:$0xff]
  %v2538 = vld [vmem:[%s5 + $0xdd0] sm:$0xff]
  %v2539 = vld [vmem:[%s5 + $0xdd8] sm:$0xff]
  %v2540 = vld [vmem:[%s5 + $0xde0] sm:$0xff]
  %v2541 = vld [vmem:[%s5 + $0xde8] sm:$0xff]
  %v2542 = vld [vmem:[%s5 + $0xdf0] sm:$0xff]
  %v2543 = vld [vmem:[%s5 + $0xdf8] sm:$0xff]
  %v2544 = vld [vmem:[%s5 + $0xe00] sm:$0xff]
  %v2545 = vld [vmem:[%s5 + $0xe08] sm:$0xff]
  %v2546 = vld [vmem:[%s5 + $0xe10] sm:$0xff]
  %v2547 = vld [vmem:[%s5 + $0xe18] sm:$0xff]
  %v2548 = vld [vmem:[%s5 + $0xe20] sm:$0xff]
  %v2549 = vld [vmem:[%s5 + $0xe28] sm:$0xff]
  %v2550 = vld [vmem:[%s5 + $0xe30] sm:$0xff]
  %v2551 = vld [vmem:[%s5 + $0xe38] sm:$0xff]
  %v2552 = vld [vmem:[%s5 + $0xe40] sm:$0xff]
  %v2553 = vld [vmem:[%s5 + $0xe48] sm:$0xff]
  %v2554 = vld [vmem:[%s5 + $0xe50] sm:$0xff]
  %v2555 = vld [vmem:[%s5 + $0xe58] sm:$0xff]
  %v2556 = vld [vmem:[%s5 + $0xe60] sm:$0xff]
  %v2557 = vld [vmem:[%s5 + $0xe68] sm:$0xff]
  %v2558 = vld [vmem:[%s5 + $0xe70] sm:$0xff]
  %v2559 = vld [vmem:[%s5 + $0xe78] sm:$0xff]
  %v2560 = vld [vmem:[%s5 + $0xe80] sm:$0xff]
  %v2561 = vld [vmem:[%s5 + $0xe88] sm:$0xff]
  %v2562 = vld [vmem:[%s5 + $0xe90] sm:$0xff]
  %v2563 = vld [vmem:[%s5 + $0xe98] sm:$0xff]
  %v2564 = vld [vmem:[%s5 + $0xea0] sm:$0xff]
  %v2565 = vld [vmem:[%s5 + $0xea8] sm:$0xff]
  %v2566 = vld [vmem:[%s5 + $0xeb0] sm:$0xff]
  %v2567 = vld [vmem:[%s5 + $0xeb8] sm:$0xff]
  %v2568 = vld [vmem:[%s5 + $0xec0] sm:$0xff]
  %v2569 = vld [vmem:[%s5 + $0xec8] sm:$0xff]
  %v2570 = vld [vmem:[%s5 + $0xed0] sm:$0xff]
  %v2571 = vld [vmem:[%s5 + $0xed8] sm:$0xff]
  %v2572 = vld [vmem:[%s5 + $0xee0] sm:$0xff]
  %v2573 = vld [vmem:[%s5 + $0xee8] sm:$0xff]
  %v2574 = vld [vmem:[%s5 + $0xef0] sm:$0xff]
  %v2575 = vld [vmem:[%s5 + $0xef8] sm:$0xff]
  %v2576 = vld [vmem:[%s5 + $0xf00] sm:$0xff]
  %v2577 = vld [vmem:[%s5 + $0xf08] sm:$0xff]
  %v2578 = vld [vmem:[%s5 + $0xf10] sm:$0xff]
  %v2579 = vld [vmem:[%s5 + $0xf18] sm:$0xff]
  %v2580 = vld [vmem:[%s5 + $0xf20] sm:$0xff]
  %v2581 = vld [vmem:[%s5 + $0xf28] sm:$0xff]
  %v2582 = vld [vmem:[%s5 + $0xf30] sm:$0xff]
  %v2583 = vld [vmem:[%s5 + $0xf38] sm:$0xff]
  %v2584 = vld [vmem:[%s5 + $0xf40] sm:$0xff]
  %v2585 = vld [vmem:[%s5 + $0xf48] sm:$0xff]
  %v2586 = vld [vmem:[%s5 + $0xf50] sm:$0xff]
  %v2587 = vld [vmem:[%s5 + $0xf58] sm:$0xff]
  %v2588 = vld [vmem:[%s5 + $0xf60] sm:$0xff]
  %v2589 = vld [vmem:[%s5 + $0xf68] sm:$0xff]
  %v2590 = vld [vmem:[%s5 + $0xf70] sm:$0xff]
  %v2591 = vld [vmem:[%s5 + $0xf78] sm:$0xff]
  %v2592 = vld [vmem:[%s5 + $0xf80] sm:$0xff]
  %v2593 = vld [vmem:[%s5 + $0xf88] sm:$0xff]
  %v2594 = vld [vmem:[%s5 + $0xf90] sm:$0xff]
  %v2595 = vld [vmem:[%s5 + $0xf98] sm:$0xff]
  %v2596 = vld [vmem:[%s5 + $0xfa0] sm:$0xff]
  %v2597 = vld [vmem:[%s5 + $0xfa8] sm:$0xff]
  %v2598 = vld [vmem:[%s5 + $0xfb0] sm:$0xff]
  %v2599 = vld [vmem:[%s5 + $0xfb8] sm:$0xff]
  %v2600 = vld [vmem:[%s5 + $0xfc0] sm:$0xff]
  %v2601 = vld [vmem:[%s5 + $0xfc8] sm:$0xff]
  %v2602 = vld [vmem:[%s5 + $0xfd0] sm:$0xff]
  %v2603 = vld [vmem:[%s5 + $0xfd8] sm:$0xff]
  %v2604 = vld [vmem:[%s5 + $0xfe0] sm:$0xff]
  %v2605 = vld [vmem:[%s5 + $0xfe8] sm:$0xff]
  %v2606 = vld [vmem:[%s5 + $0xff0] sm:$0xff]
  %v2607 = vld [vmem:[%s5 + $0xff8] sm:$0xff]
  %v2608 = vld [vmem:[%s6] sm:$0xff]
  %v2610 = vlaneseq
  %v2611 = vshrl.u32 %v2610, 7
  %v2612 = vsub.s32 0, %v2611
  %v2613 = vrot.slane %v2608, %v2612
  %v2614 = vlaneseq
  %v2615 = vshrl.u32 %v2614, 7
  %v2616 = vsub.s32 1, %v2615
  %v2617 = vrot.slane %v2608, %v2616
  %v2618 = vlaneseq
  %v2619 = vshrl.u32 %v2618, 7
  %v2620 = vsub.s32 2, %v2619
  %v2621 = vrot.slane %v2608, %v2620
  %v2622 = vlaneseq
  %v2623 = vshrl.u32 %v2622, 7
  %v2624 = vsub.s32 3, %v2623
  %v2625 = vrot.slane %v2608, %v2624
  %v2626 = vlaneseq
  %v2627 = vshrl.u32 %v2626, 7
  %v2628 = vsub.s32 4, %v2627
  %v2629 = vrot.slane %v2608, %v2628
  %v2630 = vlaneseq
  %v2631 = vshrl.u32 %v2630, 7
  %v2632 = vsub.s32 5, %v2631
  %v2633 = vrot.slane %v2608, %v2632
  %v2634 = vlaneseq
  %v2635 = vshrl.u32 %v2634, 7
  %v2636 = vsub.s32 6, %v2635
  %v2637 = vrot.slane %v2608, %v2636
  %v2638 = vlaneseq
  %v2639 = vshrl.u32 %v2638, 7
  %v2640 = vsub.s32 7, %v2639
  %v2641 = vrot.slane %v2608, %v2640
  %v3162 = vunpack.c.l.b16 %v2096
  %v3163 = vunpack.c.h.b16 %v2096
  %v3164 = vunpack.c.l.b16 %v2097
  %v3165 = vunpack.c.h.b16 %v2097
  %v3166 = vunpack.c.l.b16 %v2098
  %v3167 = vunpack.c.h.b16 %v2098
  %v3168 = vunpack.c.l.b16 %v2099
  %v3169 = vunpack.c.h.b16 %v2099
  %v3170 = vunpack.c.l.b16 %v2100
  %v3171 = vunpack.c.h.b16 %v2100
  %v3172 = vunpack.c.l.b16 %v2101
  %v3173 = vunpack.c.h.b16 %v2101
  %v3174 = vunpack.c.l.b16 %v2102
  %v3175 = vunpack.c.h.b16 %v2102
  %v3176 = vunpack.c.l.b16 %v2103
  %v3177 = vunpack.c.h.b16 %v2103
  %v3178 = vunpack.c.l.b16 %v2104
  %v3179 = vunpack.c.h.b16 %v2104
  %v3180 = vunpack.c.l.b16 %v2105
  %v3181 = vunpack.c.h.b16 %v2105
  %v3182 = vunpack.c.l.b16 %v2106
  %v3183 = vunpack.c.h.b16 %v2106
  %v3184 = vunpack.c.l.b16 %v2107
  %v3185 = vunpack.c.h.b16 %v2107
  %v3186 = vunpack.c.l.b16 %v2108
  %v3187 = vunpack.c.h.b16 %v2108
  %v3188 = vunpack.c.l.b16 %v2109
  %v3189 = vunpack.c.h.b16 %v2109
  %v3190 = vunpack.c.l.b16 %v2110
  %v3191 = vunpack.c.h.b16 %v2110
  %v3192 = vunpack.c.l.b16 %v2111
  %v3193 = vunpack.c.h.b16 %v2111
  %v3194 = vunpack.c.l.b16 %v2112
  %v3195 = vunpack.c.h.b16 %v2112
  %v3196 = vunpack.c.l.b16 %v2113
  %v3197 = vunpack.c.h.b16 %v2113
  %v3198 = vunpack.c.l.b16 %v2114
  %v3199 = vunpack.c.h.b16 %v2114
  %v3200 = vunpack.c.l.b16 %v2115
  %v3201 = vunpack.c.h.b16 %v2115
  %v3202 = vunpack.c.l.b16 %v2116
  %v3203 = vunpack.c.h.b16 %v2116
  %v3204 = vunpack.c.l.b16 %v2117
  %v3205 = vunpack.c.h.b16 %v2117
  %v3206 = vunpack.c.l.b16 %v2118
  %v3207 = vunpack.c.h.b16 %v2118
  %v3208 = vunpack.c.l.b16 %v2119
  %v3209 = vunpack.c.h.b16 %v2119
  %v3210 = vunpack.c.l.b16 %v2120
  %v3211 = vunpack.c.h.b16 %v2120
  %v3212 = vunpack.c.l.b16 %v2121
  %v3213 = vunpack.c.h.b16 %v2121
  %v3214 = vunpack.c.l.b16 %v2122
  %v3215 = vunpack.c.h.b16 %v2122
  %v3216 = vunpack.c.l.b16 %v2123
  %v3217 = vunpack.c.h.b16 %v2123
  %v3218 = vunpack.c.l.b16 %v2124
  %v3219 = vunpack.c.h.b16 %v2124
  %v3220 = vunpack.c.l.b16 %v2125
  %v3221 = vunpack.c.h.b16 %v2125
  %v3222 = vunpack.c.l.b16 %v2126
  %v3223 = vunpack.c.h.b16 %v2126
  %v3224 = vunpack.c.l.b16 %v2127
  %v3225 = vunpack.c.h.b16 %v2127
  %v3226 = vunpack.c.l.b16 %v2128
  %v3227 = vunpack.c.h.b16 %v2128
  %v3228 = vunpack.c.l.b16 %v2129
  %v3229 = vunpack.c.h.b16 %v2129
  %v3230 = vunpack.c.l.b16 %v2130
  %v3231 = vunpack.c.h.b16 %v2130
  %v3232 = vunpack.c.l.b16 %v2131
  %v3233 = vunpack.c.h.b16 %v2131
  %v3234 = vunpack.c.l.b16 %v2132
  %v3235 = vunpack.c.h.b16 %v2132
  %v3236 = vunpack.c.l.b16 %v2133
  %v3237 = vunpack.c.h.b16 %v2133
  %v3238 = vunpack.c.l.b16 %v2134
  %v3239 = vunpack.c.h.b16 %v2134
  %v3240 = vunpack.c.l.b16 %v2135
  %v3241 = vunpack.c.h.b16 %v2135
  %v3242 = vunpack.c.l.b16 %v2136
  %v3243 = vunpack.c.h.b16 %v2136
  %v3244 = vunpack.c.l.b16 %v2137
  %v3245 = vunpack.c.h.b16 %v2137
  %v3246 = vunpack.c.l.b16 %v2138
  %v3247 = vunpack.c.h.b16 %v2138
  %v3248 = vunpack.c.l.b16 %v2139
  %v3249 = vunpack.c.h.b16 %v2139
  %v3250 = vunpack.c.l.b16 %v2140
  %v3251 = vunpack.c.h.b16 %v2140
  %v3252 = vunpack.c.l.b16 %v2141
  %v3253 = vunpack.c.h.b16 %v2141
  %v3254 = vunpack.c.l.b16 %v2142
  %v3255 = vunpack.c.h.b16 %v2142
  %v3256 = vunpack.c.l.b16 %v2143
  %v3257 = vunpack.c.h.b16 %v2143
  %v3258 = vunpack.c.l.b16 %v2144
  %v3259 = vunpack.c.h.b16 %v2144
  %v3260 = vunpack.c.l.b16 %v2145
  %v3261 = vunpack.c.h.b16 %v2145
  %v3262 = vunpack.c.l.b16 %v2146
  %v3263 = vunpack.c.h.b16 %v2146
  %v3264 = vunpack.c.l.b16 %v2147
  %v3265 = vunpack.c.h.b16 %v2147
  %v3266 = vunpack.c.l.b16 %v2148
  %v3267 = vunpack.c.h.b16 %v2148
  %v3268 = vunpack.c.l.b16 %v2149
  %v3269 = vunpack.c.h.b16 %v2149
  %v3270 = vunpack.c.l.b16 %v2150
  %v3271 = vunpack.c.h.b16 %v2150
  %v3272 = vunpack.c.l.b16 %v2151
  %v3273 = vunpack.c.h.b16 %v2151
  %v3274 = vunpack.c.l.b16 %v2152
  %v3275 = vunpack.c.h.b16 %v2152
  %v3276 = vunpack.c.l.b16 %v2153
  %v3277 = vunpack.c.h.b16 %v2153
  %v3278 = vunpack.c.l.b16 %v2154
  %v3279 = vunpack.c.h.b16 %v2154
  %v3280 = vunpack.c.l.b16 %v2155
  %v3281 = vunpack.c.h.b16 %v2155
  %v3282 = vunpack.c.l.b16 %v2156
  %v3283 = vunpack.c.h.b16 %v2156
  %v3284 = vunpack.c.l.b16 %v2157
  %v3285 = vunpack.c.h.b16 %v2157
  %v3286 = vunpack.c.l.b16 %v2158
  %v3287 = vunpack.c.h.b16 %v2158
  %v3288 = vunpack.c.l.b16 %v2159
  %v3289 = vunpack.c.h.b16 %v2159
  %v3290 = vunpack.c.l.b16 %v2160
  %v3291 = vunpack.c.h.b16 %v2160
  %v3292 = vunpack.c.l.b16 %v2161
  %v3293 = vunpack.c.h.b16 %v2161
  %v3294 = vunpack.c.l.b16 %v2162
  %v3295 = vunpack.c.h.b16 %v2162
  %v3296 = vunpack.c.l.b16 %v2163
  %v3297 = vunpack.c.h.b16 %v2163
  %v3298 = vunpack.c.l.b16 %v2164
  %v3299 = vunpack.c.h.b16 %v2164
  %v3300 = vunpack.c.l.b16 %v2165
  %v3301 = vunpack.c.h.b16 %v2165
  %v3302 = vunpack.c.l.b16 %v2166
  %v3303 = vunpack.c.h.b16 %v2166
  %v3304 = vunpack.c.l.b16 %v2167
  %v3305 = vunpack.c.h.b16 %v2167
  %v3306 = vunpack.c.l.b16 %v2168
  %v3307 = vunpack.c.h.b16 %v2168
  %v3308 = vunpack.c.l.b16 %v2169
  %v3309 = vunpack.c.h.b16 %v2169
  %v3310 = vunpack.c.l.b16 %v2170
  %v3311 = vunpack.c.h.b16 %v2170
  %v3312 = vunpack.c.l.b16 %v2171
  %v3313 = vunpack.c.h.b16 %v2171
  %v3314 = vunpack.c.l.b16 %v2172
  %v3315 = vunpack.c.h.b16 %v2172
  %v3316 = vunpack.c.l.b16 %v2173
  %v3317 = vunpack.c.h.b16 %v2173
  %v3318 = vunpack.c.l.b16 %v2174
  %v3319 = vunpack.c.h.b16 %v2174
  %v3320 = vunpack.c.l.b16 %v2175
  %v3321 = vunpack.c.h.b16 %v2175
  %v3322 = vunpack.c.l.b16 %v2176
  %v3323 = vunpack.c.h.b16 %v2176
  %v3324 = vunpack.c.l.b16 %v2177
  %v3325 = vunpack.c.h.b16 %v2177
  %v3326 = vunpack.c.l.b16 %v2178
  %v3327 = vunpack.c.h.b16 %v2178
  %v3328 = vunpack.c.l.b16 %v2179
  %v3329 = vunpack.c.h.b16 %v2179
  %v3330 = vunpack.c.l.b16 %v2180
  %v3331 = vunpack.c.h.b16 %v2180
  %v3332 = vunpack.c.l.b16 %v2181
  %v3333 = vunpack.c.h.b16 %v2181
  %v3334 = vunpack.c.l.b16 %v2182
  %v3335 = vunpack.c.h.b16 %v2182
  %v3336 = vunpack.c.l.b16 %v2183
  %v3337 = vunpack.c.h.b16 %v2183
  %v3338 = vunpack.c.l.b16 %v2184
  %v3339 = vunpack.c.h.b16 %v2184
  %v3340 = vunpack.c.l.b16 %v2185
  %v3341 = vunpack.c.h.b16 %v2185
  %v3342 = vunpack.c.l.b16 %v2186
  %v3343 = vunpack.c.h.b16 %v2186
  %v3344 = vunpack.c.l.b16 %v2187
  %v3345 = vunpack.c.h.b16 %v2187
  %v3346 = vunpack.c.l.b16 %v2188
  %v3347 = vunpack.c.h.b16 %v2188
  %v3348 = vunpack.c.l.b16 %v2189
  %v3349 = vunpack.c.h.b16 %v2189
  %v3350 = vunpack.c.l.b16 %v2190
  %v3351 = vunpack.c.h.b16 %v2190
  %v3352 = vunpack.c.l.b16 %v2191
  %v3353 = vunpack.c.h.b16 %v2191
  %v3354 = vunpack.c.l.b16 %v2192
  %v3355 = vunpack.c.h.b16 %v2192
  %v3356 = vunpack.c.l.b16 %v2193
  %v3357 = vunpack.c.h.b16 %v2193
  %v3358 = vunpack.c.l.b16 %v2194
  %v3359 = vunpack.c.h.b16 %v2194
  %v3360 = vunpack.c.l.b16 %v2195
  %v3361 = vunpack.c.h.b16 %v2195
  %v3362 = vunpack.c.l.b16 %v2196
  %v3363 = vunpack.c.h.b16 %v2196
  %v3364 = vunpack.c.l.b16 %v2197
  %v3365 = vunpack.c.h.b16 %v2197
  %v3366 = vunpack.c.l.b16 %v2198
  %v3367 = vunpack.c.h.b16 %v2198
  %v3368 = vunpack.c.l.b16 %v2199
  %v3369 = vunpack.c.h.b16 %v2199
  %v3370 = vunpack.c.l.b16 %v2200
  %v3371 = vunpack.c.h.b16 %v2200
  %v3372 = vunpack.c.l.b16 %v2201
  %v3373 = vunpack.c.h.b16 %v2201
  %v3374 = vunpack.c.l.b16 %v2202
  %v3375 = vunpack.c.h.b16 %v2202
  %v3376 = vunpack.c.l.b16 %v2203
  %v3377 = vunpack.c.h.b16 %v2203
  %v3378 = vunpack.c.l.b16 %v2204
  %v3379 = vunpack.c.h.b16 %v2204
  %v3380 = vunpack.c.l.b16 %v2205
  %v3381 = vunpack.c.h.b16 %v2205
  %v3382 = vunpack.c.l.b16 %v2206
  %v3383 = vunpack.c.h.b16 %v2206
  %v3384 = vunpack.c.l.b16 %v2207
  %v3385 = vunpack.c.h.b16 %v2207
  %v3386 = vunpack.c.l.b16 %v2208
  %v3387 = vunpack.c.h.b16 %v2208
  %v3388 = vunpack.c.l.b16 %v2209
  %v3389 = vunpack.c.h.b16 %v2209
  %v3390 = vunpack.c.l.b16 %v2210
  %v3391 = vunpack.c.h.b16 %v2210
  %v3392 = vunpack.c.l.b16 %v2211
  %v3393 = vunpack.c.h.b16 %v2211
  %v3394 = vunpack.c.l.b16 %v2212
  %v3395 = vunpack.c.h.b16 %v2212
  %v3396 = vunpack.c.l.b16 %v2213
  %v3397 = vunpack.c.h.b16 %v2213
  %v3398 = vunpack.c.l.b16 %v2214
  %v3399 = vunpack.c.h.b16 %v2214
  %v3400 = vunpack.c.l.b16 %v2215
  %v3401 = vunpack.c.h.b16 %v2215
  %v3402 = vunpack.c.l.b16 %v2216
  %v3403 = vunpack.c.h.b16 %v2216
  %v3404 = vunpack.c.l.b16 %v2217
  %v3405 = vunpack.c.h.b16 %v2217
  %v3406 = vunpack.c.l.b16 %v2218
  %v3407 = vunpack.c.h.b16 %v2218
  %v3408 = vunpack.c.l.b16 %v2219
  %v3409 = vunpack.c.h.b16 %v2219
  %v3410 = vunpack.c.l.b16 %v2220
  %v3411 = vunpack.c.h.b16 %v2220
  %v3412 = vunpack.c.l.b16 %v2221
  %v3413 = vunpack.c.h.b16 %v2221
  %v3414 = vunpack.c.l.b16 %v2222
  %v3415 = vunpack.c.h.b16 %v2222
  %v3416 = vunpack.c.l.b16 %v2223
  %v3417 = vunpack.c.h.b16 %v2223
  %v3418 = vunpack.c.l.b16 %v2224
  %v3419 = vunpack.c.h.b16 %v2224
  %v3420 = vunpack.c.l.b16 %v2225
  %v3421 = vunpack.c.h.b16 %v2225
  %v3422 = vunpack.c.l.b16 %v2226
  %v3423 = vunpack.c.h.b16 %v2226
  %v3424 = vunpack.c.l.b16 %v2227
  %v3425 = vunpack.c.h.b16 %v2227
  %v3426 = vunpack.c.l.b16 %v2228
  %v3427 = vunpack.c.h.b16 %v2228
  %v3428 = vunpack.c.l.b16 %v2229
  %v3429 = vunpack.c.h.b16 %v2229
  %v3430 = vunpack.c.l.b16 %v2230
  %v3431 = vunpack.c.h.b16 %v2230
  %v3432 = vunpack.c.l.b16 %v2231
  %v3433 = vunpack.c.h.b16 %v2231
  %v3434 = vunpack.c.l.b16 %v2232
  %v3435 = vunpack.c.h.b16 %v2232
  %v3436 = vunpack.c.l.b16 %v2233
  %v3437 = vunpack.c.h.b16 %v2233
  %v3438 = vunpack.c.l.b16 %v2234
  %v3439 = vunpack.c.h.b16 %v2234
  %v3440 = vunpack.c.l.b16 %v2235
  %v3441 = vunpack.c.h.b16 %v2235
  %v3442 = vunpack.c.l.b16 %v2236
  %v3443 = vunpack.c.h.b16 %v2236
  %v3444 = vunpack.c.l.b16 %v2237
  %v3445 = vunpack.c.h.b16 %v2237
  %v3446 = vunpack.c.l.b16 %v2238
  %v3447 = vunpack.c.h.b16 %v2238
  %v3448 = vunpack.c.l.b16 %v2239
  %v3449 = vunpack.c.h.b16 %v2239
  %v3450 = vunpack.c.l.b16 %v2240
  %v3451 = vunpack.c.h.b16 %v2240
  %v3452 = vunpack.c.l.b16 %v2241
  %v3453 = vunpack.c.h.b16 %v2241
  %v3454 = vunpack.c.l.b16 %v2242
  %v3455 = vunpack.c.h.b16 %v2242
  %v3456 = vunpack.c.l.b16 %v2243
  %v3457 = vunpack.c.h.b16 %v2243
  %v3458 = vunpack.c.l.b16 %v2244
  %v3459 = vunpack.c.h.b16 %v2244
  %v3460 = vunpack.c.l.b16 %v2245
  %v3461 = vunpack.c.h.b16 %v2245
  %v3462 = vunpack.c.l.b16 %v2246
  %v3463 = vunpack.c.h.b16 %v2246
  %v3464 = vunpack.c.l.b16 %v2247
  %v3465 = vunpack.c.h.b16 %v2247
  %v3466 = vunpack.c.l.b16 %v2248
  %v3467 = vunpack.c.h.b16 %v2248
  %v3468 = vunpack.c.l.b16 %v2249
  %v3469 = vunpack.c.h.b16 %v2249
  %v3470 = vunpack.c.l.b16 %v2250
  %v3471 = vunpack.c.h.b16 %v2250
  %v3472 = vunpack.c.l.b16 %v2251
  %v3473 = vunpack.c.h.b16 %v2251
  %v3474 = vunpack.c.l.b16 %v2252
  %v3475 = vunpack.c.h.b16 %v2252
  %v3476 = vunpack.c.l.b16 %v2253
  %v3477 = vunpack.c.h.b16 %v2253
  %v3478 = vunpack.c.l.b16 %v2254
  %v3479 = vunpack.c.h.b16 %v2254
  %v3480 = vunpack.c.l.b16 %v2255
  %v3481 = vunpack.c.h.b16 %v2255
  %v3482 = vunpack.c.l.b16 %v2256
  %v3483 = vunpack.c.h.b16 %v2256
  %v3484 = vunpack.c.l.b16 %v2257
  %v3485 = vunpack.c.h.b16 %v2257
  %v3486 = vunpack.c.l.b16 %v2258
  %v3487 = vunpack.c.h.b16 %v2258
  %v3488 = vunpack.c.l.b16 %v2259
  %v3489 = vunpack.c.h.b16 %v2259
  %v3490 = vunpack.c.l.b16 %v2260
  %v3491 = vunpack.c.h.b16 %v2260
  %v3492 = vunpack.c.l.b16 %v2261
  %v3493 = vunpack.c.h.b16 %v2261
  %v3494 = vunpack.c.l.b16 %v2262
  %v3495 = vunpack.c.h.b16 %v2262
  %v3496 = vunpack.c.l.b16 %v2263
  %v3497 = vunpack.c.h.b16 %v2263
  %v3498 = vunpack.c.l.b16 %v2264
  %v3499 = vunpack.c.h.b16 %v2264
  %v3500 = vunpack.c.l.b16 %v2265
  %v3501 = vunpack.c.h.b16 %v2265
  %v3502 = vunpack.c.l.b16 %v2266
  %v3503 = vunpack.c.h.b16 %v2266
  %v3504 = vunpack.c.l.b16 %v2267
  %v3505 = vunpack.c.h.b16 %v2267
  %v3506 = vunpack.c.l.b16 %v2268
  %v3507 = vunpack.c.h.b16 %v2268
  %v3508 = vunpack.c.l.b16 %v2269
  %v3509 = vunpack.c.h.b16 %v2269
  %v3510 = vunpack.c.l.b16 %v2270
  %v3511 = vunpack.c.h.b16 %v2270
  %v3512 = vunpack.c.l.b16 %v2271
  %v3513 = vunpack.c.h.b16 %v2271
  %v3514 = vunpack.c.l.b16 %v2272
  %v3515 = vunpack.c.h.b16 %v2272
  %v3516 = vunpack.c.l.b16 %v2273
  %v3517 = vunpack.c.h.b16 %v2273
  %v3518 = vunpack.c.l.b16 %v2274
  %v3519 = vunpack.c.h.b16 %v2274
  %v3520 = vunpack.c.l.b16 %v2275
  %v3521 = vunpack.c.h.b16 %v2275
  %v3522 = vunpack.c.l.b16 %v2276
  %v3523 = vunpack.c.h.b16 %v2276
  %v3524 = vunpack.c.l.b16 %v2277
  %v3525 = vunpack.c.h.b16 %v2277
  %v3526 = vunpack.c.l.b16 %v2278
  %v3527 = vunpack.c.h.b16 %v2278
  %v3528 = vunpack.c.l.b16 %v2279
  %v3529 = vunpack.c.h.b16 %v2279
  %v3530 = vunpack.c.l.b16 %v2280
  %v3531 = vunpack.c.h.b16 %v2280
  %v3532 = vunpack.c.l.b16 %v2281
  %v3533 = vunpack.c.h.b16 %v2281
  %v3534 = vunpack.c.l.b16 %v2282
  %v3535 = vunpack.c.h.b16 %v2282
  %v3536 = vunpack.c.l.b16 %v2283
  %v3537 = vunpack.c.h.b16 %v2283
  %v3538 = vunpack.c.l.b16 %v2284
  %v3539 = vunpack.c.h.b16 %v2284
  %v3540 = vunpack.c.l.b16 %v2285
  %v3541 = vunpack.c.h.b16 %v2285
  %v3542 = vunpack.c.l.b16 %v2286
  %v3543 = vunpack.c.h.b16 %v2286
  %v3544 = vunpack.c.l.b16 %v2287
  %v3545 = vunpack.c.h.b16 %v2287
  %v3546 = vunpack.c.l.b16 %v2288
  %v3547 = vunpack.c.h.b16 %v2288
  %v3548 = vunpack.c.l.b16 %v2289
  %v3549 = vunpack.c.h.b16 %v2289
  %v3550 = vunpack.c.l.b16 %v2290
  %v3551 = vunpack.c.h.b16 %v2290
  %v3552 = vunpack.c.l.b16 %v2291
  %v3553 = vunpack.c.h.b16 %v2291
  %v3554 = vunpack.c.l.b16 %v2292
  %v3555 = vunpack.c.h.b16 %v2292
  %v3556 = vunpack.c.l.b16 %v2293
  %v3557 = vunpack.c.h.b16 %v2293
  %v3558 = vunpack.c.l.b16 %v2294
  %v3559 = vunpack.c.h.b16 %v2294
  %v3560 = vunpack.c.l.b16 %v2295
  %v3561 = vunpack.c.h.b16 %v2295
  %v3562 = vunpack.c.l.b16 %v2296
  %v3563 = vunpack.c.h.b16 %v2296
  %v3564 = vunpack.c.l.b16 %v2297
  %v3565 = vunpack.c.h.b16 %v2297
  %v3566 = vunpack.c.l.b16 %v2298
  %v3567 = vunpack.c.h.b16 %v2298
  %v3568 = vunpack.c.l.b16 %v2299
  %v3569 = vunpack.c.h.b16 %v2299
  %v3570 = vunpack.c.l.b16 %v2300
  %v3571 = vunpack.c.h.b16 %v2300
  %v3572 = vunpack.c.l.b16 %v2301
  %v3573 = vunpack.c.h.b16 %v2301
  %v3574 = vunpack.c.l.b16 %v2302
  %v3575 = vunpack.c.h.b16 %v2302
  %v3576 = vunpack.c.l.b16 %v2303
  %v3577 = vunpack.c.h.b16 %v2303
  %v3578 = vunpack.c.l.b16 %v2304
  %v3579 = vunpack.c.h.b16 %v2304
  %v3580 = vunpack.c.l.b16 %v2305
  %v3581 = vunpack.c.h.b16 %v2305
  %v3582 = vunpack.c.l.b16 %v2306
  %v3583 = vunpack.c.h.b16 %v2306
  %v3584 = vunpack.c.l.b16 %v2307
  %v3585 = vunpack.c.h.b16 %v2307
  %v3586 = vunpack.c.l.b16 %v2308
  %v3587 = vunpack.c.h.b16 %v2308
  %v3588 = vunpack.c.l.b16 %v2309
  %v3589 = vunpack.c.h.b16 %v2309
  %v3590 = vunpack.c.l.b16 %v2310
  %v3591 = vunpack.c.h.b16 %v2310
  %v3592 = vunpack.c.l.b16 %v2311
  %v3593 = vunpack.c.h.b16 %v2311
  %v3594 = vunpack.c.l.b16 %v2312
  %v3595 = vunpack.c.h.b16 %v2312
  %v3596 = vunpack.c.l.b16 %v2313
  %v3597 = vunpack.c.h.b16 %v2313
  %v3598 = vunpack.c.l.b16 %v2314
  %v3599 = vunpack.c.h.b16 %v2314
  %v3600 = vunpack.c.l.b16 %v2315
  %v3601 = vunpack.c.h.b16 %v2315
  %v3602 = vunpack.c.l.b16 %v2316
  %v3603 = vunpack.c.h.b16 %v2316
  %v3604 = vunpack.c.l.b16 %v2317
  %v3605 = vunpack.c.h.b16 %v2317
  %v3606 = vunpack.c.l.b16 %v2318
  %v3607 = vunpack.c.h.b16 %v2318
  %v3608 = vunpack.c.l.b16 %v2319
  %v3609 = vunpack.c.h.b16 %v2319
  %v3610 = vunpack.c.l.b16 %v2320
  %v3611 = vunpack.c.h.b16 %v2320
  %v3612 = vunpack.c.l.b16 %v2321
  %v3613 = vunpack.c.h.b16 %v2321
  %v3614 = vunpack.c.l.b16 %v2322
  %v3615 = vunpack.c.h.b16 %v2322
  %v3616 = vunpack.c.l.b16 %v2323
  %v3617 = vunpack.c.h.b16 %v2323
  %v3618 = vunpack.c.l.b16 %v2324
  %v3619 = vunpack.c.h.b16 %v2324
  %v3620 = vunpack.c.l.b16 %v2325
  %v3621 = vunpack.c.h.b16 %v2325
  %v3622 = vunpack.c.l.b16 %v2326
  %v3623 = vunpack.c.h.b16 %v2326
  %v3624 = vunpack.c.l.b16 %v2327
  %v3625 = vunpack.c.h.b16 %v2327
  %v3626 = vunpack.c.l.b16 %v2328
  %v3627 = vunpack.c.h.b16 %v2328
  %v3628 = vunpack.c.l.b16 %v2329
  %v3629 = vunpack.c.h.b16 %v2329
  %v3630 = vunpack.c.l.b16 %v2330
  %v3631 = vunpack.c.h.b16 %v2330
  %v3632 = vunpack.c.l.b16 %v2331
  %v3633 = vunpack.c.h.b16 %v2331
  %v3634 = vunpack.c.l.b16 %v2332
  %v3635 = vunpack.c.h.b16 %v2332
  %v3636 = vunpack.c.l.b16 %v2333
  %v3637 = vunpack.c.h.b16 %v2333
  %v3638 = vunpack.c.l.b16 %v2334
  %v3639 = vunpack.c.h.b16 %v2334
  %v3640 = vunpack.c.l.b16 %v2335
  %v3641 = vunpack.c.h.b16 %v2335
  %v3642 = vunpack.c.l.b16 %v2336
  %v3643 = vunpack.c.h.b16 %v2336
  %v3644 = vunpack.c.l.b16 %v2337
  %v3645 = vunpack.c.h.b16 %v2337
  %v3646 = vunpack.c.l.b16 %v2338
  %v3647 = vunpack.c.h.b16 %v2338
  %v3648 = vunpack.c.l.b16 %v2339
  %v3649 = vunpack.c.h.b16 %v2339
  %v3650 = vunpack.c.l.b16 %v2340
  %v3651 = vunpack.c.h.b16 %v2340
  %v3652 = vunpack.c.l.b16 %v2341
  %v3653 = vunpack.c.h.b16 %v2341
  %v3654 = vunpack.c.l.b16 %v2342
  %v3655 = vunpack.c.h.b16 %v2342
  %v3656 = vunpack.c.l.b16 %v2343
  %v3657 = vunpack.c.h.b16 %v2343
  %v3658 = vunpack.c.l.b16 %v2344
  %v3659 = vunpack.c.h.b16 %v2344
  %v3660 = vunpack.c.l.b16 %v2345
  %v3661 = vunpack.c.h.b16 %v2345
  %v3662 = vunpack.c.l.b16 %v2346
  %v3663 = vunpack.c.h.b16 %v2346
  %v3664 = vunpack.c.l.b16 %v2347
  %v3665 = vunpack.c.h.b16 %v2347
  %v3666 = vunpack.c.l.b16 %v2348
  %v3667 = vunpack.c.h.b16 %v2348
  %v3668 = vunpack.c.l.b16 %v2349
  %v3669 = vunpack.c.h.b16 %v2349
  %v3670 = vunpack.c.l.b16 %v2350
  %v3671 = vunpack.c.h.b16 %v2350
  %v3672 = vunpack.c.l.b16 %v2351
  %v3673 = vunpack.c.h.b16 %v2351
  %v3674 = vunpack.c.l.b16 %v2352
  %v3675 = vunpack.c.h.b16 %v2352
  %v3676 = vunpack.c.l.b16 %v2353
  %v3677 = vunpack.c.h.b16 %v2353
  %v3678 = vunpack.c.l.b16 %v2354
  %v3679 = vunpack.c.h.b16 %v2354
  %v3680 = vunpack.c.l.b16 %v2355
  %v3681 = vunpack.c.h.b16 %v2355
  %v3682 = vunpack.c.l.b16 %v2356
  %v3683 = vunpack.c.h.b16 %v2356
  %v3684 = vunpack.c.l.b16 %v2357
  %v3685 = vunpack.c.h.b16 %v2357
  %v3686 = vunpack.c.l.b16 %v2358
  %v3687 = vunpack.c.h.b16 %v2358
  %v3688 = vunpack.c.l.b16 %v2359
  %v3689 = vunpack.c.h.b16 %v2359
  %v3690 = vunpack.c.l.b16 %v2360
  %v3691 = vunpack.c.h.b16 %v2360
  %v3692 = vunpack.c.l.b16 %v2361
  %v3693 = vunpack.c.h.b16 %v2361
  %v3694 = vunpack.c.l.b16 %v2362
  %v3695 = vunpack.c.h.b16 %v2362
  %v3696 = vunpack.c.l.b16 %v2363
  %v3697 = vunpack.c.h.b16 %v2363
  %v3698 = vunpack.c.l.b16 %v2364
  %v3699 = vunpack.c.h.b16 %v2364
  %v3700 = vunpack.c.l.b16 %v2365
  %v3701 = vunpack.c.h.b16 %v2365
  %v3702 = vunpack.c.l.b16 %v2366
  %v3703 = vunpack.c.h.b16 %v2366
  %v3704 = vunpack.c.l.b16 %v2367
  %v3705 = vunpack.c.h.b16 %v2367
  %v3706 = vunpack.c.l.b16 %v2368
  %v3707 = vunpack.c.h.b16 %v2368
  %v3708 = vunpack.c.l.b16 %v2369
  %v3709 = vunpack.c.h.b16 %v2369
  %v3710 = vunpack.c.l.b16 %v2370
  %v3711 = vunpack.c.h.b16 %v2370
  %v3712 = vunpack.c.l.b16 %v2371
  %v3713 = vunpack.c.h.b16 %v2371
  %v3714 = vunpack.c.l.b16 %v2372
  %v3715 = vunpack.c.h.b16 %v2372
  %v3716 = vunpack.c.l.b16 %v2373
  %v3717 = vunpack.c.h.b16 %v2373
  %v3718 = vunpack.c.l.b16 %v2374
  %v3719 = vunpack.c.h.b16 %v2374
  %v3720 = vunpack.c.l.b16 %v2375
  %v3721 = vunpack.c.h.b16 %v2375
  %v3722 = vunpack.c.l.b16 %v2376
  %v3723 = vunpack.c.h.b16 %v2376
  %v3724 = vunpack.c.l.b16 %v2377
  %v3725 = vunpack.c.h.b16 %v2377
  %v3726 = vunpack.c.l.b16 %v2378
  %v3727 = vunpack.c.h.b16 %v2378
  %v3728 = vunpack.c.l.b16 %v2379
  %v3729 = vunpack.c.h.b16 %v2379
  %v3730 = vunpack.c.l.b16 %v2380
  %v3731 = vunpack.c.h.b16 %v2380
  %v3732 = vunpack.c.l.b16 %v2381
  %v3733 = vunpack.c.h.b16 %v2381
  %v3734 = vunpack.c.l.b16 %v2382
  %v3735 = vunpack.c.h.b16 %v2382
  %v3736 = vunpack.c.l.b16 %v2383
  %v3737 = vunpack.c.h.b16 %v2383
  %v3738 = vunpack.c.l.b16 %v2384
  %v3739 = vunpack.c.h.b16 %v2384
  %v3740 = vunpack.c.l.b16 %v2385
  %v3741 = vunpack.c.h.b16 %v2385
  %v3742 = vunpack.c.l.b16 %v2386
  %v3743 = vunpack.c.h.b16 %v2386
  %v3744 = vunpack.c.l.b16 %v2387
  %v3745 = vunpack.c.h.b16 %v2387
  %v3746 = vunpack.c.l.b16 %v2388
  %v3747 = vunpack.c.h.b16 %v2388
  %v3748 = vunpack.c.l.b16 %v2389
  %v3749 = vunpack.c.h.b16 %v2389
  %v3750 = vunpack.c.l.b16 %v2390
  %v3751 = vunpack.c.h.b16 %v2390
  %v3752 = vunpack.c.l.b16 %v2391
  %v3753 = vunpack.c.h.b16 %v2391
  %v3754 = vunpack.c.l.b16 %v2392
  %v3755 = vunpack.c.h.b16 %v2392
  %v3756 = vunpack.c.l.b16 %v2393
  %v3757 = vunpack.c.h.b16 %v2393
  %v3758 = vunpack.c.l.b16 %v2394
  %v3759 = vunpack.c.h.b16 %v2394
  %v3760 = vunpack.c.l.b16 %v2395
  %v3761 = vunpack.c.h.b16 %v2395
  %v3762 = vunpack.c.l.b16 %v2396
  %v3763 = vunpack.c.h.b16 %v2396
  %v3764 = vunpack.c.l.b16 %v2397
  %v3765 = vunpack.c.h.b16 %v2397
  %v3766 = vunpack.c.l.b16 %v2398
  %v3767 = vunpack.c.h.b16 %v2398
  %v3768 = vunpack.c.l.b16 %v2399
  %v3769 = vunpack.c.h.b16 %v2399
  %v3770 = vunpack.c.l.b16 %v2400
  %v3771 = vunpack.c.h.b16 %v2400
  %v3772 = vunpack.c.l.b16 %v2401
  %v3773 = vunpack.c.h.b16 %v2401
  %v3774 = vunpack.c.l.b16 %v2402
  %v3775 = vunpack.c.h.b16 %v2402
  %v3776 = vunpack.c.l.b16 %v2403
  %v3777 = vunpack.c.h.b16 %v2403
  %v3778 = vunpack.c.l.b16 %v2404
  %v3779 = vunpack.c.h.b16 %v2404
  %v3780 = vunpack.c.l.b16 %v2405
  %v3781 = vunpack.c.h.b16 %v2405
  %v3782 = vunpack.c.l.b16 %v2406
  %v3783 = vunpack.c.h.b16 %v2406
  %v3784 = vunpack.c.l.b16 %v2407
  %v3785 = vunpack.c.h.b16 %v2407
  %v3786 = vunpack.c.l.b16 %v2408
  %v3787 = vunpack.c.h.b16 %v2408
  %v3788 = vunpack.c.l.b16 %v2409
  %v3789 = vunpack.c.h.b16 %v2409
  %v3790 = vunpack.c.l.b16 %v2410
  %v3791 = vunpack.c.h.b16 %v2410
  %v3792 = vunpack.c.l.b16 %v2411
  %v3793 = vunpack.c.h.b16 %v2411
  %v3794 = vunpack.c.l.b16 %v2412
  %v3795 = vunpack.c.h.b16 %v2412
  %v3796 = vunpack.c.l.b16 %v2413
  %v3797 = vunpack.c.h.b16 %v2413
  %v3798 = vunpack.c.l.b16 %v2414
  %v3799 = vunpack.c.h.b16 %v2414
  %v3800 = vunpack.c.l.b16 %v2415
  %v3801 = vunpack.c.h.b16 %v2415
  %v3802 = vunpack.c.l.b16 %v2416
  %v3803 = vunpack.c.h.b16 %v2416
  %v3804 = vunpack.c.l.b16 %v2417
  %v3805 = vunpack.c.h.b16 %v2417
  %v3806 = vunpack.c.l.b16 %v2418
  %v3807 = vunpack.c.h.b16 %v2418
  %v3808 = vunpack.c.l.b16 %v2419
  %v3809 = vunpack.c.h.b16 %v2419
  %v3810 = vunpack.c.l.b16 %v2420
  %v3811 = vunpack.c.h.b16 %v2420
  %v3812 = vunpack.c.l.b16 %v2421
  %v3813 = vunpack.c.h.b16 %v2421
  %v3814 = vunpack.c.l.b16 %v2422
  %v3815 = vunpack.c.h.b16 %v2422
  %v3816 = vunpack.c.l.b16 %v2423
  %v3817 = vunpack.c.h.b16 %v2423
  %v3818 = vunpack.c.l.b16 %v2424
  %v3819 = vunpack.c.h.b16 %v2424
  %v3820 = vunpack.c.l.b16 %v2425
  %v3821 = vunpack.c.h.b16 %v2425
  %v3822 = vunpack.c.l.b16 %v2426
  %v3823 = vunpack.c.h.b16 %v2426
  %v3824 = vunpack.c.l.b16 %v2427
  %v3825 = vunpack.c.h.b16 %v2427
  %v3826 = vunpack.c.l.b16 %v2428
  %v3827 = vunpack.c.h.b16 %v2428
  %v3828 = vunpack.c.l.b16 %v2429
  %v3829 = vunpack.c.h.b16 %v2429
  %v3830 = vunpack.c.l.b16 %v2430
  %v3831 = vunpack.c.h.b16 %v2430
  %v3832 = vunpack.c.l.b16 %v2431
  %v3833 = vunpack.c.h.b16 %v2431
  %v3834 = vunpack.c.l.b16 %v2432
  %v3835 = vunpack.c.h.b16 %v2432
  %v3836 = vunpack.c.l.b16 %v2433
  %v3837 = vunpack.c.h.b16 %v2433
  %v3838 = vunpack.c.l.b16 %v2434
  %v3839 = vunpack.c.h.b16 %v2434
  %v3840 = vunpack.c.l.b16 %v2435
  %v3841 = vunpack.c.h.b16 %v2435
  %v3842 = vunpack.c.l.b16 %v2436
  %v3843 = vunpack.c.h.b16 %v2436
  %v3844 = vunpack.c.l.b16 %v2437
  %v3845 = vunpack.c.h.b16 %v2437
  %v3846 = vunpack.c.l.b16 %v2438
  %v3847 = vunpack.c.h.b16 %v2438
  %v3848 = vunpack.c.l.b16 %v2439
  %v3849 = vunpack.c.h.b16 %v2439
  %v3850 = vunpack.c.l.b16 %v2440
  %v3851 = vunpack.c.h.b16 %v2440
  %v3852 = vunpack.c.l.b16 %v2441
  %v3853 = vunpack.c.h.b16 %v2441
  %v3854 = vunpack.c.l.b16 %v2442
  %v3855 = vunpack.c.h.b16 %v2442
  %v3856 = vunpack.c.l.b16 %v2443
  %v3857 = vunpack.c.h.b16 %v2443
  %v3858 = vunpack.c.l.b16 %v2444
  %v3859 = vunpack.c.h.b16 %v2444
  %v3860 = vunpack.c.l.b16 %v2445
  %v3861 = vunpack.c.h.b16 %v2445
  %v3862 = vunpack.c.l.b16 %v2446
  %v3863 = vunpack.c.h.b16 %v2446
  %v3864 = vunpack.c.l.b16 %v2447
  %v3865 = vunpack.c.h.b16 %v2447
  %v3866 = vunpack.c.l.b16 %v2448
  %v3867 = vunpack.c.h.b16 %v2448
  %v3868 = vunpack.c.l.b16 %v2449
  %v3869 = vunpack.c.h.b16 %v2449
  %v3870 = vunpack.c.l.b16 %v2450
  %v3871 = vunpack.c.h.b16 %v2450
  %v3872 = vunpack.c.l.b16 %v2451
  %v3873 = vunpack.c.h.b16 %v2451
  %v3874 = vunpack.c.l.b16 %v2452
  %v3875 = vunpack.c.h.b16 %v2452
  %v3876 = vunpack.c.l.b16 %v2453
  %v3877 = vunpack.c.h.b16 %v2453
  %v3878 = vunpack.c.l.b16 %v2454
  %v3879 = vunpack.c.h.b16 %v2454
  %v3880 = vunpack.c.l.b16 %v2455
  %v3881 = vunpack.c.h.b16 %v2455
  %v3882 = vunpack.c.l.b16 %v2456
  %v3883 = vunpack.c.h.b16 %v2456
  %v3884 = vunpack.c.l.b16 %v2457
  %v3885 = vunpack.c.h.b16 %v2457
  %v3886 = vunpack.c.l.b16 %v2458
  %v3887 = vunpack.c.h.b16 %v2458
  %v3888 = vunpack.c.l.b16 %v2459
  %v3889 = vunpack.c.h.b16 %v2459
  %v3890 = vunpack.c.l.b16 %v2460
  %v3891 = vunpack.c.h.b16 %v2460
  %v3892 = vunpack.c.l.b16 %v2461
  %v3893 = vunpack.c.h.b16 %v2461
  %v3894 = vunpack.c.l.b16 %v2462
  %v3895 = vunpack.c.h.b16 %v2462
  %v3896 = vunpack.c.l.b16 %v2463
  %v3897 = vunpack.c.h.b16 %v2463
  %v3898 = vunpack.c.l.b16 %v2464
  %v3899 = vunpack.c.h.b16 %v2464
  %v3900 = vunpack.c.l.b16 %v2465
  %v3901 = vunpack.c.h.b16 %v2465
  %v3902 = vunpack.c.l.b16 %v2466
  %v3903 = vunpack.c.h.b16 %v2466
  %v3904 = vunpack.c.l.b16 %v2467
  %v3905 = vunpack.c.h.b16 %v2467
  %v3906 = vunpack.c.l.b16 %v2468
  %v3907 = vunpack.c.h.b16 %v2468
  %v3908 = vunpack.c.l.b16 %v2469
  %v3909 = vunpack.c.h.b16 %v2469
  %v3910 = vunpack.c.l.b16 %v2470
  %v3911 = vunpack.c.h.b16 %v2470
  %v3912 = vunpack.c.l.b16 %v2471
  %v3913 = vunpack.c.h.b16 %v2471
  %v3914 = vunpack.c.l.b16 %v2472
  %v3915 = vunpack.c.h.b16 %v2472
  %v3916 = vunpack.c.l.b16 %v2473
  %v3917 = vunpack.c.h.b16 %v2473
  %v3918 = vunpack.c.l.b16 %v2474
  %v3919 = vunpack.c.h.b16 %v2474
  %v3920 = vunpack.c.l.b16 %v2475
  %v3921 = vunpack.c.h.b16 %v2475
  %v3922 = vunpack.c.l.b16 %v2476
  %v3923 = vunpack.c.h.b16 %v2476
  %v3924 = vunpack.c.l.b16 %v2477
  %v3925 = vunpack.c.h.b16 %v2477
  %v3926 = vunpack.c.l.b16 %v2478
  %v3927 = vunpack.c.h.b16 %v2478
  %v3928 = vunpack.c.l.b16 %v2479
  %v3929 = vunpack.c.h.b16 %v2479
  %v3930 = vunpack.c.l.b16 %v2480
  %v3931 = vunpack.c.h.b16 %v2480
  %v3932 = vunpack.c.l.b16 %v2481
  %v3933 = vunpack.c.h.b16 %v2481
  %v3934 = vunpack.c.l.b16 %v2482
  %v3935 = vunpack.c.h.b16 %v2482
  %v3936 = vunpack.c.l.b16 %v2483
  %v3937 = vunpack.c.h.b16 %v2483
  %v3938 = vunpack.c.l.b16 %v2484
  %v3939 = vunpack.c.h.b16 %v2484
  %v3940 = vunpack.c.l.b16 %v2485
  %v3941 = vunpack.c.h.b16 %v2485
  %v3942 = vunpack.c.l.b16 %v2486
  %v3943 = vunpack.c.h.b16 %v2486
  %v3944 = vunpack.c.l.b16 %v2487
  %v3945 = vunpack.c.h.b16 %v2487
  %v3946 = vunpack.c.l.b16 %v2488
  %v3947 = vunpack.c.h.b16 %v2488
  %v3948 = vunpack.c.l.b16 %v2489
  %v3949 = vunpack.c.h.b16 %v2489
  %v3950 = vunpack.c.l.b16 %v2490
  %v3951 = vunpack.c.h.b16 %v2490
  %v3952 = vunpack.c.l.b16 %v2491
  %v3953 = vunpack.c.h.b16 %v2491
  %v3954 = vunpack.c.l.b16 %v2492
  %v3955 = vunpack.c.h.b16 %v2492
  %v3956 = vunpack.c.l.b16 %v2493
  %v3957 = vunpack.c.h.b16 %v2493
  %v3958 = vunpack.c.l.b16 %v2494
  %v3959 = vunpack.c.h.b16 %v2494
  %v3960 = vunpack.c.l.b16 %v2495
  %v3961 = vunpack.c.h.b16 %v2495
  %v3962 = vunpack.c.l.b16 %v2496
  %v3963 = vunpack.c.h.b16 %v2496
  %v3964 = vunpack.c.l.b16 %v2497
  %v3965 = vunpack.c.h.b16 %v2497
  %v3966 = vunpack.c.l.b16 %v2498
  %v3967 = vunpack.c.h.b16 %v2498
  %v3968 = vunpack.c.l.b16 %v2499
  %v3969 = vunpack.c.h.b16 %v2499
  %v3970 = vunpack.c.l.b16 %v2500
  %v3971 = vunpack.c.h.b16 %v2500
  %v3972 = vunpack.c.l.b16 %v2501
  %v3973 = vunpack.c.h.b16 %v2501
  %v3974 = vunpack.c.l.b16 %v2502
  %v3975 = vunpack.c.h.b16 %v2502
  %v3976 = vunpack.c.l.b16 %v2503
  %v3977 = vunpack.c.h.b16 %v2503
  %v3978 = vunpack.c.l.b16 %v2504
  %v3979 = vunpack.c.h.b16 %v2504
  %v3980 = vunpack.c.l.b16 %v2505
  %v3981 = vunpack.c.h.b16 %v2505
  %v3982 = vunpack.c.l.b16 %v2506
  %v3983 = vunpack.c.h.b16 %v2506
  %v3984 = vunpack.c.l.b16 %v2507
  %v3985 = vunpack.c.h.b16 %v2507
  %v3986 = vunpack.c.l.b16 %v2508
  %v3987 = vunpack.c.h.b16 %v2508
  %v3988 = vunpack.c.l.b16 %v2509
  %v3989 = vunpack.c.h.b16 %v2509
  %v3990 = vunpack.c.l.b16 %v2510
  %v3991 = vunpack.c.h.b16 %v2510
  %v3992 = vunpack.c.l.b16 %v2511
  %v3993 = vunpack.c.h.b16 %v2511
  %v3994 = vunpack.c.l.b16 %v2512
  %v3995 = vunpack.c.h.b16 %v2512
  %v3996 = vunpack.c.l.b16 %v2513
  %v3997 = vunpack.c.h.b16 %v2513
  %v3998 = vunpack.c.l.b16 %v2514
  %v3999 = vunpack.c.h.b16 %v2514
  %v4000 = vunpack.c.l.b16 %v2515
  %v4001 = vunpack.c.h.b16 %v2515
  %v4002 = vunpack.c.l.b16 %v2516
  %v4003 = vunpack.c.h.b16 %v2516
  %v4004 = vunpack.c.l.b16 %v2517
  %v4005 = vunpack.c.h.b16 %v2517
  %v4006 = vunpack.c.l.b16 %v2518
  %v4007 = vunpack.c.h.b16 %v2518
  %v4008 = vunpack.c.l.b16 %v2519
  %v4009 = vunpack.c.h.b16 %v2519
  %v4010 = vunpack.c.l.b16 %v2520
  %v4011 = vunpack.c.h.b16 %v2520
  %v4012 = vunpack.c.l.b16 %v2521
  %v4013 = vunpack.c.h.b16 %v2521
  %v4014 = vunpack.c.l.b16 %v2522
  %v4015 = vunpack.c.h.b16 %v2522
  %v4016 = vunpack.c.l.b16 %v2523
  %v4017 = vunpack.c.h.b16 %v2523
  %v4018 = vunpack.c.l.b16 %v2524
  %v4019 = vunpack.c.h.b16 %v2524
  %v4020 = vunpack.c.l.b16 %v2525
  %v4021 = vunpack.c.h.b16 %v2525
  %v4022 = vunpack.c.l.b16 %v2526
  %v4023 = vunpack.c.h.b16 %v2526
  %v4024 = vunpack.c.l.b16 %v2527
  %v4025 = vunpack.c.h.b16 %v2527
  %v4026 = vunpack.c.l.b16 %v2528
  %v4027 = vunpack.c.h.b16 %v2528
  %v4028 = vunpack.c.l.b16 %v2529
  %v4029 = vunpack.c.h.b16 %v2529
  %v4030 = vunpack.c.l.b16 %v2530
  %v4031 = vunpack.c.h.b16 %v2530
  %v4032 = vunpack.c.l.b16 %v2531
  %v4033 = vunpack.c.h.b16 %v2531
  %v4034 = vunpack.c.l.b16 %v2532
  %v4035 = vunpack.c.h.b16 %v2532
  %v4036 = vunpack.c.l.b16 %v2533
  %v4037 = vunpack.c.h.b16 %v2533
  %v4038 = vunpack.c.l.b16 %v2534
  %v4039 = vunpack.c.h.b16 %v2534
  %v4040 = vunpack.c.l.b16 %v2535
  %v4041 = vunpack.c.h.b16 %v2535
  %v4042 = vunpack.c.l.b16 %v2536
  %v4043 = vunpack.c.h.b16 %v2536
  %v4044 = vunpack.c.l.b16 %v2537
  %v4045 = vunpack.c.h.b16 %v2537
  %v4046 = vunpack.c.l.b16 %v2538
  %v4047 = vunpack.c.h.b16 %v2538
  %v4048 = vunpack.c.l.b16 %v2539
  %v4049 = vunpack.c.h.b16 %v2539
  %v4050 = vunpack.c.l.b16 %v2540
  %v4051 = vunpack.c.h.b16 %v2540
  %v4052 = vunpack.c.l.b16 %v2541
  %v4053 = vunpack.c.h.b16 %v2541
  %v4054 = vunpack.c.l.b16 %v2542
  %v4055 = vunpack.c.h.b16 %v2542
  %v4056 = vunpack.c.l.b16 %v2543
  %v4057 = vunpack.c.h.b16 %v2543
  %v4058 = vunpack.c.l.b16 %v2544
  %v4059 = vunpack.c.h.b16 %v2544
  %v4060 = vunpack.c.l.b16 %v2545
  %v4061 = vunpack.c.h.b16 %v2545
  %v4062 = vunpack.c.l.b16 %v2546
  %v4063 = vunpack.c.h.b16 %v2546
  %v4064 = vunpack.c.l.b16 %v2547
  %v4065 = vunpack.c.h.b16 %v2547
  %v4066 = vunpack.c.l.b16 %v2548
  %v4067 = vunpack.c.h.b16 %v2548
  %v4068 = vunpack.c.l.b16 %v2549
  %v4069 = vunpack.c.h.b16 %v2549
  %v4070 = vunpack.c.l.b16 %v2550
  %v4071 = vunpack.c.h.b16 %v2550
  %v4072 = vunpack.c.l.b16 %v2551
  %v4073 = vunpack.c.h.b16 %v2551
  %v4074 = vunpack.c.l.b16 %v2552
  %v4075 = vunpack.c.h.b16 %v2552
  %v4076 = vunpack.c.l.b16 %v2553
  %v4077 = vunpack.c.h.b16 %v2553
  %v4078 = vunpack.c.l.b16 %v2554
  %v4079 = vunpack.c.h.b16 %v2554
  %v4080 = vunpack.c.l.b16 %v2555
  %v4081 = vunpack.c.h.b16 %v2555
  %v4082 = vunpack.c.l.b16 %v2556
  %v4083 = vunpack.c.h.b16 %v2556
  %v4084 = vunpack.c.l.b16 %v2557
  %v4085 = vunpack.c.h.b16 %v2557
  %v4086 = vunpack.c.l.b16 %v2558
  %v4087 = vunpack.c.h.b16 %v2558
  %v4088 = vunpack.c.l.b16 %v2559
  %v4089 = vunpack.c.h.b16 %v2559
  %v4090 = vunpack.c.l.b16 %v2560
  %v4091 = vunpack.c.h.b16 %v2560
  %v4092 = vunpack.c.l.b16 %v2561
  %v4093 = vunpack.c.h.b16 %v2561
  %v4094 = vunpack.c.l.b16 %v2562
  %v4095 = vunpack.c.h.b16 %v2562
  %v4096 = vunpack.c.l.b16 %v2563
  %v4097 = vunpack.c.h.b16 %v2563
  %v4098 = vunpack.c.l.b16 %v2564
  %v4099 = vunpack.c.h.b16 %v2564
  %v4100 = vunpack.c.l.b16 %v2565
  %v4101 = vunpack.c.h.b16 %v2565
  %v4102 = vunpack.c.l.b16 %v2566
  %v4103 = vunpack.c.h.b16 %v2566
  %v4104 = vunpack.c.l.b16 %v2567
  %v4105 = vunpack.c.h.b16 %v2567
  %v4106 = vunpack.c.l.b16 %v2568
  %v4107 = vunpack.c.h.b16 %v2568
  %v4108 = vunpack.c.l.b16 %v2569
  %v4109 = vunpack.c.h.b16 %v2569
  %v4110 = vunpack.c.l.b16 %v2570
  %v4111 = vunpack.c.h.b16 %v2570
  %v4112 = vunpack.c.l.b16 %v2571
  %v4113 = vunpack.c.h.b16 %v2571
  %v4114 = vunpack.c.l.b16 %v2572
  %v4115 = vunpack.c.h.b16 %v2572
  %v4116 = vunpack.c.l.b16 %v2573
  %v4117 = vunpack.c.h.b16 %v2573
  %v4118 = vunpack.c.l.b16 %v2574
  %v4119 = vunpack.c.h.b16 %v2574
  %v4120 = vunpack.c.l.b16 %v2575
  %v4121 = vunpack.c.h.b16 %v2575
  %v4122 = vunpack.c.l.b16 %v2576
  %v4123 = vunpack.c.h.b16 %v2576
  %v4124 = vunpack.c.l.b16 %v2577
  %v4125 = vunpack.c.h.b16 %v2577
  %v4126 = vunpack.c.l.b16 %v2578
  %v4127 = vunpack.c.h.b16 %v2578
  %v4128 = vunpack.c.l.b16 %v2579
  %v4129 = vunpack.c.h.b16 %v2579
  %v4130 = vunpack.c.l.b16 %v2580
  %v4131 = vunpack.c.h.b16 %v2580
  %v4132 = vunpack.c.l.b16 %v2581
  %v4133 = vunpack.c.h.b16 %v2581
  %v4134 = vunpack.c.l.b16 %v2582
  %v4135 = vunpack.c.h.b16 %v2582
  %v4136 = vunpack.c.l.b16 %v2583
  %v4137 = vunpack.c.h.b16 %v2583
  %v4138 = vunpack.c.l.b16 %v2584
  %v4139 = vunpack.c.h.b16 %v2584
  %v4140 = vunpack.c.l.b16 %v2585
  %v4141 = vunpack.c.h.b16 %v2585
  %v4142 = vunpack.c.l.b16 %v2586
  %v4143 = vunpack.c.h.b16 %v2586
  %v4144 = vunpack.c.l.b16 %v2587
  %v4145 = vunpack.c.h.b16 %v2587
  %v4146 = vunpack.c.l.b16 %v2588
  %v4147 = vunpack.c.h.b16 %v2588
  %v4148 = vunpack.c.l.b16 %v2589
  %v4149 = vunpack.c.h.b16 %v2589
  %v4150 = vunpack.c.l.b16 %v2590
  %v4151 = vunpack.c.h.b16 %v2590
  %v4152 = vunpack.c.l.b16 %v2591
  %v4153 = vunpack.c.h.b16 %v2591
  %v4154 = vunpack.c.l.b16 %v2592
  %v4155 = vunpack.c.h.b16 %v2592
  %v4156 = vunpack.c.l.b16 %v2593
  %v4157 = vunpack.c.h.b16 %v2593
  %v4158 = vunpack.c.l.b16 %v2594
  %v4159 = vunpack.c.h.b16 %v2594
  %v4160 = vunpack.c.l.b16 %v2595
  %v4161 = vunpack.c.h.b16 %v2595
  %v4162 = vunpack.c.l.b16 %v2596
  %v4163 = vunpack.c.h.b16 %v2596
  %v4164 = vunpack.c.l.b16 %v2597
  %v4165 = vunpack.c.h.b16 %v2597
  %v4166 = vunpack.c.l.b16 %v2598
  %v4167 = vunpack.c.h.b16 %v2598
  %v4168 = vunpack.c.l.b16 %v2599
  %v4169 = vunpack.c.h.b16 %v2599
  %v4170 = vunpack.c.l.b16 %v2600
  %v4171 = vunpack.c.h.b16 %v2600
  %v4172 = vunpack.c.l.b16 %v2601
  %v4173 = vunpack.c.h.b16 %v2601
  %v4174 = vunpack.c.l.b16 %v2602
  %v4175 = vunpack.c.h.b16 %v2602
  %v4176 = vunpack.c.l.b16 %v2603
  %v4177 = vunpack.c.h.b16 %v2603
  %v4178 = vunpack.c.l.b16 %v2604
  %v4179 = vunpack.c.h.b16 %v2604
  %v4180 = vunpack.c.l.b16 %v2605
  %v4181 = vunpack.c.h.b16 %v2605
  %v4182 = vunpack.c.l.b16 %v2606
  %v4183 = vunpack.c.h.b16 %v2606
  %v4184 = vunpack.c.l.b16 %v2607
  %v4185 = vunpack.c.h.b16 %v2607
  %v4186 = vpack.c.b16 %v3170, %v3162
  %v4187 = vpack.c.b16 %v3171, %v3163
  %v4188 = vpack.c.b16 %v3172, %v3164
  %v4189 = vpack.c.b16 %v3173, %v3165
  %v4190 = vpack.c.b16 %v3174, %v3166
  %v4191 = vpack.c.b16 %v3175, %v3167
  %v4192 = vpack.c.b16 %v3176, %v3168
  %v4193 = vpack.c.b16 %v3177, %v3169
  %v4194 = vpack.c.b16 %v3186, %v3178
  %v4195 = vpack.c.b16 %v3187, %v3179
  %v4196 = vpack.c.b16 %v3188, %v3180
  %v4197 = vpack.c.b16 %v3189, %v3181
  %v4198 = vpack.c.b16 %v3190, %v3182
  %v4199 = vpack.c.b16 %v3191, %v3183
  %v4200 = vpack.c.b16 %v3192, %v3184
  %v4201 = vpack.c.b16 %v3193, %v3185
  %v4202 = vpack.c.b16 %v3202, %v3194
  %v4203 = vpack.c.b16 %v3203, %v3195
  %v4204 = vpack.c.b16 %v3204, %v3196
  %v4205 = vpack.c.b16 %v3205, %v3197
  %v4206 = vpack.c.b16 %v3206, %v3198
  %v4207 = vpack.c.b16 %v3207, %v3199
  %v4208 = vpack.c.b16 %v3208, %v3200
  %v4209 = vpack.c.b16 %v3209, %v3201
  %v4210 = vpack.c.b16 %v3218, %v3210
  %v4211 = vpack.c.b16 %v3219, %v3211
  %v4212 = vpack.c.b16 %v3220, %v3212
  %v4213 = vpack.c.b16 %v3221, %v3213
  %v4214 = vpack.c.b16 %v3222, %v3214
  %v4215 = vpack.c.b16 %v3223, %v3215
  %v4216 = vpack.c.b16 %v3224, %v3216
  %v4217 = vpack.c.b16 %v3225, %v3217
  %v4218 = vpack.c.b16 %v3234, %v3226
  %v4219 = vpack.c.b16 %v3235, %v3227
  %v4220 = vpack.c.b16 %v3236, %v3228
  %v4221 = vpack.c.b16 %v3237, %v3229
  %v4222 = vpack.c.b16 %v3238, %v3230
  %v4223 = vpack.c.b16 %v3239, %v3231
  %v4224 = vpack.c.b16 %v3240, %v3232
  %v4225 = vpack.c.b16 %v3241, %v3233
  %v4226 = vpack.c.b16 %v3250, %v3242
  %v4227 = vpack.c.b16 %v3251, %v3243
  %v4228 = vpack.c.b16 %v3252, %v3244
  %v4229 = vpack.c.b16 %v3253, %v3245
  %v4230 = vpack.c.b16 %v3254, %v3246
  %v4231 = vpack.c.b16 %v3255, %v3247
  %v4232 = vpack.c.b16 %v3256, %v3248
  %v4233 = vpack.c.b16 %v3257, %v3249
  %v4234 = vpack.c.b16 %v3266, %v3258
  %v4235 = vpack.c.b16 %v3267, %v3259
  %v4236 = vpack.c.b16 %v3268, %v3260
  %v4237 = vpack.c.b16 %v3269, %v3261
  %v4238 = vpack.c.b16 %v3270, %v3262
  %v4239 = vpack.c.b16 %v3271, %v3263
  %v4240 = vpack.c.b16 %v3272, %v3264
  %v4241 = vpack.c.b16 %v3273, %v3265
  %v4242 = vpack.c.b16 %v3282, %v3274
  %v4243 = vpack.c.b16 %v3283, %v3275
  %v4244 = vpack.c.b16 %v3284, %v3276
  %v4245 = vpack.c.b16 %v3285, %v3277
  %v4246 = vpack.c.b16 %v3286, %v3278
  %v4247 = vpack.c.b16 %v3287, %v3279
  %v4248 = vpack.c.b16 %v3288, %v3280
  %v4249 = vpack.c.b16 %v3289, %v3281
  %v4250 = vpack.c.b16 %v3298, %v3290
  %v4251 = vpack.c.b16 %v3299, %v3291
  %v4252 = vpack.c.b16 %v3300, %v3292
  %v4253 = vpack.c.b16 %v3301, %v3293
  %v4254 = vpack.c.b16 %v3302, %v3294
  %v4255 = vpack.c.b16 %v3303, %v3295
  %v4256 = vpack.c.b16 %v3304, %v3296
  %v4257 = vpack.c.b16 %v3305, %v3297
  %v4258 = vpack.c.b16 %v3314, %v3306
  %v4259 = vpack.c.b16 %v3315, %v3307
  %v4260 = vpack.c.b16 %v3316, %v3308
  %v4261 = vpack.c.b16 %v3317, %v3309
  %v4262 = vpack.c.b16 %v3318, %v3310
  %v4263 = vpack.c.b16 %v3319, %v3311
  %v4264 = vpack.c.b16 %v3320, %v3312
  %v4265 = vpack.c.b16 %v3321, %v3313
  %v4266 = vpack.c.b16 %v3330, %v3322
  %v4267 = vpack.c.b16 %v3331, %v3323
  %v4268 = vpack.c.b16 %v3332, %v3324
  %v4269 = vpack.c.b16 %v3333, %v3325
  %v4270 = vpack.c.b16 %v3334, %v3326
  %v4271 = vpack.c.b16 %v3335, %v3327
  %v4272 = vpack.c.b16 %v3336, %v3328
  %v4273 = vpack.c.b16 %v3337, %v3329
  %v4274 = vpack.c.b16 %v3346, %v3338
  %v4275 = vpack.c.b16 %v3347, %v3339
  %v4276 = vpack.c.b16 %v3348, %v3340
  %v4277 = vpack.c.b16 %v3349, %v3341
  %v4278 = vpack.c.b16 %v3350, %v3342
  %v4279 = vpack.c.b16 %v3351, %v3343
  %v4280 = vpack.c.b16 %v3352, %v3344
  %v4281 = vpack.c.b16 %v3353, %v3345
  %v4282 = vpack.c.b16 %v3362, %v3354
  %v4283 = vpack.c.b16 %v3363, %v3355
  %v4284 = vpack.c.b16 %v3364, %v3356
  %v4285 = vpack.c.b16 %v3365, %v3357
  %v4286 = vpack.c.b16 %v3366, %v3358
  %v4287 = vpack.c.b16 %v3367, %v3359
  %v4288 = vpack.c.b16 %v3368, %v3360
  %v4289 = vpack.c.b16 %v3369, %v3361
  %v4290 = vpack.c.b16 %v3378, %v3370
  %v4291 = vpack.c.b16 %v3379, %v3371
  %v4292 = vpack.c.b16 %v3380, %v3372
  %v4293 = vpack.c.b16 %v3381, %v3373
  %v4294 = vpack.c.b16 %v3382, %v3374
  %v4295 = vpack.c.b16 %v3383, %v3375
  %v4296 = vpack.c.b16 %v3384, %v3376
  %v4297 = vpack.c.b16 %v3385, %v3377
  %v4298 = vpack.c.b16 %v3394, %v3386
  %v4299 = vpack.c.b16 %v3395, %v3387
  %v4300 = vpack.c.b16 %v3396, %v3388
  %v4301 = vpack.c.b16 %v3397, %v3389
  %v4302 = vpack.c.b16 %v3398, %v3390
  %v4303 = vpack.c.b16 %v3399, %v3391
  %v4304 = vpack.c.b16 %v3400, %v3392
  %v4305 = vpack.c.b16 %v3401, %v3393
  %v4306 = vpack.c.b16 %v3410, %v3402
  %v4307 = vpack.c.b16 %v3411, %v3403
  %v4308 = vpack.c.b16 %v3412, %v3404
  %v4309 = vpack.c.b16 %v3413, %v3405
  %v4310 = vpack.c.b16 %v3414, %v3406
  %v4311 = vpack.c.b16 %v3415, %v3407
  %v4312 = vpack.c.b16 %v3416, %v3408
  %v4313 = vpack.c.b16 %v3417, %v3409
  %v4314 = vpack.c.b16 %v3426, %v3418
  %v4315 = vpack.c.b16 %v3427, %v3419
  %v4316 = vpack.c.b16 %v3428, %v3420
  %v4317 = vpack.c.b16 %v3429, %v3421
  %v4318 = vpack.c.b16 %v3430, %v3422
  %v4319 = vpack.c.b16 %v3431, %v3423
  %v4320 = vpack.c.b16 %v3432, %v3424
  %v4321 = vpack.c.b16 %v3433, %v3425
  %v4322 = vpack.c.b16 %v3442, %v3434
  %v4323 = vpack.c.b16 %v3443, %v3435
  %v4324 = vpack.c.b16 %v3444, %v3436
  %v4325 = vpack.c.b16 %v3445, %v3437
  %v4326 = vpack.c.b16 %v3446, %v3438
  %v4327 = vpack.c.b16 %v3447, %v3439
  %v4328 = vpack.c.b16 %v3448, %v3440
  %v4329 = vpack.c.b16 %v3449, %v3441
  %v4330 = vpack.c.b16 %v3458, %v3450
  %v4331 = vpack.c.b16 %v3459, %v3451
  %v4332 = vpack.c.b16 %v3460, %v3452
  %v4333 = vpack.c.b16 %v3461, %v3453
  %v4334 = vpack.c.b16 %v3462, %v3454
  %v4335 = vpack.c.b16 %v3463, %v3455
  %v4336 = vpack.c.b16 %v3464, %v3456
  %v4337 = vpack.c.b16 %v3465, %v3457
  %v4338 = vpack.c.b16 %v3474, %v3466
  %v4339 = vpack.c.b16 %v3475, %v3467
  %v4340 = vpack.c.b16 %v3476, %v3468
  %v4341 = vpack.c.b16 %v3477, %v3469
  %v4342 = vpack.c.b16 %v3478, %v3470
  %v4343 = vpack.c.b16 %v3479, %v3471
  %v4344 = vpack.c.b16 %v3480, %v3472
  %v4345 = vpack.c.b16 %v3481, %v3473
  %v4346 = vpack.c.b16 %v3490, %v3482
  %v4347 = vpack.c.b16 %v3491, %v3483
  %v4348 = vpack.c.b16 %v3492, %v3484
  %v4349 = vpack.c.b16 %v3493, %v3485
  %v4350 = vpack.c.b16 %v3494, %v3486
  %v4351 = vpack.c.b16 %v3495, %v3487
  %v4352 = vpack.c.b16 %v3496, %v3488
  %v4353 = vpack.c.b16 %v3497, %v3489
  %v4354 = vpack.c.b16 %v3506, %v3498
  %v4355 = vpack.c.b16 %v3507, %v3499
  %v4356 = vpack.c.b16 %v3508, %v3500
  %v4357 = vpack.c.b16 %v3509, %v3501
  %v4358 = vpack.c.b16 %v3510, %v3502
  %v4359 = vpack.c.b16 %v3511, %v3503
  %v4360 = vpack.c.b16 %v3512, %v3504
  %v4361 = vpack.c.b16 %v3513, %v3505
  %v4362 = vpack.c.b16 %v3522, %v3514
  %v4363 = vpack.c.b16 %v3523, %v3515
  %v4364 = vpack.c.b16 %v3524, %v3516
  %v4365 = vpack.c.b16 %v3525, %v3517
  %v4366 = vpack.c.b16 %v3526, %v3518
  %v4367 = vpack.c.b16 %v3527, %v3519
  %v4368 = vpack.c.b16 %v3528, %v3520
  %v4369 = vpack.c.b16 %v3529, %v3521
  %v4370 = vpack.c.b16 %v3538, %v3530
  %v4371 = vpack.c.b16 %v3539, %v3531
  %v4372 = vpack.c.b16 %v3540, %v3532
  %v4373 = vpack.c.b16 %v3541, %v3533
  %v4374 = vpack.c.b16 %v3542, %v3534
  %v4375 = vpack.c.b16 %v3543, %v3535
  %v4376 = vpack.c.b16 %v3544, %v3536
  %v4377 = vpack.c.b16 %v3545, %v3537
  %v4378 = vpack.c.b16 %v3554, %v3546
  %v4379 = vpack.c.b16 %v3555, %v3547
  %v4380 = vpack.c.b16 %v3556, %v3548
  %v4381 = vpack.c.b16 %v3557, %v3549
  %v4382 = vpack.c.b16 %v3558, %v3550
  %v4383 = vpack.c.b16 %v3559, %v3551
  %v4384 = vpack.c.b16 %v3560, %v3552
  %v4385 = vpack.c.b16 %v3561, %v3553
  %v4386 = vpack.c.b16 %v3570, %v3562
  %v4387 = vpack.c.b16 %v3571, %v3563
  %v4388 = vpack.c.b16 %v3572, %v3564
  %v4389 = vpack.c.b16 %v3573, %v3565
  %v4390 = vpack.c.b16 %v3574, %v3566
  %v4391 = vpack.c.b16 %v3575, %v3567
  %v4392 = vpack.c.b16 %v3576, %v3568
  %v4393 = vpack.c.b16 %v3577, %v3569
  %v4394 = vpack.c.b16 %v3586, %v3578
  %v4395 = vpack.c.b16 %v3587, %v3579
  %v4396 = vpack.c.b16 %v3588, %v3580
  %v4397 = vpack.c.b16 %v3589, %v3581
  %v4398 = vpack.c.b16 %v3590, %v3582
  %v4399 = vpack.c.b16 %v3591, %v3583
  %v4400 = vpack.c.b16 %v3592, %v3584
  %v4401 = vpack.c.b16 %v3593, %v3585
  %v4402 = vpack.c.b16 %v3602, %v3594
  %v4403 = vpack.c.b16 %v3603, %v3595
  %v4404 = vpack.c.b16 %v3604, %v3596
  %v4405 = vpack.c.b16 %v3605, %v3597
  %v4406 = vpack.c.b16 %v3606, %v3598
  %v4407 = vpack.c.b16 %v3607, %v3599
  %v4408 = vpack.c.b16 %v3608, %v3600
  %v4409 = vpack.c.b16 %v3609, %v3601
  %v4410 = vpack.c.b16 %v3618, %v3610
  %v4411 = vpack.c.b16 %v3619, %v3611
  %v4412 = vpack.c.b16 %v3620, %v3612
  %v4413 = vpack.c.b16 %v3621, %v3613
  %v4414 = vpack.c.b16 %v3622, %v3614
  %v4415 = vpack.c.b16 %v3623, %v3615
  %v4416 = vpack.c.b16 %v3624, %v3616
  %v4417 = vpack.c.b16 %v3625, %v3617
  %v4418 = vpack.c.b16 %v3634, %v3626
  %v4419 = vpack.c.b16 %v3635, %v3627
  %v4420 = vpack.c.b16 %v3636, %v3628
  %v4421 = vpack.c.b16 %v3637, %v3629
  %v4422 = vpack.c.b16 %v3638, %v3630
  %v4423 = vpack.c.b16 %v3639, %v3631
  %v4424 = vpack.c.b16 %v3640, %v3632
  %v4425 = vpack.c.b16 %v3641, %v3633
  %v4426 = vpack.c.b16 %v3650, %v3642
  %v4427 = vpack.c.b16 %v3651, %v3643
  %v4428 = vpack.c.b16 %v3652, %v3644
  %v4429 = vpack.c.b16 %v3653, %v3645
  %v4430 = vpack.c.b16 %v3654, %v3646
  %v4431 = vpack.c.b16 %v3655, %v3647
  %v4432 = vpack.c.b16 %v3656, %v3648
  %v4433 = vpack.c.b16 %v3657, %v3649
  %v4434 = vpack.c.b16 %v3666, %v3658
  %v4435 = vpack.c.b16 %v3667, %v3659
  %v4436 = vpack.c.b16 %v3668, %v3660
  %v4437 = vpack.c.b16 %v3669, %v3661
  %v4438 = vpack.c.b16 %v3670, %v3662
  %v4439 = vpack.c.b16 %v3671, %v3663
  %v4440 = vpack.c.b16 %v3672, %v3664
  %v4441 = vpack.c.b16 %v3673, %v3665
  %v4442 = vpack.c.b16 %v3682, %v3674
  %v4443 = vpack.c.b16 %v3683, %v3675
  %v4444 = vpack.c.b16 %v3684, %v3676
  %v4445 = vpack.c.b16 %v3685, %v3677
  %v4446 = vpack.c.b16 %v3686, %v3678
  %v4447 = vpack.c.b16 %v3687, %v3679
  %v4448 = vpack.c.b16 %v3688, %v3680
  %v4449 = vpack.c.b16 %v3689, %v3681
  %v4450 = vpack.c.b16 %v3698, %v3690
  %v4451 = vpack.c.b16 %v3699, %v3691
  %v4452 = vpack.c.b16 %v3700, %v3692
  %v4453 = vpack.c.b16 %v3701, %v3693
  %v4454 = vpack.c.b16 %v3702, %v3694
  %v4455 = vpack.c.b16 %v3703, %v3695
  %v4456 = vpack.c.b16 %v3704, %v3696
  %v4457 = vpack.c.b16 %v3705, %v3697
  %v4458 = vpack.c.b16 %v3714, %v3706
  %v4459 = vpack.c.b16 %v3715, %v3707
  %v4460 = vpack.c.b16 %v3716, %v3708
  %v4461 = vpack.c.b16 %v3717, %v3709
  %v4462 = vpack.c.b16 %v3718, %v3710
  %v4463 = vpack.c.b16 %v3719, %v3711
  %v4464 = vpack.c.b16 %v3720, %v3712
  %v4465 = vpack.c.b16 %v3721, %v3713
  %v4466 = vpack.c.b16 %v3730, %v3722
  %v4467 = vpack.c.b16 %v3731, %v3723
  %v4468 = vpack.c.b16 %v3732, %v3724
  %v4469 = vpack.c.b16 %v3733, %v3725
  %v4470 = vpack.c.b16 %v3734, %v3726
  %v4471 = vpack.c.b16 %v3735, %v3727
  %v4472 = vpack.c.b16 %v3736, %v3728
  %v4473 = vpack.c.b16 %v3737, %v3729
  %v4474 = vpack.c.b16 %v3746, %v3738
  %v4475 = vpack.c.b16 %v3747, %v3739
  %v4476 = vpack.c.b16 %v3748, %v3740
  %v4477 = vpack.c.b16 %v3749, %v3741
  %v4478 = vpack.c.b16 %v3750, %v3742
  %v4479 = vpack.c.b16 %v3751, %v3743
  %v4480 = vpack.c.b16 %v3752, %v3744
  %v4481 = vpack.c.b16 %v3753, %v3745
  %v4482 = vpack.c.b16 %v3762, %v3754
  %v4483 = vpack.c.b16 %v3763, %v3755
  %v4484 = vpack.c.b16 %v3764, %v3756
  %v4485 = vpack.c.b16 %v3765, %v3757
  %v4486 = vpack.c.b16 %v3766, %v3758
  %v4487 = vpack.c.b16 %v3767, %v3759
  %v4488 = vpack.c.b16 %v3768, %v3760
  %v4489 = vpack.c.b16 %v3769, %v3761
  %v4490 = vpack.c.b16 %v3778, %v3770
  %v4491 = vpack.c.b16 %v3779, %v3771
  %v4492 = vpack.c.b16 %v3780, %v3772
  %v4493 = vpack.c.b16 %v3781, %v3773
  %v4494 = vpack.c.b16 %v3782, %v3774
  %v4495 = vpack.c.b16 %v3783, %v3775
  %v4496 = vpack.c.b16 %v3784, %v3776
  %v4497 = vpack.c.b16 %v3785, %v3777
  %v4498 = vpack.c.b16 %v3794, %v3786
  %v4499 = vpack.c.b16 %v3795, %v3787
  %v4500 = vpack.c.b16 %v3796, %v3788
  %v4501 = vpack.c.b16 %v3797, %v3789
  %v4502 = vpack.c.b16 %v3798, %v3790
  %v4503 = vpack.c.b16 %v3799, %v3791
  %v4504 = vpack.c.b16 %v3800, %v3792
  %v4505 = vpack.c.b16 %v3801, %v3793
  %v4506 = vpack.c.b16 %v3810, %v3802
  %v4507 = vpack.c.b16 %v3811, %v3803
  %v4508 = vpack.c.b16 %v3812, %v3804
  %v4509 = vpack.c.b16 %v3813, %v3805
  %v4510 = vpack.c.b16 %v3814, %v3806
  %v4511 = vpack.c.b16 %v3815, %v3807
  %v4512 = vpack.c.b16 %v3816, %v3808
  %v4513 = vpack.c.b16 %v3817, %v3809
  %v4514 = vpack.c.b16 %v3826, %v3818
  %v4515 = vpack.c.b16 %v3827, %v3819
  %v4516 = vpack.c.b16 %v3828, %v3820
  %v4517 = vpack.c.b16 %v3829, %v3821
  %v4518 = vpack.c.b16 %v3830, %v3822
  %v4519 = vpack.c.b16 %v3831, %v3823
  %v4520 = vpack.c.b16 %v3832, %v3824
  %v4521 = vpack.c.b16 %v3833, %v3825
  %v4522 = vpack.c.b16 %v3842, %v3834
  %v4523 = vpack.c.b16 %v3843, %v3835
  %v4524 = vpack.c.b16 %v3844, %v3836
  %v4525 = vpack.c.b16 %v3845, %v3837
  %v4526 = vpack.c.b16 %v3846, %v3838
  %v4527 = vpack.c.b16 %v3847, %v3839
  %v4528 = vpack.c.b16 %v3848, %v3840
  %v4529 = vpack.c.b16 %v3849, %v3841
  %v4530 = vpack.c.b16 %v3858, %v3850
  %v4531 = vpack.c.b16 %v3859, %v3851
  %v4532 = vpack.c.b16 %v3860, %v3852
  %v4533 = vpack.c.b16 %v3861, %v3853
  %v4534 = vpack.c.b16 %v3862, %v3854
  %v4535 = vpack.c.b16 %v3863, %v3855
  %v4536 = vpack.c.b16 %v3864, %v3856
  %v4537 = vpack.c.b16 %v3865, %v3857
  %v4538 = vpack.c.b16 %v3874, %v3866
  %v4539 = vpack.c.b16 %v3875, %v3867
  %v4540 = vpack.c.b16 %v3876, %v3868
  %v4541 = vpack.c.b16 %v3877, %v3869
  %v4542 = vpack.c.b16 %v3878, %v3870
  %v4543 = vpack.c.b16 %v3879, %v3871
  %v4544 = vpack.c.b16 %v3880, %v3872
  %v4545 = vpack.c.b16 %v3881, %v3873
  %v4546 = vpack.c.b16 %v3890, %v3882
  %v4547 = vpack.c.b16 %v3891, %v3883
  %v4548 = vpack.c.b16 %v3892, %v3884
  %v4549 = vpack.c.b16 %v3893, %v3885
  %v4550 = vpack.c.b16 %v3894, %v3886
  %v4551 = vpack.c.b16 %v3895, %v3887
  %v4552 = vpack.c.b16 %v3896, %v3888
  %v4553 = vpack.c.b16 %v3897, %v3889
  %v4554 = vpack.c.b16 %v3906, %v3898
  %v4555 = vpack.c.b16 %v3907, %v3899
  %v4556 = vpack.c.b16 %v3908, %v3900
  %v4557 = vpack.c.b16 %v3909, %v3901
  %v4558 = vpack.c.b16 %v3910, %v3902
  %v4559 = vpack.c.b16 %v3911, %v3903
  %v4560 = vpack.c.b16 %v3912, %v3904
  %v4561 = vpack.c.b16 %v3913, %v3905
  %v4562 = vpack.c.b16 %v3922, %v3914
  %v4563 = vpack.c.b16 %v3923, %v3915
  %v4564 = vpack.c.b16 %v3924, %v3916
  %v4565 = vpack.c.b16 %v3925, %v3917
  %v4566 = vpack.c.b16 %v3926, %v3918
  %v4567 = vpack.c.b16 %v3927, %v3919
  %v4568 = vpack.c.b16 %v3928, %v3920
  %v4569 = vpack.c.b16 %v3929, %v3921
  %v4570 = vpack.c.b16 %v3938, %v3930
  %v4571 = vpack.c.b16 %v3939, %v3931
  %v4572 = vpack.c.b16 %v3940, %v3932
  %v4573 = vpack.c.b16 %v3941, %v3933
  %v4574 = vpack.c.b16 %v3942, %v3934
  %v4575 = vpack.c.b16 %v3943, %v3935
  %v4576 = vpack.c.b16 %v3944, %v3936
  %v4577 = vpack.c.b16 %v3945, %v3937
  %v4578 = vpack.c.b16 %v3954, %v3946
  %v4579 = vpack.c.b16 %v3955, %v3947
  %v4580 = vpack.c.b16 %v3956, %v3948
  %v4581 = vpack.c.b16 %v3957, %v3949
  %v4582 = vpack.c.b16 %v3958, %v3950
  %v4583 = vpack.c.b16 %v3959, %v3951
  %v4584 = vpack.c.b16 %v3960, %v3952
  %v4585 = vpack.c.b16 %v3961, %v3953
  %v4586 = vpack.c.b16 %v3970, %v3962
  %v4587 = vpack.c.b16 %v3971, %v3963
  %v4588 = vpack.c.b16 %v3972, %v3964
  %v4589 = vpack.c.b16 %v3973, %v3965
  %v4590 = vpack.c.b16 %v3974, %v3966
  %v4591 = vpack.c.b16 %v3975, %v3967
  %v4592 = vpack.c.b16 %v3976, %v3968
  %v4593 = vpack.c.b16 %v3977, %v3969
  %v4594 = vpack.c.b16 %v3986, %v3978
  %v4595 = vpack.c.b16 %v3987, %v3979
  %v4596 = vpack.c.b16 %v3988, %v3980
  %v4597 = vpack.c.b16 %v3989, %v3981
  %v4598 = vpack.c.b16 %v3990, %v3982
  %v4599 = vpack.c.b16 %v3991, %v3983
  %v4600 = vpack.c.b16 %v3992, %v3984
  %v4601 = vpack.c.b16 %v3993, %v3985
  %v4602 = vpack.c.b16 %v4002, %v3994
  %v4603 = vpack.c.b16 %v4003, %v3995
  %v4604 = vpack.c.b16 %v4004, %v3996
  %v4605 = vpack.c.b16 %v4005, %v3997
  %v4606 = vpack.c.b16 %v4006, %v3998
  %v4607 = vpack.c.b16 %v4007, %v3999
  %v4608 = vpack.c.b16 %v4008, %v4000
  %v4609 = vpack.c.b16 %v4009, %v4001
  %v4610 = vpack.c.b16 %v4018, %v4010
  %v4611 = vpack.c.b16 %v4019, %v4011
  %v4612 = vpack.c.b16 %v4020, %v4012
  %v4613 = vpack.c.b16 %v4021, %v4013
  %v4614 = vpack.c.b16 %v4022, %v4014
  %v4615 = vpack.c.b16 %v4023, %v4015
  %v4616 = vpack.c.b16 %v4024, %v4016
  %v4617 = vpack.c.b16 %v4025, %v4017
  %v4618 = vpack.c.b16 %v4034, %v4026
  %v4619 = vpack.c.b16 %v4035, %v4027
  %v4620 = vpack.c.b16 %v4036, %v4028
  %v4621 = vpack.c.b16 %v4037, %v4029
  %v4622 = vpack.c.b16 %v4038, %v4030
  %v4623 = vpack.c.b16 %v4039, %v4031
  %v4624 = vpack.c.b16 %v4040, %v4032
  %v4625 = vpack.c.b16 %v4041, %v4033
  %v4626 = vpack.c.b16 %v4050, %v4042
  %v4627 = vpack.c.b16 %v4051, %v4043
  %v4628 = vpack.c.b16 %v4052, %v4044
  %v4629 = vpack.c.b16 %v4053, %v4045
  %v4630 = vpack.c.b16 %v4054, %v4046
  %v4631 = vpack.c.b16 %v4055, %v4047
  %v4632 = vpack.c.b16 %v4056, %v4048
  %v4633 = vpack.c.b16 %v4057, %v4049
  %v4634 = vpack.c.b16 %v4066, %v4058
  %v4635 = vpack.c.b16 %v4067, %v4059
  %v4636 = vpack.c.b16 %v4068, %v4060
  %v4637 = vpack.c.b16 %v4069, %v4061
  %v4638 = vpack.c.b16 %v4070, %v4062
  %v4639 = vpack.c.b16 %v4071, %v4063
  %v4640 = vpack.c.b16 %v4072, %v4064
  %v4641 = vpack.c.b16 %v4073, %v4065
  %v4642 = vpack.c.b16 %v4082, %v4074
  %v4643 = vpack.c.b16 %v4083, %v4075
  %v4644 = vpack.c.b16 %v4084, %v4076
  %v4645 = vpack.c.b16 %v4085, %v4077
  %v4646 = vpack.c.b16 %v4086, %v4078
  %v4647 = vpack.c.b16 %v4087, %v4079
  %v4648 = vpack.c.b16 %v4088, %v4080
  %v4649 = vpack.c.b16 %v4089, %v4081
  %v4650 = vpack.c.b16 %v4098, %v4090
  %v4651 = vpack.c.b16 %v4099, %v4091
  %v4652 = vpack.c.b16 %v4100, %v4092
  %v4653 = vpack.c.b16 %v4101, %v4093
  %v4654 = vpack.c.b16 %v4102, %v4094
  %v4655 = vpack.c.b16 %v4103, %v4095
  %v4656 = vpack.c.b16 %v4104, %v4096
  %v4657 = vpack.c.b16 %v4105, %v4097
  %v4658 = vpack.c.b16 %v4114, %v4106
  %v4659 = vpack.c.b16 %v4115, %v4107
  %v4660 = vpack.c.b16 %v4116, %v4108
  %v4661 = vpack.c.b16 %v4117, %v4109
  %v4662 = vpack.c.b16 %v4118, %v4110
  %v4663 = vpack.c.b16 %v4119, %v4111
  %v4664 = vpack.c.b16 %v4120, %v4112
  %v4665 = vpack.c.b16 %v4121, %v4113
  %v4666 = vpack.c.b16 %v4130, %v4122
  %v4667 = vpack.c.b16 %v4131, %v4123
  %v4668 = vpack.c.b16 %v4132, %v4124
  %v4669 = vpack.c.b16 %v4133, %v4125
  %v4670 = vpack.c.b16 %v4134, %v4126
  %v4671 = vpack.c.b16 %v4135, %v4127
  %v4672 = vpack.c.b16 %v4136, %v4128
  %v4673 = vpack.c.b16 %v4137, %v4129
  %v4674 = vpack.c.b16 %v4146, %v4138
  %v4675 = vpack.c.b16 %v4147, %v4139
  %v4676 = vpack.c.b16 %v4148, %v4140
  %v4677 = vpack.c.b16 %v4149, %v4141
  %v4678 = vpack.c.b16 %v4150, %v4142
  %v4679 = vpack.c.b16 %v4151, %v4143
  %v4680 = vpack.c.b16 %v4152, %v4144
  %v4681 = vpack.c.b16 %v4153, %v4145
  %v4682 = vpack.c.b16 %v4162, %v4154
  %v4683 = vpack.c.b16 %v4163, %v4155
  %v4684 = vpack.c.b16 %v4164, %v4156
  %v4685 = vpack.c.b16 %v4165, %v4157
  %v4686 = vpack.c.b16 %v4166, %v4158
  %v4687 = vpack.c.b16 %v4167, %v4159
  %v4688 = vpack.c.b16 %v4168, %v4160
  %v4689 = vpack.c.b16 %v4169, %v4161
  %v4690 = vpack.c.b16 %v4178, %v4170
  %v4691 = vpack.c.b16 %v4179, %v4171
  %v4692 = vpack.c.b16 %v4180, %v4172
  %v4693 = vpack.c.b16 %v4181, %v4173
  %v4694 = vpack.c.b16 %v4182, %v4174
  %v4695 = vpack.c.b16 %v4183, %v4175
  %v4696 = vpack.c.b16 %v4184, %v4176
  %v4697 = vpack.c.b16 %v4185, %v4177
  %5210 = vmatprep.subr.bf16.mxu0 %v4187
  %5211 = vmatpush1.bf16.msra.mxu0 %v4186
  %5212 = vmatprep.subr.bf16.mxu0 %v4195
  %5213 = vmatpush1.bf16.msra.mxu0 %v4194
  %5214 = vmatprep.subr.bf16.mxu0 %v4203
  %5215 = vmatpush1.bf16.msra.mxu0 %v4202
  %5216 = vmatprep.subr.bf16.mxu0 %v4211
  %5217 = vmatpush1.bf16.msra.mxu0 %v4210
  %5218 = vmatprep.subr.bf16.mxu0 %v4219
  %5219 = vmatpush1.bf16.msra.mxu0 %v4218
  %5220 = vmatprep.subr.bf16.mxu0 %v4227
  %5221 = vmatpush1.bf16.msra.mxu0 %v4226
  %5222 = vmatprep.subr.bf16.mxu0 %v4235
  %5223 = vmatpush1.bf16.msra.mxu0 %v4234
  %5224 = vmatprep.subr.bf16.mxu0 %v4243
  %5225 = vmatpush1.bf16.msra.mxu0 %v4242
  %5226 = vmatprep.subr.bf16.mxu0 %v4251
  %5227 = vmatpush1.bf16.msra.mxu0 %v4250
  %5228 = vmatprep.subr.bf16.mxu0 %v4259
  %5229 = vmatpush1.bf16.msra.mxu0 %v4258
  %5230 = vmatprep.subr.bf16.mxu0 %v4267
  %5231 = vmatpush1.bf16.msra.mxu0 %v4266
  %5232 = vmatprep.subr.bf16.mxu0 %v4275
  %5233 = vmatpush1.bf16.msra.mxu0 %v4274
  %5234 = vmatprep.subr.bf16.mxu0 %v4283
  %5235 = vmatpush1.bf16.msra.mxu0 %v4282
  %5236 = vmatprep.subr.bf16.mxu0 %v4291
  %5237 = vmatpush1.bf16.msra.mxu0 %v4290
  %5238 = vmatprep.subr.bf16.mxu0 %v4299
  %5239 = vmatpush1.bf16.msra.mxu0 %v4298
  %5240 = vmatprep.subr.bf16.mxu0 %v4307
  %5241 = vmatpush1.bf16.msra.mxu0 %v4306
  %5242 = vmatprep.mubr.bf16.mxu0 %v2089
  %5243 = vmatmul.mubr.bf16.gmra.mrb[0].mxu0 %v2088
  %v5244 = vpop.f32.mrb[0].mxu0
  %v5245 = vadd.f32 %v2613, %v5244
  %v5246 = vpop.f32.mrb[0].mxu0
  %v5247 = vadd.f32 %v2617, %v5246
  %v5248 = vpop.f32.mrb[0].mxu0
  %v5249 = vadd.f32 %v2613, %v5248
  %v5250 = vpop.f32.mrb[0].mxu0
  %v5251 = vadd.f32 %v2617, %v5250
  %5252 = vdwg.mxu0
  %5253 = vmatprep.subr.bf16.mxu0 %v4315
  %5254 = vmatpush1.bf16.msra.mxu0 %v4314
  %5255 = vmatprep.subr.bf16.mxu0 %v4323
  %5256 = vmatpush1.bf16.msra.mxu0 %v4322
  %5257 = vmatprep.subr.bf16.mxu0 %v4331
  %5258 = vmatpush1.bf16.msra.mxu0 %v4330
  %5259 = vmatprep.subr.bf16.mxu0 %v4339
  %5260 = vmatpush1.bf16.msra.mxu0 %v4338
  %5261 = vmatprep.subr.bf16.mxu0 %v4347
  %5262 = vmatpush1.bf16.msra.mxu0 %v4346
  %5263 = vmatprep.subr.bf16.mxu0 %v4355
  %5264 = vmatpush1.bf16.msra.mxu0 %v4354
  %5265 = vmatprep.subr.bf16.mxu0 %v4363
  %5266 = vmatpush1.bf16.msra.mxu0 %v4362
  %5267 = vmatprep.subr.bf16.mxu0 %v4371
  %5268 = vmatpush1.bf16.msra.mxu0 %v4370
  %5269 = vmatprep.subr.bf16.mxu0 %v4379
  %5270 = vmatpush1.bf16.msra.mxu0 %v4378
  %5271 = vmatprep.subr.bf16.mxu0 %v4387
  %5272 = vmatpush1.bf16.msra.mxu0 %v4386
  %5273 = vmatprep.subr.bf16.mxu0 %v4395
  %5274 = vmatpush1.bf16.msra.mxu0 %v4394
  %5275 = vmatprep.subr.bf16.mxu0 %v4403
  %5276 = vmatpush1.bf16.msra.mxu0 %v4402
  %5277 = vmatprep.subr.bf16.mxu0 %v4411
  %5278 = vmatpush1.bf16.msra.mxu0 %v4410
  %5279 = vmatprep.subr.bf16.mxu0 %v4419
  %5280 = vmatpush1.bf16.msra.mxu0 %v4418
  %5281 = vmatprep.subr.bf16.mxu0 %v4427
  %5282 = vmatpush1.bf16.msra.mxu0 %v4426
  %5283 = vmatprep.subr.bf16.mxu0 %v4435
  %5284 = vmatpush1.bf16.msra.mxu0 %v4434
  %5285 = vmatprep.mubr.bf16.mxu0 %v2091
  %5286 = vmatmul.mubr.bf16.gmra.mrb[0].mxu0 %v2090
  %v5287 = vpop.f32.mrb[0].mxu0
  %v5288 = vadd.f32 %v5245, %v5287
  %v5289 = vpop.f32.mrb[0].mxu0
  %v5290 = vadd.f32 %v5247, %v5289
  %v5291 = vpop.f32.mrb[0].mxu0
  %v5292 = vadd.f32 %v5249, %v5291
  %v5293 = vpop.f32.mrb[0].mxu0
  %v5294 = vadd.f32 %v5251, %v5293
  %5295 = vdwg.mxu0
  %5296 = vmatprep.subr.bf16.mxu0 %v4443
  %5297 = vmatpush1.bf16.msra.mxu0 %v4442
  %5298 = vmatprep.subr.bf16.mxu0 %v4451
  %5299 = vmatpush1.bf16.msra.mxu0 %v4450
  %5300 = vmatprep.subr.bf16.mxu0 %v4459
  %5301 = vmatpush1.bf16.msra.mxu0 %v4458
  %5302 = vmatprep.subr.bf16.mxu0 %v4467
  %5303 = vmatpush1.bf16.msra.mxu0 %v4466
  %5304 = vmatprep.subr.bf16.mxu0 %v4475
  %5305 = vmatpush1.bf16.msra.mxu0 %v4474
  %5306 = vmatprep.subr.bf16.mxu0 %v4483
  %5307 = vmatpush1.bf16.msra.mxu0 %v4482
  %5308 = vmatprep.subr.bf16.mxu0 %v4491
  %5309 = vmatpush1.bf16.msra.mxu0 %v4490
  %5310 = vmatprep.subr.bf16.mxu0 %v4499
  %5311 = vmatpush1.bf16.msra.mxu0 %v4498
  %5312 = vmatprep.subr.bf16.mxu0 %v4507
  %5313 = vmatpush1.bf16.msra.mxu0 %v4506
  %5314 = vmatprep.subr.bf16.mxu0 %v4515
  %5315 = vmatpush1.bf16.msra.mxu0 %v4514
  %5316 = vmatprep.subr.bf16.mxu0 %v4523
  %5317 = vmatpush1.bf16.msra.mxu0 %v4522
  %5318 = vmatprep.subr.bf16.mxu0 %v4531
  %5319 = vmatpush1.bf16.msra.mxu0 %v4530
  %5320 = vmatprep.subr.bf16.mxu0 %v4539
  %5321 = vmatpush1.bf16.msra.mxu0 %v4538
  %5322 = vmatprep.subr.bf16.mxu0 %v4547
  %5323 = vmatpush1.bf16.msra.mxu0 %v4546
  %5324 = vmatprep.subr.bf16.mxu0 %v4555
  %5325 = vmatpush1.bf16.msra.mxu0 %v4554
  %5326 = vmatprep.subr.bf16.mxu0 %v4563
  %5327 = vmatpush1.bf16.msra.mxu0 %v4562
  %5328 = vmatprep.mubr.bf16.mxu0 %v2093
  %5329 = vmatmul.mubr.bf16.gmra.mrb[0].mxu0 %v2092
  %v5330 = vpop.f32.mrb[0].mxu0
  %v5331 = vadd.f32 %v5288, %v5330
  %v5332 = vpop.f32.mrb[0].mxu0
  %v5333 = vadd.f32 %v5290, %v5332
  %v5334 = vpop.f32.mrb[0].mxu0
  %v5335 = vadd.f32 %v5292, %v5334
  %v5336 = vpop.f32.mrb[0].mxu0
  %v5337 = vadd.f32 %v5294, %v5336
  %5338 = vdwg.mxu0
  %5339 = vmatprep.subr.bf16.mxu0 %v4571
  %5340 = vmatpush1.bf16.msra.mxu0 %v4570
  %5341 = vmatprep.subr.bf16.mxu0 %v4579
  %5342 = vmatpush1.bf16.msra.mxu0 %v4578
  %5343 = vmatprep.subr.bf16.mxu0 %v4587
  %5344 = vmatpush1.bf16.msra.mxu0 %v4586
  %5345 = vmatprep.subr.bf16.mxu0 %v4595
  %5346 = vmatpush1.bf16.msra.mxu0 %v4594
  %5347 = vmatprep.subr.bf16.mxu0 %v4603
  %5348 = vmatpush1.bf16.msra.mxu0 %v4602
  %5349 = vmatprep.subr.bf16.mxu0 %v4611
  %5350 = vmatpush1.bf16.msra.mxu0 %v4610
  %5351 = vmatprep.subr.bf16.mxu0 %v4619
  %5352 = vmatpush1.bf16.msra.mxu0 %v4618
  %5353 = vmatprep.subr.bf16.mxu0 %v4627
  %5354 = vmatpush1.bf16.msra.mxu0 %v4626
  %5355 = vmatprep.subr.bf16.mxu0 %v4635
  %5356 = vmatpush1.bf16.msra.mxu0 %v4634
  %5357 = vmatprep.subr.bf16.mxu0 %v4643
  %5358 = vmatpush1.bf16.msra.mxu0 %v4642
  %5359 = vmatprep.subr.bf16.mxu0 %v4651
  %5360 = vmatpush1.bf16.msra.mxu0 %v4650
  %5361 = vmatprep.subr.bf16.mxu0 %v4659
  %5362 = vmatpush1.bf16.msra.mxu0 %v4658
  %5363 = vmatprep.subr.bf16.mxu0 %v4667
  %5364 = vmatpush1.bf16.msra.mxu0 %v4666
  %5365 = vmatprep.subr.bf16.mxu0 %v4675
  %5366 = vmatpush1.bf16.msra.mxu0 %v4674
  %5367 = vmatprep.subr.bf16.mxu0 %v4683
  %5368 = vmatpush1.bf16.msra.mxu0 %v4682
  %5369 = vmatprep.subr.bf16.mxu0 %v4691
  %5370 = vmatpush1.bf16.msra.mxu0 %v4690
  %5371 = vmatprep.mubr.bf16.mxu0 %v2095
  %5372 = vmatmul.mubr.bf16.gmra.mrb[0].mxu0 %v2094
  %v5373 = vpop.f32.mrb[0].mxu0
  %v5374 = vadd.f32 %v5331, %v5373
  %v5375 = vpop.f32.mrb[0].mxu0
  %v5376 = vadd.f32 %v5333, %v5375
  %v5377 = vpop.f32.mrb[0].mxu0
  %v5378 = vadd.f32 %v5335, %v5377
  %v5379 = vpop.f32.mrb[0].mxu0
  %v5380 = vadd.f32 %v5337, %v5379
  %5381 = vdwg.mxu0
  %5382 = vmatprep.subr.bf16.mxu0 %v4189
  %5383 = vmatpush1.bf16.msra.mxu0 %v4188
  %5384 = vmatprep.subr.bf16.mxu0 %v4197
  %5385 = vmatpush1.bf16.msra.mxu0 %v4196
  %5386 = vmatprep.subr.bf16.mxu0 %v4205
  %5387 = vmatpush1.bf16.msra.mxu0 %v4204
  %5388 = vmatprep.subr.bf16.mxu0 %v4213
  %5389 = vmatpush1.bf16.msra.mxu0 %v4212
  %5390 = vmatprep.subr.bf16.mxu0 %v4221
  %5391 = vmatpush1.bf16.msra.mxu0 %v4220
  %5392 = vmatprep.subr.bf16.mxu0 %v4229
  %5393 = vmatpush1.bf16.msra.mxu0 %v4228
  %5394 = vmatprep.subr.bf16.mxu0 %v4237
  %5395 = vmatpush1.bf16.msra.mxu0 %v4236
  %5396 = vmatprep.subr.bf16.mxu0 %v4245
  %5397 = vmatpush1.bf16.msra.mxu0 %v4244
  %5398 = vmatprep.subr.bf16.mxu0 %v4253
  %5399 = vmatpush1.bf16.msra.mxu0 %v4252
  %5400 = vmatprep.subr.bf16.mxu0 %v4261
  %5401 = vmatpush1.bf16.msra.mxu0 %v4260
  %5402 = vmatprep.subr.bf16.mxu0 %v4269
  %5403 = vmatpush1.bf16.msra.mxu0 %v4268
  %5404 = vmatprep.subr.bf16.mxu0 %v4277
  %5405 = vmatpush1.bf16.msra.mxu0 %v4276
  %5406 = vmatprep.subr.bf16.mxu0 %v4285
  %5407 = vmatpush1.bf16.msra.mxu0 %v4284
  %5408 = vmatprep.subr.bf16.mxu0 %v4293
  %5409 = vmatpush1.bf16.msra.mxu0 %v4292
  %5410 = vmatprep.subr.bf16.mxu0 %v4301
  %5411 = vmatpush1.bf16.msra.mxu0 %v4300
  %5412 = vmatprep.subr.bf16.mxu0 %v4309
  %5413 = vmatpush1.bf16.msra.mxu0 %v4308
  %5414 = vmatprep.mubr.bf16.mxu0 %v2089
  %5415 = vmatmul.mubr.bf16.gmra.mrb[0].mxu0 %v2088
  %v5416 = vpop.f32.mrb[0].mxu0
  %v5417 = vadd.f32 %v2621, %v5416
  %v5418 = vpop.f32.mrb[0].mxu0
  %v5419 = vadd.f32 %v2625, %v5418
  %v5420 = vpop.f32.mrb[0].mxu0
  %v5421 = vadd.f32 %v2621, %v5420
  %v5422 = vpop.f32.mrb[0].mxu0
  %v5423 = vadd.f32 %v2625, %v5422
  %5424 = vdwg.mxu0
  %5425 = vmatprep.subr.bf16.mxu0 %v4317
  %5426 = vmatpush1.bf16.msra.mxu0 %v4316
  %5427 = vmatprep.subr.bf16.mxu0 %v4325
  %5428 = vmatpush1.bf16.msra.mxu0 %v4324
  %5429 = vmatprep.subr.bf16.mxu0 %v4333
  %5430 = vmatpush1.bf16.msra.mxu0 %v4332
  %5431 = vmatprep.subr.bf16.mxu0 %v4341
  %5432 = vmatpush1.bf16.msra.mxu0 %v4340
  %5433 = vmatprep.subr.bf16.mxu0 %v4349
  %5434 = vmatpush1.bf16.msra.mxu0 %v4348
  %5435 = vmatprep.subr.bf16.mxu0 %v4357
  %5436 = vmatpush1.bf16.msra.mxu0 %v4356
  %5437 = vmatprep.subr.bf16.mxu0 %v4365
  %5438 = vmatpush1.bf16.msra.mxu0 %v4364
  %5439 = vmatprep.subr.bf16.mxu0 %v4373
  %5440 = vmatpush1.bf16.msra.mxu0 %v4372
  %5441 = vmatprep.subr.bf16.mxu0 %v4381
  %5442 = vmatpush1.bf16.msra.mxu0 %v4380
  %5443 = vmatprep.subr.bf16.mxu0 %v4389
  %5444 = vmatpush1.bf16.msra.mxu0 %v4388
  %5445 = vmatprep.subr.bf16.mxu0 %v4397
  %5446 = vmatpush1.bf16.msra.mxu0 %v4396
  %5447 = vmatprep.subr.bf16.mxu0 %v4405
  %5448 = vmatpush1.bf16.msra.mxu0 %v4404
  %5449 = vmatprep.subr.bf16.mxu0 %v4413
  %5450 = vmatpush1.bf16.msra.mxu0 %v4412
  %5451 = vmatprep.subr.bf16.mxu0 %v4421
  %5452 = vmatpush1.bf16.msra.mxu0 %v4420
  %5453 = vmatprep.subr.bf16.mxu0 %v4429
  %5454 = vmatpush1.bf16.msra.mxu0 %v4428
  %5455 = vmatprep.subr.bf16.mxu0 %v4437
  %5456 = vmatpush1.bf16.msra.mxu0 %v4436
  %5457 = vmatprep.mubr.bf16.mxu0 %v2091
  %5458 = vmatmul.mubr.bf16.gmra.mrb[0].mxu0 %v2090
  %v5459 = vpop.f32.mrb[0].mxu0
  %v5460 = vadd.f32 %v5417, %v5459
  %v5461 = vpop.f32.mrb[0].mxu0
  %v5462 = vadd.f32 %v5419, %v5461
  %v5463 = vpop.f32.mrb[0].mxu0
  %v5464 = vadd.f32 %v5421, %v5463
  %v5465 = vpop.f32.mrb[0].mxu0
  %v5466 = vadd.f32 %v5423, %v5465
  %5467 = vdwg.mxu0
  %5468 = vmatprep.subr.bf16.mxu0 %v4445
  %5469 = vmatpush1.bf16.msra.mxu0 %v4444
  %5470 = vmatprep.subr.bf16.mxu0 %v4453
  %5471 = vmatpush1.bf16.msra.mxu0 %v4452
  %5472 = vmatprep.subr.bf16.mxu0 %v4461
  %5473 = vmatpush1.bf16.msra.mxu0 %v4460
  %5474 = vmatprep.subr.bf16.mxu0 %v4469
  %5475 = vmatpush1.bf16.msra.mxu0 %v4468
  %5476 = vmatprep.subr.bf16.mxu0 %v4477
  %5477 = vmatpush1.bf16.msra.mxu0 %v4476
  %5478 = vmatprep.subr.bf16.mxu0 %v4485
  %5479 = vmatpush1.bf16.msra.mxu0 %v4484
  %5480 = vmatprep.subr.bf16.mxu0 %v4493
  %5481 = vmatpush1.bf16.msra.mxu0 %v4492
  %5482 = vmatprep.subr.bf16.mxu0 %v4501
  %5483 = vmatpush1.bf16.msra.mxu0 %v4500
  %5484 = vmatprep.subr.bf16.mxu0 %v4509
  %5485 = vmatpush1.bf16.msra.mxu0 %v4508
  %5486 = vmatprep.subr.bf16.mxu0 %v4517
  %5487 = vmatpush1.bf16.msra.mxu0 %v4516
  %5488 = vmatprep.subr.bf16.mxu0 %v4525
  %5489 = vmatpush1.bf16.msra.mxu0 %v4524
  %5490 = vmatprep.subr.bf16.mxu0 %v4533
  %5491 = vmatpush1.bf16.msra.mxu0 %v4532
  %5492 = vmatprep.subr.bf16.mxu0 %v4541
  %5493 = vmatpush1.bf16.msra.mxu0 %v4540
  %5494 = vmatprep.subr.bf16.mxu0 %v4549
  %5495 = vmatpush1.bf16.msra.mxu0 %v4548
  %5496 = vmatprep.subr.bf16.mxu0 %v4557
  %5497 = vmatpush1.bf16.msra.mxu0 %v4556
  %5498 = vmatprep.subr.bf16.mxu0 %v4565
  %5499 = vmatpush1.bf16.msra.mxu0 %v4564
  %5500 = vmatprep.mubr.bf16.mxu0 %v2093
  %5501 = vmatmul.mubr.bf16.gmra.mrb[0].mxu0 %v2092
  %v5502 = vpop.f32.mrb[0].mxu0
  %v5503 = vadd.f32 %v5460, %v5502
  %v5504 = vpop.f32.mrb[0].mxu0
  %v5505 = vadd.f32 %v5462, %v5504
  %v5506 = vpop.f32.mrb[0].mxu0
  %v5507 = vadd.f32 %v5464, %v5506
  %v5508 = vpop.f32.mrb[0].mxu0
  %v5509 = vadd.f32 %v5466, %v5508
  %5510 = vdwg.mxu0
  %5511 = vmatprep.subr.bf16.mxu0 %v4573
  %5512 = vmatpush1.bf16.msra.mxu0 %v4572
  %5513 = vmatprep.subr.bf16.mxu0 %v4581
  %5514 = vmatpush1.bf16.msra.mxu0 %v4580
  %5515 = vmatprep.subr.bf16.mxu0 %v4589
  %5516 = vmatpush1.bf16.msra.mxu0 %v4588
  %5517 = vmatprep.subr.bf16.mxu0 %v4597
  %5518 = vmatpush1.bf16.msra.mxu0 %v4596
  %5519 = vmatprep.subr.bf16.mxu0 %v4605
  %5520 = vmatpush1.bf16.msra.mxu0 %v4604
  %5521 = vmatprep.subr.bf16.mxu0 %v4613
  %5522 = vmatpush1.bf16.msra.mxu0 %v4612
  %5523 = vmatprep.subr.bf16.mxu0 %v4621
  %5524 = vmatpush1.bf16.msra.mxu0 %v4620
  %5525 = vmatprep.subr.bf16.mxu0 %v4629
  %5526 = vmatpush1.bf16.msra.mxu0 %v4628
  %5527 = vmatprep.subr.bf16.mxu0 %v4637
  %5528 = vmatpush1.bf16.msra.mxu0 %v4636
  %5529 = vmatprep.subr.bf16.mxu0 %v4645
  %5530 = vmatpush1.bf16.msra.mxu0 %v4644
  %5531 = vmatprep.subr.bf16.mxu0 %v4653
  %5532 = vmatpush1.bf16.msra.mxu0 %v4652
  %5533 = vmatprep.subr.bf16.mxu0 %v4661
  %5534 = vmatpush1.bf16.msra.mxu0 %v4660
  %5535 = vmatprep.subr.bf16.mxu0 %v4669
  %5536 = vmatpush1.bf16.msra.mxu0 %v4668
  %5537 = vmatprep.subr.bf16.mxu0 %v4677
  %5538 = vmatpush1.bf16.msra.mxu0 %v4676
  %5539 = vmatprep.subr.bf16.mxu0 %v4685
  %5540 = vmatpush1.bf16.msra.mxu0 %v4684
  %5541 = vmatprep.subr.bf16.mxu0 %v4693
  %5542 = vmatpush1.bf16.msra.mxu0 %v4692
  %5543 = vmatprep.mubr.bf16.mxu0 %v2095
  %5544 = vmatmul.mubr.bf16.gmra.mrb[0].mxu0 %v2094
  %v5545 = vpop.f32.mrb[0].mxu0
  %v5546 = vadd.f32 %v5503, %v5545
  %v5547 = vpop.f32.mrb[0].mxu0
  %v5548 = vadd.f32 %v5505, %v5547
  %v5549 = vpop.f32.mrb[0].mxu0
  %v5550 = vadd.f32 %v5507, %v5549
  %v5551 = vpop.f32.mrb[0].mxu0
  %v5552 = vadd.f32 %v5509, %v5551
  %5553 = vdwg.mxu0
  %5554 = vmatprep.subr.bf16.mxu0 %v4191
  %5555 = vmatpush1.bf16.msra.mxu0 %v4190
  %5556 = vmatprep.subr.bf16.mxu0 %v4199
  %5557 = vmatpush1.bf16.msra.mxu0 %v4198
  %5558 = vmatprep.subr.bf16.mxu0 %v4207
  %5559 = vmatpush1.bf16.msra.mxu0 %v4206
  %5560 = vmatprep.subr.bf16.mxu0 %v4215
  %5561 = vmatpush1.bf16.msra.mxu0 %v4214
  %5562 = vmatprep.subr.bf16.mxu0 %v4223
  %5563 = vmatpush1.bf16.msra.mxu0 %v4222
  %5564 = vmatprep.subr.bf16.mxu0 %v4231
  %5565 = vmatpush1.bf16.msra.mxu0 %v4230
  %5566 = vmatprep.subr.bf16.mxu0 %v4239
  %5567 = vmatpush1.bf16.msra.mxu0 %v4238
  %5568 = vmatprep.subr.bf16.mxu0 %v4247
  %5569 = vmatpush1.bf16.msra.mxu0 %v4246
  %5570 = vmatprep.subr.bf16.mxu0 %v4255
  %5571 = vmatpush1.bf16.msra.mxu0 %v4254
  %5572 = vmatprep.subr.bf16.mxu0 %v4263
  %5573 = vmatpush1.bf16.msra.mxu0 %v4262
  %5574 = vmatprep.subr.bf16.mxu0 %v4271
  %5575 = vmatpush1.bf16.msra.mxu0 %v4270
  %5576 = vmatprep.subr.bf16.mxu0 %v4279
  %5577 = vmatpush1.bf16.msra.mxu0 %v4278
  %5578 = vmatprep.subr.bf16.mxu0 %v4287
  %5579 = vmatpush1.bf16.msra.mxu0 %v4286
  %5580 = vmatprep.subr.bf16.mxu0 %v4295
  %5581 = vmatpush1.bf16.msra.mxu0 %v4294
  %5582 = vmatprep.subr.bf16.mxu0 %v4303
  %5583 = vmatpush1.bf16.msra.mxu0 %v4302
  %5584 = vmatprep.subr.bf16.mxu0 %v4311
  %5585 = vmatpush1.bf16.msra.mxu0 %v4310
  %5586 = vmatprep.mubr.bf16.mxu0 %v2089
  %5587 = vmatmul.mubr.bf16.gmra.mrb[0].mxu0 %v2088
  %v5588 = vpop.f32.mrb[0].mxu0
  %v5589 = vadd.f32 %v2629, %v5588
  %v5590 = vpop.f32.mrb[0].mxu0
  %v5591 = vadd.f32 %v2633, %v5590
  %v5592 = vpop.f32.mrb[0].mxu0
  %v5593 = vadd.f32 %v2629, %v5592
  %v5594 = vpop.f32.mrb[0].mxu0
  %v5595 = vadd.f32 %v2633, %v5594
  %5596 = vdwg.mxu0
  %5597 = vmatprep.subr.bf16.mxu0 %v4319
  %5598 = vmatpush1.bf16.msra.mxu0 %v4318
  %5599 = vmatprep.subr.bf16.mxu0 %v4327
  %5600 = vmatpush1.bf16.msra.mxu0 %v4326
  %5601 = vmatprep.subr.bf16.mxu0 %v4335
  %5602 = vmatpush1.bf16.msra.mxu0 %v4334
  %5603 = vmatprep.subr.bf16.mxu0 %v4343
  %5604 = vmatpush1.bf16.msra.mxu0 %v4342
  %5605 = vmatprep.subr.bf16.mxu0 %v4351
  %5606 = vmatpush1.bf16.msra.mxu0 %v4350
  %5607 = vmatprep.subr.bf16.mxu0 %v4359
  %5608 = vmatpush1.bf16.msra.mxu0 %v4358
  %5609 = vmatprep.subr.bf16.mxu0 %v4367
  %5610 = vmatpush1.bf16.msra.mxu0 %v4366
  %5611 = vmatprep.subr.bf16.mxu0 %v4375
  %5612 = vmatpush1.bf16.msra.mxu0 %v4374
  %5613 = vmatprep.subr.bf16.mxu0 %v4383
  %5614 = vmatpush1.bf16.msra.mxu0 %v4382
  %5615 = vmatprep.subr.bf16.mxu0 %v4391
  %5616 = vmatpush1.bf16.msra.mxu0 %v4390
  %5617 = vmatprep.subr.bf16.mxu0 %v4399
  %5618 = vmatpush1.bf16.msra.mxu0 %v4398
  %5619 = vmatprep.subr.bf16.mxu0 %v4407
  %5620 = vmatpush1.bf16.msra.mxu0 %v4406
  %5621 = vmatprep.subr.bf16.mxu0 %v4415
  %5622 = vmatpush1.bf16.msra.mxu0 %v4414
  %5623 = vmatprep.subr.bf16.mxu0 %v4423
  %5624 = vmatpush1.bf16.msra.mxu0 %v4422
  %5625 = vmatprep.subr.bf16.mxu0 %v4431
  %5626 = vmatpush1.bf16.msra.mxu0 %v4430
  %5627 = vmatprep.subr.bf16.mxu0 %v4439
  %5628 = vmatpush1.bf16.msra.mxu0 %v4438
  %5629 = vmatprep.mubr.bf16.mxu0 %v2091
  %5630 = vmatmul.mubr.bf16.gmra.mrb[0].mxu0 %v2090
  %v5631 = vpop.f32.mrb[0].mxu0
  %v5632 = vadd.f32 %v5589, %v5631
  %v5633 = vpop.f32.mrb[0].mxu0
  %v5634 = vadd.f32 %v5591, %v5633
  %v5635 = vpop.f32.mrb[0].mxu0
  %v5636 = vadd.f32 %v5593, %v5635
  %v5637 = vpop.f32.mrb[0].mxu0
  %v5638 = vadd.f32 %v5595, %v5637
  %5639 = vdwg.mxu0
  %5640 = vmatprep.subr.bf16.mxu0 %v4447
  %5641 = vmatpush1.bf16.msra.mxu0 %v4446
  %5642 = vmatprep.subr.bf16.mxu0 %v4455
  %5643 = vmatpush1.bf16.msra.mxu0 %v4454
  %5644 = vmatprep.subr.bf16.mxu0 %v4463
  %5645 = vmatpush1.bf16.msra.mxu0 %v4462
  %5646 = vmatprep.subr.bf16.mxu0 %v4471
  %5647 = vmatpush1.bf16.msra.mxu0 %v4470
  %5648 = vmatprep.subr.bf16.mxu0 %v4479
  %5649 = vmatpush1.bf16.msra.mxu0 %v4478
  %5650 = vmatprep.subr.bf16.mxu0 %v4487
  %5651 = vmatpush1.bf16.msra.mxu0 %v4486
  %5652 = vmatprep.subr.bf16.mxu0 %v4495
  %5653 = vmatpush1.bf16.msra.mxu0 %v4494
  %5654 = vmatprep.subr.bf16.mxu0 %v4503
  %5655 = vmatpush1.bf16.msra.mxu0 %v4502
  %5656 = vmatprep.subr.bf16.mxu0 %v4511
  %5657 = vmatpush1.bf16.msra.mxu0 %v4510
  %5658 = vmatprep.subr.bf16.mxu0 %v4519
  %5659 = vmatpush1.bf16.msra.mxu0 %v4518
  %5660 = vmatprep.subr.bf16.mxu0 %v4527
  %5661 = vmatpush1.bf16.msra.mxu0 %v4526
  %5662 = vmatprep.subr.bf16.mxu0 %v4535
  %5663 = vmatpush1.bf16.msra.mxu0 %v4534
  %5664 = vmatprep.subr.bf16.mxu0 %v4543
  %5665 = vmatpush1.bf16.msra.mxu0 %v4542
  %5666 = vmatprep.subr.bf16.mxu0 %v4551
  %5667 = vmatpush1.bf16.msra.mxu0 %v4550
  %5668 = vmatprep.subr.bf16.mxu0 %v4559
  %5669 = vmatpush1.bf16.msra.mxu0 %v4558
  %5670 = vmatprep.subr.bf16.mxu0 %v4567
  %5671 = vmatpush1.bf16.msra.mxu0 %v4566
  %5672 = vmatprep.mubr.bf16.mxu0 %v2093
  %5673 = vmatmul.mubr.bf16.gmra.mrb[0].mxu0 %v2092
  %v5674 = vpop.f32.mrb[0].mxu0
  %v5675 = vadd.f32 %v5632, %v5674
  %v5676 = vpop.f32.mrb[0].mxu0
  %v5677 = vadd.f32 %v5634, %v5676
  %v5678 = vpop.f32.mrb[0].mxu0
  %v5679 = vadd.f32 %v5636, %v5678
  %v5680 = vpop.f32.mrb[0].mxu0
  %v5681 = vadd.f32 %v5638, %v5680
  %5682 = vdwg.mxu0
  %5683 = vmatprep.subr.bf16.mxu0 %v4575
  %5684 = vmatpush1.bf16.msra.mxu0 %v4574
  %5685 = vmatprep.subr.bf16.mxu0 %v4583
  %5686 = vmatpush1.bf16.msra.mxu0 %v4582
  %5687 = vmatprep.subr.bf16.mxu0 %v4591
  %5688 = vmatpush1.bf16.msra.mxu0 %v4590
  %5689 = vmatprep.subr.bf16.mxu0 %v4599
  %5690 = vmatpush1.bf16.msra.mxu0 %v4598
  %5691 = vmatprep.subr.bf16.mxu0 %v4607
  %5692 = vmatpush1.bf16.msra.mxu0 %v4606
  %5693 = vmatprep.subr.bf16.mxu0 %v4615
  %5694 = vmatpush1.bf16.msra.mxu0 %v4614
  %5695 = vmatprep.subr.bf16.mxu0 %v4623
  %5696 = vmatpush1.bf16.msra.mxu0 %v4622
  %5697 = vmatprep.subr.bf16.mxu0 %v4631
  %5698 = vmatpush1.bf16.msra.mxu0 %v4630
  %5699 = vmatprep.subr.bf16.mxu0 %v4639
  %5700 = vmatpush1.bf16.msra.mxu0 %v4638
  %5701 = vmatprep.subr.bf16.mxu0 %v4647
  %5702 = vmatpush1.bf16.msra.mxu0 %v4646
  %5703 = vmatprep.subr.bf16.mxu0 %v4655
  %5704 = vmatpush1.bf16.msra.mxu0 %v4654
  %5705 = vmatprep.subr.bf16.mxu0 %v4663
  %5706 = vmatpush1.bf16.msra.mxu0 %v4662
  %5707 = vmatprep.subr.bf16.mxu0 %v4671
  %5708 = vmatpush1.bf16.msra.mxu0 %v4670
  %5709 = vmatprep.subr.bf16.mxu0 %v4679
  %5710 = vmatpush1.bf16.msra.mxu0 %v4678
  %5711 = vmatprep.subr.bf16.mxu0 %v4687
  %5712 = vmatpush1.bf16.msra.mxu0 %v4686
  %5713 = vmatprep.subr.bf16.mxu0 %v4695
  %5714 = vmatpush1.bf16.msra.mxu0 %v4694
  %5715 = vmatprep.mubr.bf16.mxu0 %v2095
  %5716 = vmatmul.mubr.bf16.gmra.mrb[0].mxu0 %v2094
  %v5717 = vpop.f32.mrb[0].mxu0
  %v5718 = vadd.f32 %v5675, %v5717
  %v5719 = vpop.f32.mrb[0].mxu0
  %v5720 = vadd.f32 %v5677, %v5719
  %v5721 = vpop.f32.mrb[0].mxu0
  %v5722 = vadd.f32 %v5679, %v5721
  %v5723 = vpop.f32.mrb[0].mxu0
  %v5724 = vadd.f32 %v5681, %v5723
  %5725 = vdwg.mxu0
  %5726 = vmatprep.subr.bf16.mxu0 %v4193
  %5727 = vmatpush1.bf16.msra.mxu0 %v4192
  %5728 = vmatprep.subr.bf16.mxu0 %v4201
  %5729 = vmatpush1.bf16.msra.mxu0 %v4200
  %5730 = vmatprep.subr.bf16.mxu0 %v4209
  %5731 = vmatpush1.bf16.msra.mxu0 %v4208
  %5732 = vmatprep.subr.bf16.mxu0 %v4217
  %5733 = vmatpush1.bf16.msra.mxu0 %v4216
  %5734 = vmatprep.subr.bf16.mxu0 %v4225
  %5735 = vmatpush1.bf16.msra.mxu0 %v4224
  %5736 = vmatprep.subr.bf16.mxu0 %v4233
  %5737 = vmatpush1.bf16.msra.mxu0 %v4232
  %5738 = vmatprep.subr.bf16.mxu0 %v4241
  %5739 = vmatpush1.bf16.msra.mxu0 %v4240
  %5740 = vmatprep.subr.bf16.mxu0 %v4249
  %5741 = vmatpush1.bf16.msra.mxu0 %v4248
  %5742 = vmatprep.subr.bf16.mxu0 %v4257
  %5743 = vmatpush1.bf16.msra.mxu0 %v4256
  %5744 = vmatprep.subr.bf16.mxu0 %v4265
  %5745 = vmatpush1.bf16.msra.mxu0 %v4264
  %5746 = vmatprep.subr.bf16.mxu0 %v4273
  %5747 = vmatpush1.bf16.msra.mxu0 %v4272
  %5748 = vmatprep.subr.bf16.mxu0 %v4281
  %5749 = vmatpush1.bf16.msra.mxu0 %v4280
  %5750 = vmatprep.subr.bf16.mxu0 %v4289
  %5751 = vmatpush1.bf16.msra.mxu0 %v4288
  %5752 = vmatprep.subr.bf16.mxu0 %v4297
  %5753 = vmatpush1.bf16.msra.mxu0 %v4296
  %5754 = vmatprep.subr.bf16.mxu0 %v4305
  %5755 = vmatpush1.bf16.msra.mxu0 %v4304
  %5756 = vmatprep.subr.bf16.mxu0 %v4313
  %5757 = vmatpush1.bf16.msra.mxu0 %v4312
  %5758 = vmatprep.mubr.bf16.mxu0 %v2089
  %5759 = vmatmul.mubr.bf16.gmra.mrb[0].mxu0 %v2088
  %v5760 = vpop.f32.mrb[0].mxu0
  %v5761 = vadd.f32 %v2637, %v5760
  %v5762 = vpop.f32.mrb[0].mxu0
  %v5763 = vadd.f32 %v2641, %v5762
  %v5764 = vpop.f32.mrb[0].mxu0
  %v5765 = vadd.f32 %v2637, %v5764
  %v5766 = vpop.f32.mrb[0].mxu0
  %v5767 = vadd.f32 %v2641, %v5766
  %5768 = vdwg.mxu0
  %5769 = vmatprep.subr.bf16.mxu0 %v4321
  %5770 = vmatpush1.bf16.msra.mxu0 %v4320
  %5771 = vmatprep.subr.bf16.mxu0 %v4329
  %5772 = vmatpush1.bf16.msra.mxu0 %v4328
  %5773 = vmatprep.subr.bf16.mxu0 %v4337
  %5774 = vmatpush1.bf16.msra.mxu0 %v4336
  %5775 = vmatprep.subr.bf16.mxu0 %v4345
  %5776 = vmatpush1.bf16.msra.mxu0 %v4344
  %5777 = vmatprep.subr.bf16.mxu0 %v4353
  %5778 = vmatpush1.bf16.msra.mxu0 %v4352
  %5779 = vmatprep.subr.bf16.mxu0 %v4361
  %5780 = vmatpush1.bf16.msra.mxu0 %v4360
  %5781 = vmatprep.subr.bf16.mxu0 %v4369
  %5782 = vmatpush1.bf16.msra.mxu0 %v4368
  %5783 = vmatprep.subr.bf16.mxu0 %v4377
  %5784 = vmatpush1.bf16.msra.mxu0 %v4376
  %5785 = vmatprep.subr.bf16.mxu0 %v4385
  %5786 = vmatpush1.bf16.msra.mxu0 %v4384
  %5787 = vmatprep.subr.bf16.mxu0 %v4393
  %5788 = vmatpush1.bf16.msra.mxu0 %v4392
  %5789 = vmatprep.subr.bf16.mxu0 %v4401
  %5790 = vmatpush1.bf16.msra.mxu0 %v4400
  %5791 = vmatprep.subr.bf16.mxu0 %v4409
  %5792 = vmatpush1.bf16.msra.mxu0 %v4408
  %5793 = vmatprep.subr.bf16.mxu0 %v4417
  %5794 = vmatpush1.bf16.msra.mxu0 %v4416
  %5795 = vmatprep.subr.bf16.mxu0 %v4425
  %5796 = vmatpush1.bf16.msra.mxu0 %v4424
  %5797 = vmatprep.subr.bf16.mxu0 %v4433
  %5798 = vmatpush1.bf16.msra.mxu0 %v4432
  %5799 = vmatprep.subr.bf16.mxu0 %v4441
  %5800 = vmatpush1.bf16.msra.mxu0 %v4440
  %5801 = vmatprep.mubr.bf16.mxu0 %v2091
  %5802 = vmatmul.mubr.bf16.gmra.mrb[0].mxu0 %v2090
  %v5803 = vpop.f32.mrb[0].mxu0
  %v5804 = vadd.f32 %v5761, %v5803
  %v5805 = vpop.f32.mrb[0].mxu0
  %v5806 = vadd.f32 %v5763, %v5805
  %v5807 = vpop.f32.mrb[0].mxu0
  %v5808 = vadd.f32 %v5765, %v5807
  %v5809 = vpop.f32.mrb[0].mxu0
  %v5810 = vadd.f32 %v5767, %v5809
  %5811 = vdwg.mxu0
  %5812 = vmatprep.subr.bf16.mxu0 %v4449
  %5813 = vmatpush1.bf16.msra.mxu0 %v4448
  %5814 = vmatprep.subr.bf16.mxu0 %v4457
  %5815 = vmatpush1.bf16.msra.mxu0 %v4456
  %5816 = vmatprep.subr.bf16.mxu0 %v4465
  %5817 = vmatpush1.bf16.msra.mxu0 %v4464
  %5818 = vmatprep.subr.bf16.mxu0 %v4473
  %5819 = vmatpush1.bf16.msra.mxu0 %v4472
  %5820 = vmatprep.subr.bf16.mxu0 %v4481
  %5821 = vmatpush1.bf16.msra.mxu0 %v4480
  %5822 = vmatprep.subr.bf16.mxu0 %v4489
  %5823 = vmatpush1.bf16.msra.mxu0 %v4488
  %5824 = vmatprep.subr.bf16.mxu0 %v4497
  %5825 = vmatpush1.bf16.msra.mxu0 %v4496
  %5826 = vmatprep.subr.bf16.mxu0 %v4505
  %5827 = vmatpush1.bf16.msra.mxu0 %v4504
  %5828 = vmatprep.subr.bf16.mxu0 %v4513
  %5829 = vmatpush1.bf16.msra.mxu0 %v4512
  %5830 = vmatprep.subr.bf16.mxu0 %v4521
  %5831 = vmatpush1.bf16.msra.mxu0 %v4520
  %5832 = vmatprep.subr.bf16.mxu0 %v4529
  %5833 = vmatpush1.bf16.msra.mxu0 %v4528
  %5834 = vmatprep.subr.bf16.mxu0 %v4537
  %5835 = vmatpush1.bf16.msra.mxu0 %v4536
  %5836 = vmatprep.subr.bf16.mxu0 %v4545
  %5837 = vmatpush1.bf16.msra.mxu0 %v4544
  %5838 = vmatprep.subr.bf16.mxu0 %v4553
  %5839 = vmatpush1.bf16.msra.mxu0 %v4552
  %5840 = vmatprep.subr.bf16.mxu0 %v4561
  %5841 = vmatpush1.bf16.msra.mxu0 %v4560
  %5842 = vmatprep.subr.bf16.mxu0 %v4569
  %5843 = vmatpush1.bf16.msra.mxu0 %v4568
  %5844 = vmatprep.mubr.bf16.mxu0 %v2093
  %5845 = vmatmul.mubr.bf16.gmra.mrb[0].mxu0 %v2092
  %v5846 = vpop.f32.mrb[0].mxu0
  %v5847 = vadd.f32 %v5804, %v5846
  %v5848 = vpop.f32.mrb[0].mxu0
  %v5849 = vadd.f32 %v5806, %v5848
  %v5850 = vpop.f32.mrb[0].mxu0
  %v5851 = vadd.f32 %v5808, %v5850
  %v5852 = vpop.f32.mrb[0].mxu0
  %v5853 = vadd.f32 %v5810, %v5852
  %5854 = vdwg.mxu0
  %5855 = vmatprep.subr.bf16.mxu0 %v4577
  %5856 = vmatpush1.bf16.msra.mxu0 %v4576
  %5857 = vmatprep.subr.bf16.mxu0 %v4585
  %5858 = vmatpush1.bf16.msra.mxu0 %v4584
  %5859 = vmatprep.subr.bf16.mxu0 %v4593
  %5860 = vmatpush1.bf16.msra.mxu0 %v4592
  %5861 = vmatprep.subr.bf16.mxu0 %v4601
  %5862 = vmatpush1.bf16.msra.mxu0 %v4600
  %5863 = vmatprep.subr.bf16.mxu0 %v4609
  %5864 = vmatpush1.bf16.msra.mxu0 %v4608
  %5865 = vmatprep.subr.bf16.mxu0 %v4617
  %5866 = vmatpush1.bf16.msra.mxu0 %v4616
  %5867 = vmatprep.subr.bf16.mxu0 %v4625
  %5868 = vmatpush1.bf16.msra.mxu0 %v4624
  %5869 = vmatprep.subr.bf16.mxu0 %v4633
  %5870 = vmatpush1.bf16.msra.mxu0 %v4632
  %5871 = vmatprep.subr.bf16.mxu0 %v4641
  %5872 = vmatpush1.bf16.msra.mxu0 %v4640
  %5873 = vmatprep.subr.bf16.mxu0 %v4649
  %5874 = vmatpush1.bf16.msra.mxu0 %v4648
  %5875 = vmatprep.subr.bf16.mxu0 %v4657
  %5876 = vmatpush1.bf16.msra.mxu0 %v4656
  %5877 = vmatprep.subr.bf16.mxu0 %v4665
  %5878 = vmatpush1.bf16.msra.mxu0 %v4664
  %5879 = vmatprep.subr.bf16.mxu0 %v4673
  %5880 = vmatpush1.bf16.msra.mxu0 %v4672
  %5881 = vmatprep.subr.bf16.mxu0 %v4681
  %5882 = vmatpush1.bf16.msra.mxu0 %v4680
  %5883 = vmatprep.subr.bf16.mxu0 %v4689
  %5884 = vmatpush1.bf16.msra.mxu0 %v4688
  %5885 = vmatprep.subr.bf16.mxu0 %v4697
  %5886 = vmatpush1.bf16.msra.mxu0 %v4696
  %5887 = vmatprep.mubr.bf16.mxu0 %v2095
  %5888 = vmatmul.mubr.bf16.gmra.mrb[0].mxu0 %v2094
  %v5889 = vpop.f32.mrb[0].mxu0
  %v5890 = vadd.f32 %v5847, %v5889
  %v5891 = vpop.f32.mrb[0].mxu0
  %v5892 = vadd.f32 %v5849, %v5891
  %v5893 = vpop.f32.mrb[0].mxu0
  %v5894 = vadd.f32 %v5851, %v5893
  %v5895 = vpop.f32.mrb[0].mxu0
  %v5896 = vadd.f32 %v5853, %v5895
  %5897 = vdwg.mxu0
  %v5898 = vmax.f32 %v5374, 0.0
  %v5899 = vmax.f32 %v5376, 0.0
  %v5900 = vmax.f32 %v5546, 0.0
  %v5901 = vmax.f32 %v5548, 0.0
  %v5902 = vmax.f32 %v5718, 0.0
  %v5903 = vmax.f32 %v5720, 0.0
  %v5904 = vmax.f32 %v5890, 0.0
  %v5905 = vmax.f32 %v5892, 0.0
  %v5906 = vmax.f32 %v5378, 0.0
  %v5907 = vmax.f32 %v5380, 0.0
  %v5908 = vmax.f32 %v5550, 0.0
  %v5909 = vmax.f32 %v5552, 0.0
  %v5910 = vmax.f32 %v5722, 0.0
  %v5911 = vmax.f32 %v5724, 0.0
  %v5912 = vmax.f32 %v5894, 0.0
  %v5913 = vmax.f32 %v5896, 0.0
  %v5914 = vld [vmem:[%s7] sm:$0xff]
  %v5916 = vlaneseq
  %v5917 = vshrl.u32 %v5916, 7
  %v5918 = vsub.s32 0, %v5917
  %v5919 = vrot.slane %v5914, %v5918
  %v5920 = vlaneseq
  %v5921 = vshrl.u32 %v5920, 7
  %v5922 = vsub.s32 1, %v5921
  %v5923 = vrot.slane %v5914, %v5922
  %v5924 = vlaneseq
  %v5925 = vshrl.u32 %v5924, 7
  %v5926 = vsub.s32 2, %v5925
  %v5927 = vrot.slane %v5914, %v5926
  %v5928 = vlaneseq
  %v5929 = vshrl.u32 %v5928, 7
  %v5930 = vsub.s32 3, %v5929
  %v5931 = vrot.slane %v5914, %v5930
  %v5932 = vlaneseq
  %v5933 = vshrl.u32 %v5932, 7
  %v5934 = vsub.s32 4, %v5933
  %v5935 = vrot.slane %v5914, %v5934
  %v5936 = vlaneseq
  %v5937 = vshrl.u32 %v5936, 7
  %v5938 = vsub.s32 5, %v5937
  %v5939 = vrot.slane %v5914, %v5938
  %v5940 = vlaneseq
  %v5941 = vshrl.u32 %v5940, 7
  %v5942 = vsub.s32 6, %v5941
  %v5943 = vrot.slane %v5914, %v5942
  %v5944 = vlaneseq
  %v5945 = vshrl.u32 %v5944, 7
  %v5946 = vsub.s32 7, %v5945
  %v5947 = vrot.slane %v5914, %v5946
  %v5956 = vmul.f32 %v5898, %v5919
  %v5957 = vmul.f32 %v5899, %v5923
  %v5958 = vmul.f32 %v5900, %v5927
  %v5959 = vmul.f32 %v5901, %v5931
  %v5960 = vmul.f32 %v5902, %v5935
  %v5961 = vmul.f32 %v5903, %v5939
  %v5962 = vmul.f32 %v5904, %v5943
  %v5963 = vmul.f32 %v5905, %v5947
  %v5964 = vmul.f32 %v5906, %v5919
  %v5965 = vmul.f32 %v5907, %v5923
  %v5966 = vmul.f32 %v5908, %v5927
  %v5967 = vmul.f32 %v5909, %v5931
  %v5968 = vmul.f32 %v5910, %v5935
  %v5969 = vmul.f32 %v5911, %v5939
  %v5970 = vmul.f32 %v5912, %v5943
  %v5971 = vmul.f32 %v5913, %v5947
  %v5972 = vadd.f32 %v5956, %v5957
  %v5973 = vadd.f32 %v5972, %v5958
  %v5974 = vadd.f32 %v5973, %v5959
  %v5975 = vadd.f32 %v5974, %v5960
  %v5976 = vadd.f32 %v5975, %v5961
  %v5977 = vadd.f32 %v5976, %v5962
  %v5978 = vadd.f32 %v5977, %v5963
  %5979 = vadd.xlane.f32.xlu0 %v5978
  %v5980 = vpop.xlane.xlu0 %5979
  %v5981 = vadd.f32 %v5964, %v5965
  %v5982 = vadd.f32 %v5981, %v5966
  %v5983 = vadd.f32 %v5982, %v5967
  %v5984 = vadd.f32 %v5983, %v5968
  %v5985 = vadd.f32 %v5984, %v5969
  %v5986 = vadd.f32 %v5985, %v5970
  %v5987 = vadd.f32 %v5986, %v5971
  %5988 = vadd.xlane.f32.xlu0 %v5987
  %v5989 = vpop.xlane.xlu0 %5988
  %s5990 = sld [smem:[#allocation2]]
  %v5991 = vstv %s5990
  %v5992 = vadd.f32 %v5980, %v5991
  %v5993 = vadd.f32 %v5989, %v5991
  %v5994 = vld [vmem:[%s9] sm:$0x1]
  %v5997 = vlaneseq
  %v5998 = vshrl.u32 %v5997, 7
  %v5999 = vsub.s32 0, %v5998
  %v6000 = vrot.slane %v5992, %v5999
  %v6001 = vlaneseq
  %v6002 = vshrl.u32 %v6001, 7
  %v6003 = vsub.s32 1, %v6002
  %v6004 = vrot.slane %v5992, %v6003
  %v6005 = vlaneseq
  %v6006 = vshrl.u32 %v6005, 7
  %v6007 = vsub.s32 2, %v6006
  %v6008 = vrot.slane %v5992, %v6007
  %v6009 = vlaneseq
  %v6010 = vshrl.u32 %v6009, 7
  %v6011 = vsub.s32 3, %v6010
  %v6012 = vrot.slane %v5992, %v6011
  %v6013 = vlaneseq
  %v6014 = vshrl.u32 %v6013, 7
  %v6015 = vsub.s32 4, %v6014
  %v6016 = vrot.slane %v5992, %v6015
  %v6017 = vlaneseq
  %v6018 = vshrl.u32 %v6017, 7
  %v6019 = vsub.s32 5, %v6018
  %v6020 = vrot.slane %v5992, %v6019
  %v6021 = vlaneseq
  %v6022 = vshrl.u32 %v6021, 7
  %v6023 = vsub.s32 6, %v6022
  %v6024 = vrot.slane %v5992, %v6023
  %v6025 = vlaneseq
  %v6026 = vshrl.u32 %v6025, 7
  %v6027 = vsub.s32 7, %v6026
  %v6028 = vrot.slane %v5992, %v6027
  %v6029 = vlaneseq
  %v6030 = vshrl.u32 %v6029, 7
  %v6031 = vsub.s32 0, %v6030
  %v6032 = vrot.slane %v5993, %v6031
  %v6033 = vlaneseq
  %v6034 = vshrl.u32 %v6033, 7
  %v6035 = vsub.s32 1, %v6034
  %v6036 = vrot.slane %v5993, %v6035
  %v6037 = vlaneseq
  %v6038 = vshrl.u32 %v6037, 7
  %v6039 = vsub.s32 2, %v6038
  %v6040 = vrot.slane %v5993, %v6039
  %v6041 = vlaneseq
  %v6042 = vshrl.u32 %v6041, 7
  %v6043 = vsub.s32 3, %v6042
  %v6044 = vrot.slane %v5993, %v6043
  %v6045 = vlaneseq
  %v6046 = vshrl.u32 %v6045, 7
  %v6047 = vsub.s32 4, %v6046
  %v6048 = vrot.slane %v5993, %v6047
  %v6049 = vlaneseq
  %v6050 = vshrl.u32 %v6049, 7
  %v6051 = vsub.s32 5, %v6050
  %v6052 = vrot.slane %v5993, %v6051
  %v6053 = vlaneseq
  %v6054 = vshrl.u32 %v6053, 7
  %v6055 = vsub.s32 6, %v6054
  %v6056 = vrot.slane %v5993, %v6055
  %v6057 = vlaneseq
  %v6058 = vshrl.u32 %v6057, 7
  %v6059 = vsub.s32 7, %v6058
  %v6060 = vrot.slane %v5993, %v6059
  %v6061 = vcombine.low %v6000, %v6004
  %v6062 = vcombine.low %v6008, %v6012
  %v6063 = vcombine.low %v6016, %v6020
  %v6064 = vcombine.low %v6024, %v6028
  %v6066 = vunpack.c.l.s4 1966171168
  %v6067 = vunpack.c.0.s8 %v6066
  %v6068 = vlaneseq
  %v6069 = vshrl.u32 %v6068, 7
  %v6070 = vsub.s32 %v6067, %v6069
  %v6071 = vrot.slane %v6061, %v6070
  %v6073 = vunpack.c.l.s4 1966171168
  %v6074 = vunpack.c.0.s8 %v6073
  %v6075 = vlaneseq
  %v6076 = vshrl.u32 %v6075, 7
  %v6077 = vsub.s32 %v6074, %v6076
  %v6078 = vrot.slane %v6062, %v6077
  %v6080 = vunpack.c.l.s4 1966171168
  %v6081 = vunpack.c.0.s8 %v6080
  %v6082 = vlaneseq
  %v6083 = vshrl.u32 %v6082, 7
  %v6084 = vsub.s32 %v6081, %v6083
  %v6085 = vrot.slane %v6063, %v6084
  %v6087 = vunpack.c.l.s4 1966171168
  %v6088 = vunpack.c.0.s8 %v6087
  %v6089 = vlaneseq
  %v6090 = vshrl.u32 %v6089, 7
  %v6091 = vsub.s32 %v6088, %v6090
  %v6092 = vrot.slane %v6064, %v6091
  %v6093 = vcombine.low %v6071, %v6078
  %v6094 = vcombine.low %v6085, %v6092
  %v6096 = vunpack.c.l.s4 1966171168
  %v6097 = vunpack.c.0.s8 %v6096
  %v6098 = vlaneseq
  %v6099 = vshrl.u32 %v6098, 7
  %v6100 = vsub.s32 %v6097, %v6099
  %v6101 = vrot.slane %v6093, %v6100
  %v6103 = vunpack.c.l.s4 1966171168
  %v6104 = vunpack.c.0.s8 %v6103
  %v6105 = vlaneseq
  %v6106 = vshrl.u32 %v6105, 7
  %v6107 = vsub.s32 %v6104, %v6106
  %v6108 = vrot.slane %v6094, %v6107
  %v6109 = vcombine.low %v6101, %v6108
  %v6110 = vcombine.low %v6032, %v6036
  %v6111 = vcombine.low %v6040, %v6044
  %v6112 = vcombine.low %v6048, %v6052
  %v6113 = vcombine.low %v6056, %v6060
  %v6115 = vunpack.c.l.s4 1966171168
  %v6116 = vunpack.c.0.s8 %v6115
  %v6117 = vlaneseq
  %v6118 = vshrl.u32 %v6117, 7
  %v6119 = vsub.s32 %v6116, %v6118
  %v6120 = vrot.slane %v6110, %v6119
  %v6122 = vunpack.c.l.s4 1966171168
  %v6123 = vunpack.c.0.s8 %v6122
  %v6124 = vlaneseq
  %v6125 = vshrl.u32 %v6124, 7
  %v6126 = vsub.s32 %v6123, %v6125
  %v6127 = vrot.slane %v6111, %v6126
  %v6129 = vunpack.c.l.s4 1966171168
  %v6130 = vunpack.c.0.s8 %v6129
  %v6131 = vlaneseq
  %v6132 = vshrl.u32 %v6131, 7
  %v6133 = vsub.s32 %v6130, %v6132
  %v6134 = vrot.slane %v6112, %v6133
  %v6136 = vunpack.c.l.s4 1966171168
  %v6137 = vunpack.c.0.s8 %v6136
  %v6138 = vlaneseq
  %v6139 = vshrl.u32 %v6138, 7
  %v6140 = vsub.s32 %v6137, %v6139
  %v6141 = vrot.slane %v6113, %v6140
  %v6142 = vcombine.low %v6120, %v6127
  %v6143 = vcombine.low %v6134, %v6141
  %v6145 = vunpack.c.l.s4 1966171168
  %v6146 = vunpack.c.0.s8 %v6145
  %v6147 = vlaneseq
  %v6148 = vshrl.u32 %v6147, 7
  %v6149 = vsub.s32 %v6146, %v6148
  %v6150 = vrot.slane %v6142, %v6149
  %v6152 = vunpack.c.l.s4 1966171168
  %v6153 = vunpack.c.0.s8 %v6152
  %v6154 = vlaneseq
  %v6155 = vshrl.u32 %v6154, 7
  %v6156 = vsub.s32 %v6153, %v6155
  %v6157 = vrot.slane %v6143, %v6156
  %v6158 = vcombine.low %v6150, %v6157
  %6159 = vset.pattern.permute.xlu0 0
  %6160 = vperm.xlu0 %6159, %v6109
  %v6161 = vpop.permute.xlu0 %6160
  %6162 = vset.pattern.permute.xlu0 0
  %6163 = vperm.xlu0 %6162, %v6158
  %v6164 = vpop.permute.xlu0 %6163
  %v6165 = vlaneseq
  %v6166 = vand.u32 %v6165, 127
  %v6167 = vlaneseq
  %v6168 = vshrl.u32 %v6167, 7
  %v6169 = vsub.s32 %v6166, %v6168
  %v6170 = vrot.slane %v6161, %v6169
  %v6171 = vadd.s32 %v6166, 4294967288
  %v6172 = vlaneseq
  %v6173 = vshrl.u32 %v6172, 7
  %v6174 = vsub.s32 %v6171, %v6173
  %v6175 = vrot.slane %v6164, %v6174
  %vm6176 = vcmask 130112
  %v6177 = vsel %vm6176, %v6175, %v6170
  %v6179 = vunpack.c.l.s4 1966171168
  %v6180 = vunpack.c.0.s8 %v6179
  %v6181 = vlaneseq
  %v6182 = vshrl.u32 %v6181, 7
  %v6183 = vsub.s32 %v6180, %v6182
  %v6184 = vrot.slane %v6177, %v6183
  %v6186 = vunpack.c.l.s4 1966171168
  %v6187 = vunpack.c.0.s8 %v6186
  %v6188 = vlaneseq
  %v6189 = vshrl.u32 %v6188, 7
  %v6190 = vsub.s32 %v6187, %v6189
  %v6191 = vrot.slane %v6184, %v6190
  %v6193 = vadd.f32 %v5994, %v6191
  %vm6194 = vcmask 122880
  %6195 = vst.msk [vmem:[%s10] sm:$0x1] %vm6194, %v6193
  // Predicated region
  $region42: #{wdl_forward.1} parent=0 // pred_check
    _
  $region43: #{wdl_forward.1} parent=0 // pred_check_branch
    %6197 = sbr.rel (0) target = $region45
  $region44: #{wdl_forward.1} parent=0 // pred_region
    _
  $region45: #{wdl_forward.1} parent=0 // pred_fallthru
    _
  // Predicated region
  $region46: #{wdl_forward.1} parent=0 // pred_check
    _
  $region47: #{wdl_forward.1} parent=0 // pred_check_branch
    %6199 = sbr.rel (0) target = $region49
  $region48: #{wdl_forward.1} parent=0 // pred_region
    _
  $region49: #{wdl_forward.1} parent=0 // pred_fallthru
    _

</llo_original>
